<compile_context>
chip_gen: v7x
topology: tpu7x:2x2x1
jax: 0.10.0
libtpu: 0.0.40
codegen_flags: <defaults>
</compile_context>

<pallas_src>
import jax
import jax.numpy as jnp
from jax.experimental import pallas as pl
from jax.experimental.pallas import tpu as pltpu


def _round_up(n: int, m: int) -> int:
    return ((n + m - 1) // m) * m


# ----------------------------------------------------------------------------
# Static layer plan (which layers ReLU, where skips are saved / added)
# ----------------------------------------------------------------------------
def _build_plan(params):
    layer_relu = []
    save_after = {}   # layer index -> skip slot written after that layer
    add_before = {}   # layer index -> skip slot added before that layer
    layer = 0
    n_expand = len(params["expand"])
    for bi, bp in enumerate(params["expand"]):
        layer_relu += [True] * len(bp)
        layer += len(bp)
        save_after[layer - 1] = bi
    layer_relu += [True] * len(params["bottleneck"])
    layer += len(params["bottleneck"])
    n_shrink = len(params["shrink"])
    for si, bp in enumerate(params["shrink"]):
        add_before[layer] = n_expand - 1 - si      # skips consumed LIFO
        final = (si == n_shrink - 1)
        layer_relu += [True] * (len(bp) - 1) + [not final]
        layer += len(bp)
    return dict(layer_relu=tuple(layer_relu), save_after=save_after,
                add_before=add_before, n_skips=n_expand)


# ----------------------------------------------------------------------------
# Fused Pallas kernel
# ----------------------------------------------------------------------------
def _make_fused_kernel(plan):
    layer_relu = plan["layer_relu"]
    save_after = plan["save_after"]
    add_before = plan["add_before"]
    n_layers = len(layer_relu)

    def kernel(x_ref, w_ref, b_ref, o_ref, skip_ref):
        cd = w_ref.dtype                      # MXU operand dtype (bf16 or f32)
        x = x_ref[...]                        # (tb, D) activation dtype, lane dense
        for l in range(n_layers):             # static unroll; plan is static
            if l in add_before:               # residual add from VMEM scratch
                x = x + skip_ref[add_before[l]]
            lhs = x if x.dtype == cd else x.astype(cd)
            # w_ref[l] / b_ref[l]: static slices on VMEM refs -> free.
            y = jnp.dot(lhs, w_ref[l], preferred_element_type=jnp.float32)
            if layer_relu[l]:
                x = jnp.maximum(y.astype(x.dtype) + b_ref[l], 0)
            else:
                # Final linear of the whole net: no activation, keep f32 epilogue.
                x = y + b_ref[l].astype(jnp.float32)
            if l in save_after:
                skip_ref[save_after[l]] = x   # one vst per skip
        o_ref[...] = x.astype(o_ref.dtype)    # lane-dense f32 store

    return kernel


def _pick_batch_tile(batch: int, max_tile: int) -> int:
    """Big tiles amortize per-grid-step overhead (v5e/v6e); batches >= 512 are
    split into >= 2 'parallel' steps so both v7x TensorCores get work while
    each step still fills the 256-row MXU."""
    if batch > max_tile:
        return max_tile
    if batch >= 512:
        return _round_up(pl.cdiv(batch, 2), 8)
    return batch


def _fused_forward_call(x_pad, w_stack, b_stack, meta, tb, single_buffer_weights):
    batch, D = x_pad.shape
    plan = meta["plan"]
    n_layers = w_stack.shape[0]
    n_skips = max(1, plan["n_skips"])
    cd_isz = jnp.dtype(w_stack.dtype).itemsize
    ad_isz = jnp.dtype(b_stack.dtype).itemsize

    grid = (pl.cdiv(batch, tb),)
    kernel = _make_fused_kernel(plan)

    def _const_spec(shape):
        index_map = lambda i: (0,) * len(shape)
        if single_buffer_weights and hasattr(pl, "Buffered"):
            # Grid-invariant operands: a single VMEM buffer is enough.
            return pl.BlockSpec(shape, index_map, pipeline_mode=pl.Buffered(1))
        return pl.BlockSpec(shape, index_map)

    in_specs = [
        pl.BlockSpec((tb, D), lambda i: (i, 0)),   # activations: batch-tiled
        _const_spec(w_stack.shape),                # stacked padded weights
        _const_spec(b_stack.shape),                # stacked padded biases
    ]
    out_specs = pl.BlockSpec((tb, D), lambda i: (i, 0))

    flops = 2 * batch * D * D * n_layers
    bytes_accessed = (x_pad.size * ad_isz + batch * D * 4
                      + w_stack.size * cd_isz + b_stack.size * ad_isz)

    wbuf = 1 if single_buffer_weights else 2
    vmem_need = (2 * tb * D * ad_isz                 # x tiles (double buffered)
                 + 2 * tb * D * 4                    # f32 out tiles
                 + wbuf * (w_stack.size * cd_isz + b_stack.size * ad_isz)
                 + n_skips * tb * D * ad_isz)        # skip scratch
    vmem_limit = int(min(64 * 2**20, max(32 * 2**20, 2 * vmem_need)))

    return pl.pallas_call(
        kernel,
        out_shape=jax.ShapeDtypeStruct((batch, D), jnp.float32),
        grid=grid,
        in_specs=in_specs,
        out_specs=out_specs,
        scratch_shapes=[pltpu.VMEM((n_skips, tb, D), b_stack.dtype)],
        compiler_params=pltpu.CompilerParams(
            dimension_semantics=("parallel",),
            vmem_limit_bytes=vmem_limit),
        cost_estimate=pl.CostEstimate(flops=flops, transcendentals=0,
                                      bytes_accessed=bytes_accessed),
    )(x_pad, w_stack, b_stack)


# ----------------------------------------------------------------------------
# Parameter preparation (done ONCE, outside the jitted forward)
# ----------------------------------------------------------------------------
def prepare_params(params, compute_dtype=jnp.bfloat16, act_dtype=None):
    """Zero-pad every Linear to (D, D)/(D,), stack, and cast.

    Padded rows/cols/bias entries are exact zeros so padded lanes stay zero
    through bias + ReLU + residual adds.
    compute_dtype: MXU operand dtype (bf16 recommended on all generations).
    act_dtype: activation/bias/skip dtype; default = compute_dtype
               (v6e/v7x recipe).  Use jnp.float32 on v5e (no bf16 VPU).
    """
    act_dtype = compute_dtype if act_dtype is None else act_dtype
    blocks = list(params["expand"]) + [params["bottleneck"]] + list(params["shrink"])
    layers = [wb for bp in blocks for wb in bp]
    d_max = max(max(w.shape) for (w, _) in layers)
    D = _round_up(d_max, 128)
    w_pad, b_pad = [], []
    for (w, b) in layers:
        w_pad.append(jnp.zeros((D, D), jnp.float32)
                     .at[: w.shape[0], : w.shape[1]].set(w))
        b_pad.append(jnp.zeros((D,), jnp.float32).at[: b.shape[0]].set(b))
    w_stack = jnp.stack(w_pad).astype(compute_dtype)           # (L, D, D)
    b_stack = jnp.stack(b_pad).astype(act_dtype)[:, None, :]   # (L, 1, D)
    meta = dict(D=D,
                in_dim=layers[0][0].shape[0],
                out_dim=layers[-1][0].shape[1],
                plan=_build_plan(params))
    return w_stack, b_stack, meta


# ----------------------------------------------------------------------------
# Forward pass wrapper (jit-friendly; takes pre-stacked params)
# ----------------------------------------------------------------------------
def symmetric_resnet_forward(x, w_stack, b_stack, meta, *, batch_tile=512,
                             single_buffer_weights=True, return_padded=False):
    D = meta["D"]
    batch, in_dim = x.shape
    assert in_dim == meta["in_dim"]
    ad = b_stack.dtype
    tb = _pick_batch_tile(batch, batch_tile)
    # Lane-pad + cast the input once (tiny op) so everything in-kernel is
    # lane dense; padded lanes are exact zeros.
    x_pad = jnp.zeros((batch, D), ad).at[:, :in_dim].set(x.astype(ad))
    out_pad = _fused_forward_call(x_pad, w_stack, b_stack, meta, tb,
                                  single_buffer_weights)
    if return_padded:
        return out_pad                      # consumer accepts 128-padded width
    return out_pad[:, :meta["out_dim"]]


# ----------------------------------------------------------------------------
# Parameter construction (deterministic, PyTorch-like uniform init)
# ----------------------------------------------------------------------------
def _init_linear(key, n_in, n_out):
    bound = 1.0 / jnp.sqrt(jnp.float32(n_in))
    kw, kb = jax.random.split(key)
    # Stored pre-transposed: (in, out), so y = x @ w + b.
    w = jax.random.uniform(kw, (n_in, n_out), jnp.float32, -bound, bound)
    b = jax.random.uniform(kb, (n_out,), jnp.float32, -bound, bound)
    return w, b


def _init_block(key, n_in, n_out, n_linears):
    keys = jax.random.split(key, n_linears)
    params = [_init_linear(keys[0], n_in, n_out)]
    for i in range(1, n_linears):
        params.append(_init_linear(keys[i], n_out, n_out))
    return params


def init_symmetric_resnet(key, input_dim, expand_blocks_dims,
                          n_linears_per_block):
    blocks_dims = list(expand_blocks_dims) + list(expand_blocks_dims[::-1])
    n_expand = len(expand_blocks_dims)
    nlpb = [n_linears_per_block] * (len(blocks_dims) + 1)

    keys = jax.random.split(key, len(blocks_dims) + 1)
    ki = 0
    params = {"expand": [], "bottleneck": None, "shrink": []}

    n_in = input_dim
    for i in range(n_expand):
        n_out = blocks_dims[i]
        params["expand"].append(_init_block(keys[ki], n_in, n_out, nlpb[i]))
        ki += 1
        n_in = n_out

    params["bottleneck"] = _init_block(keys[ki], n_in, n_in, nlpb[n_expand])
    ki += 1

    for i in range(n_expand + 1, 2 * n_expand):
        n_out = blocks_dims[i]
        params["shrink"].append(_init_block(keys[ki], n_in, n_out, nlpb[i]))
        ki += 1
        n_in = n_out

    params["shrink"].append(_init_block(keys[ki], n_in, input_dim, nlpb[-1]))
    return params


# ----------------------------------------------------------------------------
# Pure-JAX reference (emulates the kernel's dtype handling when cd/ad != f32;
# with cd=ad=f32 it is exactly the PyTorch module's math)
# ----------------------------------------------------------------------------
def _ref_forward(x, params, compute_dtype=jnp.float32, act_dtype=None):
    cd = compute_dtype
    ad = cd if act_dtype is None else act_dtype

    def block(x, bp, final):
        n = len(bp)
        for i, (w, b) in enumerate(bp):
            y = jnp.dot(x.astype(cd), w.astype(cd),
                        preferred_element_type=jnp.float32)
            if final and i == n - 1:
                x = y + b.astype(ad)                 # promoted to f32
            else:
                x = jnp.maximum(y.astype(ad) + b.astype(ad), 0)
        return x

    x = x.astype(ad)
    skips = []
    for bp in params["expand"]:
        x = block(x, bp, final=False)
        skips.append(x)
    x = block(x, params["bottleneck"], final=False)
    n_shrink = len(params["shrink"])
    for i, bp in enumerate(params["shrink"]):
        x = x + skips.pop()
        x = block(x, bp, final=(i == n_shrink - 1))
    return x


# ----------------------------------------------------------------------------
if __name__ == "__main__":
    key = jax.random.PRNGKey(0)
    k_params, k_x = jax.random.split(key)

    batch = 8
    input_dim = 16
    expand_blocks_dims = (32, 64, 128)     # small, kernel-friendly instantiation
    n_linears_per_block = 3
    compute_dtype = jnp.bfloat16           # bf16 MXU; on v5e additionally pass
                                           # act_dtype=jnp.float32 to prepare_params

    params = init_symmetric_resnet(
        k_params, input_dim, expand_blocks_dims, n_linears_per_block
    )
    x = jax.random.normal(k_x, (batch, input_dim), jnp.float32)

    # Pad / stack / cast the weights ONCE outside the jitted forward.
    w_stack, b_stack, meta = prepare_params(params, compute_dtype)

    def build(single_buffer):
        return jax.jit(lambda xx, ww, bb: symmetric_resnet_forward(
            xx, ww, bb, meta, batch_tile=512,
            single_buffer_weights=single_buffer))

    try:
        # Preferred: single-buffered (pl.Buffered(1)) grid-invariant weights.
        fwd = build(True)
        out = jax.block_until_ready(fwd(x, w_stack, b_stack))
    except Exception:
        # Fallback for JAX/backends without pipeline_mode support.
        fwd = build(False)
        out = jax.block_until_ready(fwd(x, w_stack, b_stack))

    assert out.shape == (batch, input_dim)

    # Same-arithmetic (bf16) reference: checks kernel plumbing tightly.
    ref_same = jax.block_until_ready(_ref_forward(x, params, compute_dtype))
    assert jnp.allclose(out, ref_same, atol=5e-2, rtol=5e-2)

    # f32 module reference: loose check (bf16 compute error is expected).
    ref_f32 = jax.block_until_ready(_ref_forward(x, params, jnp.float32))
    assert jnp.allclose(out, ref_f32, atol=2e-1, rtol=1e-1)

    print("KERNEL_OK")
</pallas_src>

<mosaic_0001>
module attributes {stable_mosaic.version = 11 : i64} {
  func.func @kernel(%arg0: i32, %arg1: memref<8x128xbf16, #tpu.memory_space<vmem>>, %arg2: memref<21x128x128xbf16, #tpu.memory_space<vmem>>, %arg3: memref<21x1x128xbf16, #tpu.memory_space<vmem>>, %arg4: memref<8x128xf32, #tpu.memory_space<vmem>>, %arg5: memref<3x8x128xbf16, #tpu.memory_space<vmem>>) attributes {dimension_semantics = [#tpu.dimension_semantics<parallel>], iteration_bounds = array<i64: 1>, scalar_prefetch = 0 : i64, scratch_operands = 1 : i64, tpu.core_type = #tpu.core_type<tc>, window_params = [{transform_indices = @transform_0, window_bounds = array<i64: 8, 128>}, {pipeline_mode = #tpu.pipeline_mode<synchronous>, transform_indices = @transform_1, window_bounds = array<i64: 21, 128, 128>}, {pipeline_mode = #tpu.pipeline_mode<synchronous>, transform_indices = @transform_2, window_bounds = array<i64: 21, 1, 128>}, {transform_indices = @transform_3, window_bounds = array<i64: 8, 128>}]} {
    %c0 = arith.constant 0 : index
    %c0_0 = arith.constant 0 : index
    %0 = vector.load %arg1[%c0, %c0_0] : memref<8x128xbf16, #tpu.memory_space<vmem>>, vector<8x128xbf16>
    %c0_1 = arith.constant 0 : index
    %c0_2 = arith.constant 0 : index
    %c0_3 = arith.constant 0 : index
    %1 = vector.load %arg2[%c0_1, %c0_2, %c0_3] : memref<21x128x128xbf16, #tpu.memory_space<vmem>>, vector<1x128x128xbf16>
    %2 = vector.shape_cast %1 : vector<1x128x128xbf16> to vector<128x128xbf16>
    %cst = arith.constant dense<0.000000e+00> : vector<8x128xf32>
    %3 = tpu.matmul %0, %2, %cst {dimension_numbers = #tpu.dot_dimension_numbers<[1], [0], [0], [1], [0, 0, 1, 1], [], []>} : vector<8x128xbf16>, vector<128x128xbf16>, vector<8x128xf32> -> vector<8x128xf32>
    %4 = arith.truncf %3 : vector<8x128xf32> to vector<8x128xbf16>
    %c0_4 = arith.constant 0 : index
    %c0_5 = arith.constant 0 : index
    %c0_6 = arith.constant 0 : index
    %5 = vector.load %arg3[%c0_4, %c0_5, %c0_6] : memref<21x1x128xbf16, #tpu.memory_space<vmem>>, vector<1x1x128xbf16>
    %6 = vector.shape_cast %5 : vector<1x1x128xbf16> to vector<1x128xbf16>
    %7 = vector.broadcast %6 : vector<1x128xbf16> to vector<8x128xbf16>
    %8 = arith.addf %4, %7 : vector<8x128xbf16>
    %cst_7 = arith.constant 0.000000e+00 : bf16
    %9 = vector.broadcast %cst_7 : bf16 to vector<8x128xbf16>
    %10 = arith.maximumf %8, %9 : vector<8x128xbf16>
    %c1 = arith.constant 1 : index
    %c0_8 = arith.constant 0 : index
    %c0_9 = arith.constant 0 : index
    %11 = vector.load %arg2[%c1, %c0_8, %c0_9] : memref<21x128x128xbf16, #tpu.memory_space<vmem>>, vector<1x128x128xbf16>
    %12 = vector.shape_cast %11 : vector<1x128x128xbf16> to vector<128x128xbf16>
    %cst_10 = arith.constant dense<0.000000e+00> : vector<8x128xf32>
    %13 = tpu.matmul %10, %12, %cst_10 {dimension_numbers = #tpu.dot_dimension_numbers<[1], [0], [0], [1], [0, 0, 1, 1], [], []>} : vector<8x128xbf16>, vector<128x128xbf16>, vector<8x128xf32> -> vector<8x128xf32>
    %14 = arith.truncf %13 : vector<8x128xf32> to vector<8x128xbf16>
    %c1_11 = arith.constant 1 : index
    %c0_12 = arith.constant 0 : index
    %c0_13 = arith.constant 0 : index
    %15 = vector.load %arg3[%c1_11, %c0_12, %c0_13] : memref<21x1x128xbf16, #tpu.memory_space<vmem>>, vector<1x1x128xbf16>
    %16 = vector.shape_cast %15 : vector<1x1x128xbf16> to vector<1x128xbf16>
    %17 = vector.broadcast %16 : vector<1x128xbf16> to vector<8x128xbf16>
    %18 = arith.addf %14, %17 : vector<8x128xbf16>
    %cst_14 = arith.constant 0.000000e+00 : bf16
    %19 = vector.broadcast %cst_14 : bf16 to vector<8x128xbf16>
    %20 = arith.maximumf %18, %19 : vector<8x128xbf16>
    %c2 = arith.constant 2 : index
    %c0_15 = arith.constant 0 : index
    %c0_16 = arith.constant 0 : index
    %21 = vector.load %arg2[%c2, %c0_15, %c0_16] : memref<21x128x128xbf16, #tpu.memory_space<vmem>>, vector<1x128x128xbf16>
    %22 = vector.shape_cast %21 : vector<1x128x128xbf16> to vector<128x128xbf16>
    %cst_17 = arith.constant dense<0.000000e+00> : vector<8x128xf32>
    %23 = tpu.matmul %20, %22, %cst_17 {dimension_numbers = #tpu.dot_dimension_numbers<[1], [0], [0], [1], [0, 0, 1, 1], [], []>} : vector<8x128xbf16>, vector<128x128xbf16>, vector<8x128xf32> -> vector<8x128xf32>
    %24 = arith.truncf %23 : vector<8x128xf32> to vector<8x128xbf16>
    %c2_18 = arith.constant 2 : index
    %c0_19 = arith.constant 0 : index
    %c0_20 = arith.constant 0 : index
    %25 = vector.load %arg3[%c2_18, %c0_19, %c0_20] : memref<21x1x128xbf16, #tpu.memory_space<vmem>>, vector<1x1x128xbf16>
    %26 = vector.shape_cast %25 : vector<1x1x128xbf16> to vector<1x128xbf16>
    %27 = vector.broadcast %26 : vector<1x128xbf16> to vector<8x128xbf16>
    %28 = arith.addf %24, %27 : vector<8x128xbf16>
    %cst_21 = arith.constant 0.000000e+00 : bf16
    %29 = vector.broadcast %cst_21 : bf16 to vector<8x128xbf16>
    %30 = arith.maximumf %28, %29 : vector<8x128xbf16>
    %c0_22 = arith.constant 0 : index
    %c0_23 = arith.constant 0 : index
    %c0_24 = arith.constant 0 : index
    %31 = vector.load %arg5[%c0_22, %c0_23, %c0_24] : memref<3x8x128xbf16, #tpu.memory_space<vmem>>, vector<1x8x128xbf16>
    %32 = vector.shape_cast %31 : vector<1x8x128xbf16> to vector<8x128xbf16>
    %33 = vector.shape_cast %30 : vector<8x128xbf16> to vector<1x8x128xbf16>
    tpu.vector_store %arg5[%c0_22, %c0_23, %c0_24], %33 {strides = array<i32>} : memref<3x8x128xbf16, #tpu.memory_space<vmem>>, vector<1x8x128xbf16>,
    %c3 = arith.constant 3 : index
    %c0_25 = arith.constant 0 : index
    %c0_26 = arith.constant 0 : index
    %34 = vector.load %arg2[%c3, %c0_25, %c0_26] : memref<21x128x128xbf16, #tpu.memory_space<vmem>>, vector<1x128x128xbf16>
    %35 = vector.shape_cast %34 : vector<1x128x128xbf16> to vector<128x128xbf16>
    %cst_27 = arith.constant dense<0.000000e+00> : vector<8x128xf32>
    %36 = tpu.matmul %30, %35, %cst_27 {dimension_numbers = #tpu.dot_dimension_numbers<[1], [0], [0], [1], [0, 0, 1, 1], [], []>} : vector<8x128xbf16>, vector<128x128xbf16>, vector<8x128xf32> -> vector<8x128xf32>
    %37 = arith.truncf %36 : vector<8x128xf32> to vector<8x128xbf16>
    %c3_28 = arith.constant 3 : index
    %c0_29 = arith.constant 0 : index
    %c0_30 = arith.constant 0 : index
    %38 = vector.load %arg3[%c3_28, %c0_29, %c0_30] : memref<21x1x128xbf16, #tpu.memory_space<vmem>>, vector<1x1x128xbf16>
    %39 = vector.shape_cast %38 : vector<1x1x128xbf16> to vector<1x128xbf16>
    %40 = vector.broadcast %39 : vector<1x128xbf16> to vector<8x128xbf16>
    %41 = arith.addf %37, %40 : vector<8x128xbf16>
    %cst_31 = arith.constant 0.000000e+00 : bf16
    %42 = vector.broadcast %cst_31 : bf16 to vector<8x128xbf16>
    %43 = arith.maximumf %41, %42 : vector<8x128xbf16>
    %c4 = arith.constant 4 : index
    %c0_32 = arith.constant 0 : index
    %c0_33 = arith.constant 0 : index
    %44 = vector.load %arg2[%c4, %c0_32, %c0_33] : memref<21x128x128xbf16, #tpu.memory_space<vmem>>, vector<1x128x128xbf16>
    %45 = vector.shape_cast %44 : vector<1x128x128xbf16> to vector<128x128xbf16>
    %cst_34 = arith.constant dense<0.000000e+00> : vector<8x128xf32>
    %46 = tpu.matmul %43, %45, %cst_34 {dimension_numbers = #tpu.dot_dimension_numbers<[1], [0], [0], [1], [0, 0, 1, 1], [], []>} : vector<8x128xbf16>, vector<128x128xbf16>, vector<8x128xf32> -> vector<8x128xf32>
    %47 = arith.truncf %46 : vector<8x128xf32> to vector<8x128xbf16>
    %c4_35 = arith.constant 4 : index
    %c0_36 = arith.constant 0 : index
    %c0_37 = arith.constant 0 : index
    %48 = vector.load %arg3[%c4_35, %c0_36, %c0_37] : memref<21x1x128xbf16, #tpu.memory_space<vmem>>, vector<1x1x128xbf16>
    %49 = vector.shape_cast %48 : vector<1x1x128xbf16> to vector<1x128xbf16>
    %50 = vector.broadcast %49 : vector<1x128xbf16> to vector<8x128xbf16>
    %51 = arith.addf %47, %50 : vector<8x128xbf16>
    %cst_38 = arith.constant 0.000000e+00 : bf16
    %52 = vector.broadcast %cst_38 : bf16 to vector<8x128xbf16>
    %53 = arith.maximumf %51, %52 : vector<8x128xbf16>
    %c5 = arith.constant 5 : index
    %c0_39 = arith.constant 0 : index
    %c0_40 = arith.constant 0 : index
    %54 = vector.load %arg2[%c5, %c0_39, %c0_40] : memref<21x128x128xbf16, #tpu.memory_space<vmem>>, vector<1x128x128xbf16>
    %55 = vector.shape_cast %54 : vector<1x128x128xbf16> to vector<128x128xbf16>
    %cst_41 = arith.constant dense<0.000000e+00> : vector<8x128xf32>
    %56 = tpu.matmul %53, %55, %cst_41 {dimension_numbers = #tpu.dot_dimension_numbers<[1], [0], [0], [1], [0, 0, 1, 1], [], []>} : vector<8x128xbf16>, vector<128x128xbf16>, vector<8x128xf32> -> vector<8x128xf32>
    %57 = arith.truncf %56 : vector<8x128xf32> to vector<8x128xbf16>
    %c5_42 = arith.constant 5 : index
    %c0_43 = arith.constant 0 : index
    %c0_44 = arith.constant 0 : index
    %58 = vector.load %arg3[%c5_42, %c0_43, %c0_44] : memref<21x1x128xbf16, #tpu.memory_space<vmem>>, vector<1x1x128xbf16>
    %59 = vector.shape_cast %58 : vector<1x1x128xbf16> to vector<1x128xbf16>
    %60 = vector.broadcast %59 : vector<1x128xbf16> to vector<8x128xbf16>
    %61 = arith.addf %57, %60 : vector<8x128xbf16>
    %cst_45 = arith.constant 0.000000e+00 : bf16
    %62 = vector.broadcast %cst_45 : bf16 to vector<8x128xbf16>
    %63 = arith.maximumf %61, %62 : vector<8x128xbf16>
    %c1_46 = arith.constant 1 : index
    %c0_47 = arith.constant 0 : index
    %c0_48 = arith.constant 0 : index
    %64 = vector.load %arg5[%c1_46, %c0_47, %c0_48] : memref<3x8x128xbf16, #tpu.memory_space<vmem>>, vector<1x8x128xbf16>
    %65 = vector.shape_cast %64 : vector<1x8x128xbf16> to vector<8x128xbf16>
    %66 = vector.shape_cast %63 : vector<8x128xbf16> to vector<1x8x128xbf16>
    tpu.vector_store %arg5[%c1_46, %c0_47, %c0_48], %66 {strides = array<i32>} : memref<3x8x128xbf16, #tpu.memory_space<vmem>>, vector<1x8x128xbf16>,
    %c6 = arith.constant 6 : index
    %c0_49 = arith.constant 0 : index
    %c0_50 = arith.constant 0 : index
    %67 = vector.load %arg2[%c6, %c0_49, %c0_50] : memref<21x128x128xbf16, #tpu.memory_space<vmem>>, vector<1x128x128xbf16>
    %68 = vector.shape_cast %67 : vector<1x128x128xbf16> to vector<128x128xbf16>
    %cst_51 = arith.constant dense<0.000000e+00> : vector<8x128xf32>
    %69 = tpu.matmul %63, %68, %cst_51 {dimension_numbers = #tpu.dot_dimension_numbers<[1], [0], [0], [1], [0, 0, 1, 1], [], []>} : vector<8x128xbf16>, vector<128x128xbf16>, vector<8x128xf32> -> vector<8x128xf32>
    %70 = arith.truncf %69 : vector<8x128xf32> to vector<8x128xbf16>
    %c6_52 = arith.constant 6 : index
    %c0_53 = arith.constant 0 : index
    %c0_54 = arith.constant 0 : index
    %71 = vector.load %arg3[%c6_52, %c0_53, %c0_54] : memref<21x1x128xbf16, #tpu.memory_space<vmem>>, vector<1x1x128xbf16>
    %72 = vector.shape_cast %71 : vector<1x1x128xbf16> to vector<1x128xbf16>
    %73 = vector.broadcast %72 : vector<1x128xbf16> to vector<8x128xbf16>
    %74 = arith.addf %70, %73 : vector<8x128xbf16>
    %cst_55 = arith.constant 0.000000e+00 : bf16
    %75 = vector.broadcast %cst_55 : bf16 to vector<8x128xbf16>
    %76 = arith.maximumf %74, %75 : vector<8x128xbf16>
    %c7 = arith.constant 7 : index
    %c0_56 = arith.constant 0 : index
    %c0_57 = arith.constant 0 : index
    %77 = vector.load %arg2[%c7, %c0_56, %c0_57] : memref<21x128x128xbf16, #tpu.memory_space<vmem>>, vector<1x128x128xbf16>
    %78 = vector.shape_cast %77 : vector<1x128x128xbf16> to vector<128x128xbf16>
    %cst_58 = arith.constant dense<0.000000e+00> : vector<8x128xf32>
    %79 = tpu.matmul %76, %78, %cst_58 {dimension_numbers = #tpu.dot_dimension_numbers<[1], [0], [0], [1], [0, 0, 1, 1], [], []>} : vector<8x128xbf16>, vector<128x128xbf16>, vector<8x128xf32> -> vector<8x128xf32>
    %80 = arith.truncf %79 : vector<8x128xf32> to vector<8x128xbf16>
    %c7_59 = arith.constant 7 : index
    %c0_60 = arith.constant 0 : index
    %c0_61 = arith.constant 0 : index
    %81 = vector.load %arg3[%c7_59, %c0_60, %c0_61] : memref<21x1x128xbf16, #tpu.memory_space<vmem>>, vector<1x1x128xbf16>
    %82 = vector.shape_cast %81 : vector<1x1x128xbf16> to vector<1x128xbf16>
    %83 = vector.broadcast %82 : vector<1x128xbf16> to vector<8x128xbf16>
    %84 = arith.addf %80, %83 : vector<8x128xbf16>
    %cst_62 = arith.constant 0.000000e+00 : bf16
    %85 = vector.broadcast %cst_62 : bf16 to vector<8x128xbf16>
    %86 = arith.maximumf %84, %85 : vector<8x128xbf16>
    %c8 = arith.constant 8 : index
    %c0_63 = arith.constant 0 : index
    %c0_64 = arith.constant 0 : index
    %87 = vector.load %arg2[%c8, %c0_63, %c0_64] : memref<21x128x128xbf16, #tpu.memory_space<vmem>>, vector<1x128x128xbf16>
    %88 = vector.shape_cast %87 : vector<1x128x128xbf16> to vector<128x128xbf16>
    %cst_65 = arith.constant dense<0.000000e+00> : vector<8x128xf32>
    %89 = tpu.matmul %86, %88, %cst_65 {dimension_numbers = #tpu.dot_dimension_numbers<[1], [0], [0], [1], [0, 0, 1, 1], [], []>} : vector<8x128xbf16>, vector<128x128xbf16>, vector<8x128xf32> -> vector<8x128xf32>
    %90 = arith.truncf %89 : vector<8x128xf32> to vector<8x128xbf16>
    %c8_66 = arith.constant 8 : index
    %c0_67 = arith.constant 0 : index
    %c0_68 = arith.constant 0 : index
    %91 = vector.load %arg3[%c8_66, %c0_67, %c0_68] : memref<21x1x128xbf16, #tpu.memory_space<vmem>>, vector<1x1x128xbf16>
    %92 = vector.shape_cast %91 : vector<1x1x128xbf16> to vector<1x128xbf16>
    %93 = vector.broadcast %92 : vector<1x128xbf16> to vector<8x128xbf16>
    %94 = arith.addf %90, %93 : vector<8x128xbf16>
    %cst_69 = arith.constant 0.000000e+00 : bf16
    %95 = vector.broadcast %cst_69 : bf16 to vector<8x128xbf16>
    %96 = arith.maximumf %94, %95 : vector<8x128xbf16>
    %c2_70 = arith.constant 2 : index
    %c0_71 = arith.constant 0 : index
    %c0_72 = arith.constant 0 : index
    %97 = vector.load %arg5[%c2_70, %c0_71, %c0_72] : memref<3x8x128xbf16, #tpu.memory_space<vmem>>, vector<1x8x128xbf16>
    %98 = vector.shape_cast %97 : vector<1x8x128xbf16> to vector<8x128xbf16>
    %99 = vector.shape_cast %96 : vector<8x128xbf16> to vector<1x8x128xbf16>
    tpu.vector_store %arg5[%c2_70, %c0_71, %c0_72], %99 {strides = array<i32>} : memref<3x8x128xbf16, #tpu.memory_space<vmem>>, vector<1x8x128xbf16>,
    %c9 = arith.constant 9 : index
    %c0_73 = arith.constant 0 : index
    %c0_74 = arith.constant 0 : index
    %100 = vector.load %arg2[%c9, %c0_73, %c0_74] : memref<21x128x128xbf16, #tpu.memory_space<vmem>>, vector<1x128x128xbf16>
    %101 = vector.shape_cast %100 : vector<1x128x128xbf16> to vector<128x128xbf16>
    %cst_75 = arith.constant dense<0.000000e+00> : vector<8x128xf32>
    %102 = tpu.matmul %96, %101, %cst_75 {dimension_numbers = #tpu.dot_dimension_numbers<[1], [0], [0], [1], [0, 0, 1, 1], [], []>} : vector<8x128xbf16>, vector<128x128xbf16>, vector<8x128xf32> -> vector<8x128xf32>
    %103 = arith.truncf %102 : vector<8x128xf32> to vector<8x128xbf16>
    %c9_76 = arith.constant 9 : index
    %c0_77 = arith.constant 0 : index
    %c0_78 = arith.constant 0 : index
    %104 = vector.load %arg3[%c9_76, %c0_77, %c0_78] : memref<21x1x128xbf16, #tpu.memory_space<vmem>>, vector<1x1x128xbf16>
    %105 = vector.shape_cast %104 : vector<1x1x128xbf16> to vector<1x128xbf16>
    %106 = vector.broadcast %105 : vector<1x128xbf16> to vector<8x128xbf16>
    %107 = arith.addf %103, %106 : vector<8x128xbf16>
    %cst_79 = arith.constant 0.000000e+00 : bf16
    %108 = vector.broadcast %cst_79 : bf16 to vector<8x128xbf16>
    %109 = arith.maximumf %107, %108 : vector<8x128xbf16>
    %c10 = arith.constant 10 : index
    %c0_80 = arith.constant 0 : index
    %c0_81 = arith.constant 0 : index
    %110 = vector.load %arg2[%c10, %c0_80, %c0_81] : memref<21x128x128xbf16, #tpu.memory_space<vmem>>, vector<1x128x128xbf16>
    %111 = vector.shape_cast %110 : vector<1x128x128xbf16> to vector<128x128xbf16>
    %cst_82 = arith.constant dense<0.000000e+00> : vector<8x128xf32>
    %112 = tpu.matmul %109, %111, %cst_82 {dimension_numbers = #tpu.dot_dimension_numbers<[1], [0], [0], [1], [0, 0, 1, 1], [], []>} : vector<8x128xbf16>, vector<128x128xbf16>, vector<8x128xf32> -> vector<8x128xf32>
    %113 = arith.truncf %112 : vector<8x128xf32> to vector<8x128xbf16>
    %c10_83 = arith.constant 10 : index
    %c0_84 = arith.constant 0 : index
    %c0_85 = arith.constant 0 : index
    %114 = vector.load %arg3[%c10_83, %c0_84, %c0_85] : memref<21x1x128xbf16, #tpu.memory_space<vmem>>, vector<1x1x128xbf16>
    %115 = vector.shape_cast %114 : vector<1x1x128xbf16> to vector<1x128xbf16>
    %116 = vector.broadcast %115 : vector<1x128xbf16> to vector<8x128xbf16>
    %117 = arith.addf %113, %116 : vector<8x128xbf16>
    %cst_86 = arith.constant 0.000000e+00 : bf16
    %118 = vector.broadcast %cst_86 : bf16 to vector<8x128xbf16>
    %119 = arith.maximumf %117, %118 : vector<8x128xbf16>
    %c11 = arith.constant 11 : index
    %c0_87 = arith.constant 0 : index
    %c0_88 = arith.constant 0 : index
    %120 = vector.load %arg2[%c11, %c0_87, %c0_88] : memref<21x128x128xbf16, #tpu.memory_space<vmem>>, vector<1x128x128xbf16>
    %121 = vector.shape_cast %120 : vector<1x128x128xbf16> to vector<128x128xbf16>
    %cst_89 = arith.constant dense<0.000000e+00> : vector<8x128xf32>
    %122 = tpu.matmul %119, %121, %cst_89 {dimension_numbers = #tpu.dot_dimension_numbers<[1], [0], [0], [1], [0, 0, 1, 1], [], []>} : vector<8x128xbf16>, vector<128x128xbf16>, vector<8x128xf32> -> vector<8x128xf32>
    %123 = arith.truncf %122 : vector<8x128xf32> to vector<8x128xbf16>
    %c11_90 = arith.constant 11 : index
    %c0_91 = arith.constant 0 : index
    %c0_92 = arith.constant 0 : index
    %124 = vector.load %arg3[%c11_90, %c0_91, %c0_92] : memref<21x1x128xbf16, #tpu.memory_space<vmem>>, vector<1x1x128xbf16>
    %125 = vector.shape_cast %124 : vector<1x1x128xbf16> to vector<1x128xbf16>
    %126 = vector.broadcast %125 : vector<1x128xbf16> to vector<8x128xbf16>
    %127 = arith.addf %123, %126 : vector<8x128xbf16>
    %cst_93 = arith.constant 0.000000e+00 : bf16
    %128 = vector.broadcast %cst_93 : bf16 to vector<8x128xbf16>
    %129 = arith.maximumf %127, %128 : vector<8x128xbf16>
    %c2_94 = arith.constant 2 : index
    %c0_95 = arith.constant 0 : index
    %c0_96 = arith.constant 0 : index
    %130 = vector.load %arg5[%c2_94, %c0_95, %c0_96] : memref<3x8x128xbf16, #tpu.memory_space<vmem>>, vector<1x8x128xbf16>
    %131 = vector.shape_cast %130 : vector<1x8x128xbf16> to vector<8x128xbf16>
    %132 = arith.addf %129, %131 : vector<8x128xbf16>
    %c12 = arith.constant 12 : index
    %c0_97 = arith.constant 0 : index
    %c0_98 = arith.constant 0 : index
    %133 = vector.load %arg2[%c12, %c0_97, %c0_98] : memref<21x128x128xbf16, #tpu.memory_space<vmem>>, vector<1x128x128xbf16>
    %134 = vector.shape_cast %133 : vector<1x128x128xbf16> to vector<128x128xbf16>
    %cst_99 = arith.constant dense<0.000000e+00> : vector<8x128xf32>
    %135 = tpu.matmul %132, %134, %cst_99 {dimension_numbers = #tpu.dot_dimension_numbers<[1], [0], [0], [1], [0, 0, 1, 1], [], []>} : vector<8x128xbf16>, vector<128x128xbf16>, vector<8x128xf32> -> vector<8x128xf32>
    %136 = arith.truncf %135 : vector<8x128xf32> to vector<8x128xbf16>
    %c12_100 = arith.constant 12 : index
    %c0_101 = arith.constant 0 : index
    %c0_102 = arith.constant 0 : index
    %137 = vector.load %arg3[%c12_100, %c0_101, %c0_102] : memref<21x1x128xbf16, #tpu.memory_space<vmem>>, vector<1x1x128xbf16>
    %138 = vector.shape_cast %137 : vector<1x1x128xbf16> to vector<1x128xbf16>
    %139 = vector.broadcast %138 : vector<1x128xbf16> to vector<8x128xbf16>
    %140 = arith.addf %136, %139 : vector<8x128xbf16>
    %cst_103 = arith.constant 0.000000e+00 : bf16
    %141 = vector.broadcast %cst_103 : bf16 to vector<8x128xbf16>
    %142 = arith.maximumf %140, %141 : vector<8x128xbf16>
    %c13 = arith.constant 13 : index
    %c0_104 = arith.constant 0 : index
    %c0_105 = arith.constant 0 : index
    %143 = vector.load %arg2[%c13, %c0_104, %c0_105] : memref<21x128x128xbf16, #tpu.memory_space<vmem>>, vector<1x128x128xbf16>
    %144 = vector.shape_cast %143 : vector<1x128x128xbf16> to vector<128x128xbf16>
    %cst_106 = arith.constant dense<0.000000e+00> : vector<8x128xf32>
    %145 = tpu.matmul %142, %144, %cst_106 {dimension_numbers = #tpu.dot_dimension_numbers<[1], [0], [0], [1], [0, 0, 1, 1], [], []>} : vector<8x128xbf16>, vector<128x128xbf16>, vector<8x128xf32> -> vector<8x128xf32>
    %146 = arith.truncf %145 : vector<8x128xf32> to vector<8x128xbf16>
    %c13_107 = arith.constant 13 : index
    %c0_108 = arith.constant 0 : index
    %c0_109 = arith.constant 0 : index
    %147 = vector.load %arg3[%c13_107, %c0_108, %c0_109] : memref<21x1x128xbf16, #tpu.memory_space<vmem>>, vector<1x1x128xbf16>
    %148 = vector.shape_cast %147 : vector<1x1x128xbf16> to vector<1x128xbf16>
    %149 = vector.broadcast %148 : vector<1x128xbf16> to vector<8x128xbf16>
    %150 = arith.addf %146, %149 : vector<8x128xbf16>
    %cst_110 = arith.constant 0.000000e+00 : bf16
    %151 = vector.broadcast %cst_110 : bf16 to vector<8x128xbf16>
    %152 = arith.maximumf %150, %151 : vector<8x128xbf16>
    %c14 = arith.constant 14 : index
    %c0_111 = arith.constant 0 : index
    %c0_112 = arith.constant 0 : index
    %153 = vector.load %arg2[%c14, %c0_111, %c0_112] : memref<21x128x128xbf16, #tpu.memory_space<vmem>>, vector<1x128x128xbf16>
    %154 = vector.shape_cast %153 : vector<1x128x128xbf16> to vector<128x128xbf16>
    %cst_113 = arith.constant dense<0.000000e+00> : vector<8x128xf32>
    %155 = tpu.matmul %152, %154, %cst_113 {dimension_numbers = #tpu.dot_dimension_numbers<[1], [0], [0], [1], [0, 0, 1, 1], [], []>} : vector<8x128xbf16>, vector<128x128xbf16>, vector<8x128xf32> -> vector<8x128xf32>
    %156 = arith.truncf %155 : vector<8x128xf32> to vector<8x128xbf16>
    %c14_114 = arith.constant 14 : index
    %c0_115 = arith.constant 0 : index
    %c0_116 = arith.constant 0 : index
    %157 = vector.load %arg3[%c14_114, %c0_115, %c0_116] : memref<21x1x128xbf16, #tpu.memory_space<vmem>>, vector<1x1x128xbf16>
    %158 = vector.shape_cast %157 : vector<1x1x128xbf16> to vector<1x128xbf16>
    %159 = vector.broadcast %158 : vector<1x128xbf16> to vector<8x128xbf16>
    %160 = arith.addf %156, %159 : vector<8x128xbf16>
    %cst_117 = arith.constant 0.000000e+00 : bf16
    %161 = vector.broadcast %cst_117 : bf16 to vector<8x128xbf16>
    %162 = arith.maximumf %160, %161 : vector<8x128xbf16>
    %c1_118 = arith.constant 1 : index
    %c0_119 = arith.constant 0 : index
    %c0_120 = arith.constant 0 : index
    %163 = vector.load %arg5[%c1_118, %c0_119, %c0_120] : memref<3x8x128xbf16, #tpu.memory_space<vmem>>, vector<1x8x128xbf16>
    %164 = vector.shape_cast %163 : vector<1x8x128xbf16> to vector<8x128xbf16>
    %165 = arith.addf %162, %164 : vector<8x128xbf16>
    %c15 = arith.constant 15 : index
    %c0_121 = arith.constant 0 : index
    %c0_122 = arith.constant 0 : index
    %166 = vector.load %arg2[%c15, %c0_121, %c0_122] : memref<21x128x128xbf16, #tpu.memory_space<vmem>>, vector<1x128x128xbf16>
    %167 = vector.shape_cast %166 : vector<1x128x128xbf16> to vector<128x128xbf16>
    %cst_123 = arith.constant dense<0.000000e+00> : vector<8x128xf32>
    %168 = tpu.matmul %165, %167, %cst_123 {dimension_numbers = #tpu.dot_dimension_numbers<[1], [0], [0], [1], [0, 0, 1, 1], [], []>} : vector<8x128xbf16>, vector<128x128xbf16>, vector<8x128xf32> -> vector<8x128xf32>
    %169 = arith.truncf %168 : vector<8x128xf32> to vector<8x128xbf16>
    %c15_124 = arith.constant 15 : index
    %c0_125 = arith.constant 0 : index
    %c0_126 = arith.constant 0 : index
    %170 = vector.load %arg3[%c15_124, %c0_125, %c0_126] : memref<21x1x128xbf16, #tpu.memory_space<vmem>>, vector<1x1x128xbf16>
    %171 = vector.shape_cast %170 : vector<1x1x128xbf16> to vector<1x128xbf16>
    %172 = vector.broadcast %171 : vector<1x128xbf16> to vector<8x128xbf16>
    %173 = arith.addf %169, %172 : vector<8x128xbf16>
    %cst_127 = arith.constant 0.000000e+00 : bf16
    %174 = vector.broadcast %cst_127 : bf16 to vector<8x128xbf16>
    %175 = arith.maximumf %173, %174 : vector<8x128xbf16>
    %c16 = arith.constant 16 : index
    %c0_128 = arith.constant 0 : index
    %c0_129 = arith.constant 0 : index
    %176 = vector.load %arg2[%c16, %c0_128, %c0_129] : memref<21x128x128xbf16, #tpu.memory_space<vmem>>, vector<1x128x128xbf16>
    %177 = vector.shape_cast %176 : vector<1x128x128xbf16> to vector<128x128xbf16>
    %cst_130 = arith.constant dense<0.000000e+00> : vector<8x128xf32>
    %178 = tpu.matmul %175, %177, %cst_130 {dimension_numbers = #tpu.dot_dimension_numbers<[1], [0], [0], [1], [0, 0, 1, 1], [], []>} : vector<8x128xbf16>, vector<128x128xbf16>, vector<8x128xf32> -> vector<8x128xf32>
    %179 = arith.truncf %178 : vector<8x128xf32> to vector<8x128xbf16>
    %c16_131 = arith.constant 16 : index
    %c0_132 = arith.constant 0 : index
    %c0_133 = arith.constant 0 : index
    %180 = vector.load %arg3[%c16_131, %c0_132, %c0_133] : memref<21x1x128xbf16, #tpu.memory_space<vmem>>, vector<1x1x128xbf16>
    %181 = vector.shape_cast %180 : vector<1x1x128xbf16> to vector<1x128xbf16>
    %182 = vector.broadcast %181 : vector<1x128xbf16> to vector<8x128xbf16>
    %183 = arith.addf %179, %182 : vector<8x128xbf16>
    %cst_134 = arith.constant 0.000000e+00 : bf16
    %184 = vector.broadcast %cst_134 : bf16 to vector<8x128xbf16>
    %185 = arith.maximumf %183, %184 : vector<8x128xbf16>
    %c17 = arith.constant 17 : index
    %c0_135 = arith.constant 0 : index
    %c0_136 = arith.constant 0 : index
    %186 = vector.load %arg2[%c17, %c0_135, %c0_136] : memref<21x128x128xbf16, #tpu.memory_space<vmem>>, vector<1x128x128xbf16>
    %187 = vector.shape_cast %186 : vector<1x128x128xbf16> to vector<128x128xbf16>
    %cst_137 = arith.constant dense<0.000000e+00> : vector<8x128xf32>
    %188 = tpu.matmul %185, %187, %cst_137 {dimension_numbers = #tpu.dot_dimension_numbers<[1], [0], [0], [1], [0, 0, 1, 1], [], []>} : vector<8x128xbf16>, vector<128x128xbf16>, vector<8x128xf32> -> vector<8x128xf32>
    %189 = arith.truncf %188 : vector<8x128xf32> to vector<8x128xbf16>
    %c17_138 = arith.constant 17 : index
    %c0_139 = arith.constant 0 : index
    %c0_140 = arith.constant 0 : index
    %190 = vector.load %arg3[%c17_138, %c0_139, %c0_140] : memref<21x1x128xbf16, #tpu.memory_space<vmem>>, vector<1x1x128xbf16>
    %191 = vector.shape_cast %190 : vector<1x1x128xbf16> to vector<1x128xbf16>
    %192 = vector.broadcast %191 : vector<1x128xbf16> to vector<8x128xbf16>
    %193 = arith.addf %189, %192 : vector<8x128xbf16>
    %cst_141 = arith.constant 0.000000e+00 : bf16
    %194 = vector.broadcast %cst_141 : bf16 to vector<8x128xbf16>
    %195 = arith.maximumf %193, %194 : vector<8x128xbf16>
    %c0_142 = arith.constant 0 : index
    %c0_143 = arith.constant 0 : index
    %c0_144 = arith.constant 0 : index
    %196 = vector.load %arg5[%c0_142, %c0_143, %c0_144] : memref<3x8x128xbf16, #tpu.memory_space<vmem>>, vector<1x8x128xbf16>
    %197 = vector.shape_cast %196 : vector<1x8x128xbf16> to vector<8x128xbf16>
    %198 = arith.addf %195, %197 : vector<8x128xbf16>
    %c18 = arith.constant 18 : index
    %c0_145 = arith.constant 0 : index
    %c0_146 = arith.constant 0 : index
    %199 = vector.load %arg2[%c18, %c0_145, %c0_146] : memref<21x128x128xbf16, #tpu.memory_space<vmem>>, vector<1x128x128xbf16>
    %200 = vector.shape_cast %199 : vector<1x128x128xbf16> to vector<128x128xbf16>
    %cst_147 = arith.constant dense<0.000000e+00> : vector<8x128xf32>
    %201 = tpu.matmul %198, %200, %cst_147 {dimension_numbers = #tpu.dot_dimension_numbers<[1], [0], [0], [1], [0, 0, 1, 1], [], []>} : vector<8x128xbf16>, vector<128x128xbf16>, vector<8x128xf32> -> vector<8x128xf32>
    %202 = arith.truncf %201 : vector<8x128xf32> to vector<8x128xbf16>
    %c18_148 = arith.constant 18 : index
    %c0_149 = arith.constant 0 : index
    %c0_150 = arith.constant 0 : index
    %203 = vector.load %arg3[%c18_148, %c0_149, %c0_150] : memref<21x1x128xbf16, #tpu.memory_space<vmem>>, vector<1x1x128xbf16>
    %204 = vector.shape_cast %203 : vector<1x1x128xbf16> to vector<1x128xbf16>
    %205 = vector.broadcast %204 : vector<1x128xbf16> to vector<8x128xbf16>
    %206 = arith.addf %202, %205 : vector<8x128xbf16>
    %cst_151 = arith.constant 0.000000e+00 : bf16
    %207 = vector.broadcast %cst_151 : bf16 to vector<8x128xbf16>
    %208 = arith.maximumf %206, %207 : vector<8x128xbf16>
    %c19 = arith.constant 19 : index
    %c0_152 = arith.constant 0 : index
    %c0_153 = arith.constant 0 : index
    %209 = vector.load %arg2[%c19, %c0_152, %c0_153] : memref<21x128x128xbf16, #tpu.memory_space<vmem>>, vector<1x128x128xbf16>
    %210 = vector.shape_cast %209 : vector<1x128x128xbf16> to vector<128x128xbf16>
    %cst_154 = arith.constant dense<0.000000e+00> : vector<8x128xf32>
    %211 = tpu.matmul %208, %210, %cst_154 {dimension_numbers = #tpu.dot_dimension_numbers<[1], [0], [0], [1], [0, 0, 1, 1], [], []>} : vector<8x128xbf16>, vector<128x128xbf16>, vector<8x128xf32> -> vector<8x128xf32>
    %212 = arith.truncf %211 : vector<8x128xf32> to vector<8x128xbf16>
    %c19_155 = arith.constant 19 : index
    %c0_156 = arith.constant 0 : index
    %c0_157 = arith.constant 0 : index
    %213 = vector.load %arg3[%c19_155, %c0_156, %c0_157] : memref<21x1x128xbf16, #tpu.memory_space<vmem>>, vector<1x1x128xbf16>
    %214 = vector.shape_cast %213 : vector<1x1x128xbf16> to vector<1x128xbf16>
    %215 = vector.broadcast %214 : vector<1x128xbf16> to vector<8x128xbf16>
    %216 = arith.addf %212, %215 : vector<8x128xbf16>
    %cst_158 = arith.constant 0.000000e+00 : bf16
    %217 = vector.broadcast %cst_158 : bf16 to vector<8x128xbf16>
    %218 = arith.maximumf %216, %217 : vector<8x128xbf16>
    %c20 = arith.constant 20 : index
    %c0_159 = arith.constant 0 : index
    %c0_160 = arith.constant 0 : index
    %219 = vector.load %arg2[%c20, %c0_159, %c0_160] : memref<21x128x128xbf16, #tpu.memory_space<vmem>>, vector<1x128x128xbf16>
    %220 = vector.shape_cast %219 : vector<1x128x128xbf16> to vector<128x128xbf16>
    %cst_161 = arith.constant dense<0.000000e+00> : vector<8x128xf32>
    %221 = tpu.matmul %218, %220, %cst_161 {dimension_numbers = #tpu.dot_dimension_numbers<[1], [0], [0], [1], [0, 0, 1, 1], [], []>} : vector<8x128xbf16>, vector<128x128xbf16>, vector<8x128xf32> -> vector<8x128xf32>
    %c20_162 = arith.constant 20 : index
    %c0_163 = arith.constant 0 : index
    %c0_164 = arith.constant 0 : index
    %222 = vector.load %arg3[%c20_162, %c0_163, %c0_164] : memref<21x1x128xbf16, #tpu.memory_space<vmem>>, vector<1x1x128xbf16>
    %223 = vector.shape_cast %222 : vector<1x1x128xbf16> to vector<1x128xbf16>
    %224 = arith.extf %223 : vector<1x128xbf16> to vector<1x128xf32>
    %225 = vector.broadcast %224 : vector<1x128xf32> to vector<8x128xf32>
    %226 = arith.addf %221, %225 : vector<8x128xf32>
    %c0_165 = arith.constant 0 : index
    %c0_166 = arith.constant 0 : index
    %227 = vector.load %arg4[%c0_165, %c0_166] : memref<8x128xf32, #tpu.memory_space<vmem>>, vector<8x128xf32>
    tpu.vector_store %arg4[%c0_165, %c0_166], %226 {strides = array<i32>} : memref<8x128xf32, #tpu.memory_space<vmem>>, vector<8x128xf32>,
    return
  }
  func.func @transform_0(%arg0: i32) -> (i32, i32) {
    %c0_i32 = arith.constant 0 : i32
    %c0_i32_0 = arith.constant 0 : i32
    return %arg0, %c0_i32 : i32, i32
  }
  func.func @transform_1(%arg0: i32) -> (i32, i32, i32) {
    %c0_i32 = arith.constant 0 : i32
    %c0_i32_0 = arith.constant 0 : i32
    %c0_i32_1 = arith.constant 0 : i32
    %c0_i32_2 = arith.constant 0 : i32
    return %c0_i32, %c0_i32_0, %c0_i32_1 : i32, i32, i32
  }
  func.func @transform_2(%arg0: i32) -> (i32, i32, i32) {
    %c0_i32 = arith.constant 0 : i32
    %c0_i32_0 = arith.constant 0 : i32
    %c0_i32_1 = arith.constant 0 : i32
    %c0_i32_2 = arith.constant 0 : i32
    return %c0_i32, %c0_i32_0, %c0_i32_1 : i32, i32, i32
  }
  func.func @transform_3(%arg0: i32) -> (i32, i32) {
    %c0_i32 = arith.constant 0 : i32
    %c0_i32_0 = arith.constant 0 : i32
    return %arg0, %c0_i32 : i32, i32
  }
}

module attributes {stable_mosaic.version = 11 : i64} {
  func.func @kernel(%arg0: i32, %arg1: memref<8x128xbf16, #tpu.memory_space<vmem>>, %arg2: memref<21x128x128xbf16, #tpu.memory_space<vmem>>, %arg3: memref<21x1x128xbf16, #tpu.memory_space<vmem>>, %arg4: memref<8x128xf32, #tpu.memory_space<vmem>>, %arg5: memref<3x8x128xbf16, #tpu.memory_space<vmem>>) attributes {dimension_semantics = [#tpu.dimension_semantics<parallel>], iteration_bounds = array<i64: 1>, scalar_prefetch = 0 : i64, scratch_operands = 1 : i64, tpu.core_type = #tpu.core_type<tc>, window_params = [{transform_indices = @transform_0, window_bounds = array<i64: 8, 128>}, {pipeline_mode = #tpu.pipeline_mode<synchronous>, transform_indices = @transform_1, window_bounds = array<i64: 21, 128, 128>}, {pipeline_mode = #tpu.pipeline_mode<synchronous>, transform_indices = @transform_2, window_bounds = array<i64: 21, 1, 128>}, {transform_indices = @transform_3, window_bounds = array<i64: 8, 128>}]} {
    %c0 = arith.constant 0 : index
    %c0_0 = arith.constant 0 : index
    %0 = vector.load %arg1[%c0, %c0_0] : memref<8x128xbf16, #tpu.memory_space<vmem>>, vector<8x128xbf16>
    %c0_1 = arith.constant 0 : index
    %c0_2 = arith.constant 0 : index
    %c0_3 = arith.constant 0 : index
    %1 = vector.load %arg2[%c0_1, %c0_2, %c0_3] : memref<21x128x128xbf16, #tpu.memory_space<vmem>>, vector<1x128x128xbf16>
    %2 = vector.shape_cast %1 : vector<1x128x128xbf16> to vector<128x128xbf16>
    %cst = arith.constant dense<0.000000e+00> : vector<8x128xf32>
    %3 = tpu.matmul %0, %2, %cst {dimension_numbers = #tpu.dot_dimension_numbers<[1], [0], [0], [1], [0, 0, 1, 1], [], []>} : vector<8x128xbf16>, vector<128x128xbf16>, vector<8x128xf32> -> vector<8x128xf32>
    %4 = arith.truncf %3 : vector<8x128xf32> to vector<8x128xbf16>
    %c0_4 = arith.constant 0 : index
    %c0_5 = arith.constant 0 : index
    %c0_6 = arith.constant 0 : index
    %5 = vector.load %arg3[%c0_4, %c0_5, %c0_6] : memref<21x1x128xbf16, #tpu.memory_space<vmem>>, vector<1x1x128xbf16>
    %6 = vector.shape_cast %5 : vector<1x1x128xbf16> to vector<1x128xbf16>
    %7 = vector.broadcast %6 : vector<1x128xbf16> to vector<8x128xbf16>
    %8 = arith.addf %4, %7 : vector<8x128xbf16>
    %cst_7 = arith.constant 0.000000e+00 : bf16
    %9 = vector.broadcast %cst_7 : bf16 to vector<8x128xbf16>
    %10 = arith.maximumf %8, %9 : vector<8x128xbf16>
    %c1 = arith.constant 1 : index
    %c0_8 = arith.constant 0 : index
    %c0_9 = arith.constant 0 : index
    %11 = vector.load %arg2[%c1, %c0_8, %c0_9] : memref<21x128x128xbf16, #tpu.memory_space<vmem>>, vector<1x128x128xbf16>
    %12 = vector.shape_cast %11 : vector<1x128x128xbf16> to vector<128x128xbf16>
    %cst_10 = arith.constant dense<0.000000e+00> : vector<8x128xf32>
    %13 = tpu.matmul %10, %12, %cst_10 {dimension_numbers = #tpu.dot_dimension_numbers<[1], [0], [0], [1], [0, 0, 1, 1], [], []>} : vector<8x128xbf16>, vector<128x128xbf16>, vector<8x128xf32> -> vector<8x128xf32>
    %14 = arith.truncf %13 : vector<8x128xf32> to vector<8x128xbf16>
    %c1_11 = arith.constant 1 : index
    %c0_12 = arith.constant 0 : index
    %c0_13 = arith.constant 0 : index
    %15 = vector.load %arg3[%c1_11, %c0_12, %c0_13] : memref<21x1x128xbf16, #tpu.memory_space<vmem>>, vector<1x1x128xbf16>
    %16 = vector.shape_cast %15 : vector<1x1x128xbf16> to vector<1x128xbf16>
    %17 = vector.broadcast %16 : vector<1x128xbf16> to vector<8x128xbf16>
    %18 = arith.addf %14, %17 : vector<8x128xbf16>
    %cst_14 = arith.constant 0.000000e+00 : bf16
    %19 = vector.broadcast %cst_14 : bf16 to vector<8x128xbf16>
    %20 = arith.maximumf %18, %19 : vector<8x128xbf16>
    %c2 = arith.constant 2 : index
    %c0_15 = arith.constant 0 : index
    %c0_16 = arith.constant 0 : index
    %21 = vector.load %arg2[%c2, %c0_15, %c0_16] : memref<21x128x128xbf16, #tpu.memory_space<vmem>>, vector<1x128x128xbf16>
    %22 = vector.shape_cast %21 : vector<1x128x128xbf16> to vector<128x128xbf16>
    %cst_17 = arith.constant dense<0.000000e+00> : vector<8x128xf32>
    %23 = tpu.matmul %20, %22, %cst_17 {dimension_numbers = #tpu.dot_dimension_numbers<[1], [0], [0], [1], [0, 0, 1, 1], [], []>} : vector<8x128xbf16>, vector<128x128xbf16>, vector<8x128xf32> -> vector<8x128xf32>
    %24 = arith.truncf %23 : vector<8x128xf32> to vector<8x128xbf16>
    %c2_18 = arith.constant 2 : index
    %c0_19 = arith.constant 0 : index
    %c0_20 = arith.constant 0 : index
    %25 = vector.load %arg3[%c2_18, %c0_19, %c0_20] : memref<21x1x128xbf16, #tpu.memory_space<vmem>>, vector<1x1x128xbf16>
    %26 = vector.shape_cast %25 : vector<1x1x128xbf16> to vector<1x128xbf16>
    %27 = vector.broadcast %26 : vector<1x128xbf16> to vector<8x128xbf16>
    %28 = arith.addf %24, %27 : vector<8x128xbf16>
    %cst_21 = arith.constant 0.000000e+00 : bf16
    %29 = vector.broadcast %cst_21 : bf16 to vector<8x128xbf16>
    %30 = arith.maximumf %28, %29 : vector<8x128xbf16>
    %c0_22 = arith.constant 0 : index
    %c0_23 = arith.constant 0 : index
    %c0_24 = arith.constant 0 : index
    %31 = vector.load %arg5[%c0_22, %c0_23, %c0_24] : memref<3x8x128xbf16, #tpu.memory_space<vmem>>, vector<1x8x128xbf16>
    %32 = vector.shape_cast %31 : vector<1x8x128xbf16> to vector<8x128xbf16>
    %33 = vector.shape_cast %30 : vector<8x128xbf16> to vector<1x8x128xbf16>
    tpu.vector_store %arg5[%c0_22, %c0_23, %c0_24], %33 {strides = array<i32>} : memref<3x8x128xbf16, #tpu.memory_space<vmem>>, vector<1x8x128xbf16>,
    %c3 = arith.constant 3 : index
    %c0_25 = arith.constant 0 : index
    %c0_26 = arith.constant 0 : index
    %34 = vector.load %arg2[%c3, %c0_25, %c0_26] : memref<21x128x128xbf16, #tpu.memory_space<vmem>>, vector<1x128x128xbf16>
    %35 = vector.shape_cast %34 : vector<1x128x128xbf16> to vector<128x128xbf16>
    %cst_27 = arith.constant dense<0.000000e+00> : vector<8x128xf32>
    %36 = tpu.matmul %30, %35, %cst_27 {dimension_numbers = #tpu.dot_dimension_numbers<[1], [0], [0], [1], [0, 0, 1, 1], [], []>} : vector<8x128xbf16>, vector<128x128xbf16>, vector<8x128xf32> -> vector<8x128xf32>
    %37 = arith.truncf %36 : vector<8x128xf32> to vector<8x128xbf16>
    %c3_28 = arith.constant 3 : index
    %c0_29 = arith.constant 0 : index
    %c0_30 = arith.constant 0 : index
    %38 = vector.load %arg3[%c3_28, %c0_29, %c0_30] : memref<21x1x128xbf16, #tpu.memory_space<vmem>>, vector<1x1x128xbf16>
    %39 = vector.shape_cast %38 : vector<1x1x128xbf16> to vector<1x128xbf16>
    %40 = vector.broadcast %39 : vector<1x128xbf16> to vector<8x128xbf16>
    %41 = arith.addf %37, %40 : vector<8x128xbf16>
    %cst_31 = arith.constant 0.000000e+00 : bf16
    %42 = vector.broadcast %cst_31 : bf16 to vector<8x128xbf16>
    %43 = arith.maximumf %41, %42 : vector<8x128xbf16>
    %c4 = arith.constant 4 : index
    %c0_32 = arith.constant 0 : index
    %c0_33 = arith.constant 0 : index
    %44 = vector.load %arg2[%c4, %c0_32, %c0_33] : memref<21x128x128xbf16, #tpu.memory_space<vmem>>, vector<1x128x128xbf16>
    %45 = vector.shape_cast %44 : vector<1x128x128xbf16> to vector<128x128xbf16>
    %cst_34 = arith.constant dense<0.000000e+00> : vector<8x128xf32>
    %46 = tpu.matmul %43, %45, %cst_34 {dimension_numbers = #tpu.dot_dimension_numbers<[1], [0], [0], [1], [0, 0, 1, 1], [], []>} : vector<8x128xbf16>, vector<128x128xbf16>, vector<8x128xf32> -> vector<8x128xf32>
    %47 = arith.truncf %46 : vector<8x128xf32> to vector<8x128xbf16>
    %c4_35 = arith.constant 4 : index
    %c0_36 = arith.constant 0 : index
    %c0_37 = arith.constant 0 : index
    %48 = vector.load %arg3[%c4_35, %c0_36, %c0_37] : memref<21x1x128xbf16, #tpu.memory_space<vmem>>, vector<1x1x128xbf16>
    %49 = vector.shape_cast %48 : vector<1x1x128xbf16> to vector<1x128xbf16>
    %50 = vector.broadcast %49 : vector<1x128xbf16> to vector<8x128xbf16>
    %51 = arith.addf %47, %50 : vector<8x128xbf16>
    %cst_38 = arith.constant 0.000000e+00 : bf16
    %52 = vector.broadcast %cst_38 : bf16 to vector<8x128xbf16>
    %53 = arith.maximumf %51, %52 : vector<8x128xbf16>
    %c5 = arith.constant 5 : index
    %c0_39 = arith.constant 0 : index
    %c0_40 = arith.constant 0 : index
    %54 = vector.load %arg2[%c5, %c0_39, %c0_40] : memref<21x128x128xbf16, #tpu.memory_space<vmem>>, vector<1x128x128xbf16>
    %55 = vector.shape_cast %54 : vector<1x128x128xbf16> to vector<128x128xbf16>
    %cst_41 = arith.constant dense<0.000000e+00> : vector<8x128xf32>
    %56 = tpu.matmul %53, %55, %cst_41 {dimension_numbers = #tpu.dot_dimension_numbers<[1], [0], [0], [1], [0, 0, 1, 1], [], []>} : vector<8x128xbf16>, vector<128x128xbf16>, vector<8x128xf32> -> vector<8x128xf32>
    %57 = arith.truncf %56 : vector<8x128xf32> to vector<8x128xbf16>
    %c5_42 = arith.constant 5 : index
    %c0_43 = arith.constant 0 : index
    %c0_44 = arith.constant 0 : index
    %58 = vector.load %arg3[%c5_42, %c0_43, %c0_44] : memref<21x1x128xbf16, #tpu.memory_space<vmem>>, vector<1x1x128xbf16>
    %59 = vector.shape_cast %58 : vector<1x1x128xbf16> to vector<1x128xbf16>
    %60 = vector.broadcast %59 : vector<1x128xbf16> to vector<8x128xbf16>
    %61 = arith.addf %57, %60 : vector<8x128xbf16>
    %cst_45 = arith.constant 0.000000e+00 : bf16
    %62 = vector.broadcast %cst_45 : bf16 to vector<8x128xbf16>
    %63 = arith.maximumf %61, %62 : vector<8x128xbf16>
    %c1_46 = arith.constant 1 : index
    %c0_47 = arith.constant 0 : index
    %c0_48 = arith.constant 0 : index
    %64 = vector.load %arg5[%c1_46, %c0_47, %c0_48] : memref<3x8x128xbf16, #tpu.memory_space<vmem>>, vector<1x8x128xbf16>
    %65 = vector.shape_cast %64 : vector<1x8x128xbf16> to vector<8x128xbf16>
    %66 = vector.shape_cast %63 : vector<8x128xbf16> to vector<1x8x128xbf16>
    tpu.vector_store %arg5[%c1_46, %c0_47, %c0_48], %66 {strides = array<i32>} : memref<3x8x128xbf16, #tpu.memory_space<vmem>>, vector<1x8x128xbf16>,
    %c6 = arith.constant 6 : index
    %c0_49 = arith.constant 0 : index
    %c0_50 = arith.constant 0 : index
    %67 = vector.load %arg2[%c6, %c0_49, %c0_50] : memref<21x128x128xbf16, #tpu.memory_space<vmem>>, vector<1x128x128xbf16>
    %68 = vector.shape_cast %67 : vector<1x128x128xbf16> to vector<128x128xbf16>
    %cst_51 = arith.constant dense<0.000000e+00> : vector<8x128xf32>
    %69 = tpu.matmul %63, %68, %cst_51 {dimension_numbers = #tpu.dot_dimension_numbers<[1], [0], [0], [1], [0, 0, 1, 1], [], []>} : vector<8x128xbf16>, vector<128x128xbf16>, vector<8x128xf32> -> vector<8x128xf32>
    %70 = arith.truncf %69 : vector<8x128xf32> to vector<8x128xbf16>
    %c6_52 = arith.constant 6 : index
    %c0_53 = arith.constant 0 : index
    %c0_54 = arith.constant 0 : index
    %71 = vector.load %arg3[%c6_52, %c0_53, %c0_54] : memref<21x1x128xbf16, #tpu.memory_space<vmem>>, vector<1x1x128xbf16>
    %72 = vector.shape_cast %71 : vector<1x1x128xbf16> to vector<1x128xbf16>
    %73 = vector.broadcast %72 : vector<1x128xbf16> to vector<8x128xbf16>
    %74 = arith.addf %70, %73 : vector<8x128xbf16>
    %cst_55 = arith.constant 0.000000e+00 : bf16
    %75 = vector.broadcast %cst_55 : bf16 to vector<8x128xbf16>
    %76 = arith.maximumf %74, %75 : vector<8x128xbf16>
    %c7 = arith.constant 7 : index
    %c0_56 = arith.constant 0 : index
    %c0_57 = arith.constant 0 : index
    %77 = vector.load %arg2[%c7, %c0_56, %c0_57] : memref<21x128x128xbf16, #tpu.memory_space<vmem>>, vector<1x128x128xbf16>
    %78 = vector.shape_cast %77 : vector<1x128x128xbf16> to vector<128x128xbf16>
    %cst_58 = arith.constant dense<0.000000e+00> : vector<8x128xf32>
    %79 = tpu.matmul %76, %78, %cst_58 {dimension_numbers = #tpu.dot_dimension_numbers<[1], [0], [0], [1], [0, 0, 1, 1], [], []>} : vector<8x128xbf16>, vector<128x128xbf16>, vector<8x128xf32> -> vector<8x128xf32>
    %80 = arith.truncf %79 : vector<8x128xf32> to vector<8x128xbf16>
    %c7_59 = arith.constant 7 : index
    %c0_60 = arith.constant 0 : index
    %c0_61 = arith.constant 0 : index
    %81 = vector.load %arg3[%c7_59, %c0_60, %c0_61] : memref<21x1x128xbf16, #tpu.memory_space<vmem>>, vector<1x1x128xbf16>
    %82 = vector.shape_cast %81 : vector<1x1x128xbf16> to vector<1x128xbf16>
    %83 = vector.broadcast %82 : vector<1x128xbf16> to vector<8x128xbf16>
    %84 = arith.addf %80, %83 : vector<8x128xbf16>
    %cst_62 = arith.constant 0.000000e+00 : bf16
    %85 = vector.broadcast %cst_62 : bf16 to vector<8x128xbf16>
    %86 = arith.maximumf %84, %85 : vector<8x128xbf16>
    %c8 = arith.constant 8 : index
    %c0_63 = arith.constant 0 : index
    %c0_64 = arith.constant 0 : index
    %87 = vector.load %arg2[%c8, %c0_63, %c0_64] : memref<21x128x128xbf16, #tpu.memory_space<vmem>>, vector<1x128x128xbf16>
    %88 = vector.shape_cast %87 : vector<1x128x128xbf16> to vector<128x128xbf16>
    %cst_65 = arith.constant dense<0.000000e+00> : vector<8x128xf32>
    %89 = tpu.matmul %86, %88, %cst_65 {dimension_numbers = #tpu.dot_dimension_numbers<[1], [0], [0], [1], [0, 0, 1, 1], [], []>} : vector<8x128xbf16>, vector<128x128xbf16>, vector<8x128xf32> -> vector<8x128xf32>
    %90 = arith.truncf %89 : vector<8x128xf32> to vector<8x128xbf16>
    %c8_66 = arith.constant 8 : index
    %c0_67 = arith.constant 0 : index
    %c0_68 = arith.constant 0 : index
    %91 = vector.load %arg3[%c8_66, %c0_67, %c0_68] : memref<21x1x128xbf16, #tpu.memory_space<vmem>>, vector<1x1x128xbf16>
    %92 = vector.shape_cast %91 : vector<1x1x128xbf16> to vector<1x128xbf16>
    %93 = vector.broadcast %92 : vector<1x128xbf16> to vector<8x128xbf16>
    %94 = arith.addf %90, %93 : vector<8x128xbf16>
    %cst_69 = arith.constant 0.000000e+00 : bf16
    %95 = vector.broadcast %cst_69 : bf16 to vector<8x128xbf16>
    %96 = arith.maximumf %94, %95 : vector<8x128xbf16>
    %c2_70 = arith.constant 2 : index
    %c0_71 = arith.constant 0 : index
    %c0_72 = arith.constant 0 : index
    %97 = vector.load %arg5[%c2_70, %c0_71, %c0_72] : memref<3x8x128xbf16, #tpu.memory_space<vmem>>, vector<1x8x128xbf16>
    %98 = vector.shape_cast %97 : vector<1x8x128xbf16> to vector<8x128xbf16>
    %99 = vector.shape_cast %96 : vector<8x128xbf16> to vector<1x8x128xbf16>
    tpu.vector_store %arg5[%c2_70, %c0_71, %c0_72], %99 {strides = array<i32>} : memref<3x8x128xbf16, #tpu.memory_space<vmem>>, vector<1x8x128xbf16>,
    %c9 = arith.constant 9 : index
    %c0_73 = arith.constant 0 : index
    %c0_74 = arith.constant 0 : index
    %100 = vector.load %arg2[%c9, %c0_73, %c0_74] : memref<21x128x128xbf16, #tpu.memory_space<vmem>>, vector<1x128x128xbf16>
    %101 = vector.shape_cast %100 : vector<1x128x128xbf16> to vector<128x128xbf16>
    %cst_75 = arith.constant dense<0.000000e+00> : vector<8x128xf32>
    %102 = tpu.matmul %96, %101, %cst_75 {dimension_numbers = #tpu.dot_dimension_numbers<[1], [0], [0], [1], [0, 0, 1, 1], [], []>} : vector<8x128xbf16>, vector<128x128xbf16>, vector<8x128xf32> -> vector<8x128xf32>
    %103 = arith.truncf %102 : vector<8x128xf32> to vector<8x128xbf16>
    %c9_76 = arith.constant 9 : index
    %c0_77 = arith.constant 0 : index
    %c0_78 = arith.constant 0 : index
    %104 = vector.load %arg3[%c9_76, %c0_77, %c0_78] : memref<21x1x128xbf16, #tpu.memory_space<vmem>>, vector<1x1x128xbf16>
    %105 = vector.shape_cast %104 : vector<1x1x128xbf16> to vector<1x128xbf16>
    %106 = vector.broadcast %105 : vector<1x128xbf16> to vector<8x128xbf16>
    %107 = arith.addf %103, %106 : vector<8x128xbf16>
    %cst_79 = arith.constant 0.000000e+00 : bf16
    %108 = vector.broadcast %cst_79 : bf16 to vector<8x128xbf16>
    %109 = arith.maximumf %107, %108 : vector<8x128xbf16>
    %c10 = arith.constant 10 : index
    %c0_80 = arith.constant 0 : index
    %c0_81 = arith.constant 0 : index
    %110 = vector.load %arg2[%c10, %c0_80, %c0_81] : memref<21x128x128xbf16, #tpu.memory_space<vmem>>, vector<1x128x128xbf16>
    %111 = vector.shape_cast %110 : vector<1x128x128xbf16> to vector<128x128xbf16>
    %cst_82 = arith.constant dense<0.000000e+00> : vector<8x128xf32>
    %112 = tpu.matmul %109, %111, %cst_82 {dimension_numbers = #tpu.dot_dimension_numbers<[1], [0], [0], [1], [0, 0, 1, 1], [], []>} : vector<8x128xbf16>, vector<128x128xbf16>, vector<8x128xf32> -> vector<8x128xf32>
    %113 = arith.truncf %112 : vector<8x128xf32> to vector<8x128xbf16>
    %c10_83 = arith.constant 10 : index
    %c0_84 = arith.constant 0 : index
    %c0_85 = arith.constant 0 : index
    %114 = vector.load %arg3[%c10_83, %c0_84, %c0_85] : memref<21x1x128xbf16, #tpu.memory_space<vmem>>, vector<1x1x128xbf16>
    %115 = vector.shape_cast %114 : vector<1x1x128xbf16> to vector<1x128xbf16>
    %116 = vector.broadcast %115 : vector<1x128xbf16> to vector<8x128xbf16>
    %117 = arith.addf %113, %116 : vector<8x128xbf16>
    %cst_86 = arith.constant 0.000000e+00 : bf16
    %118 = vector.broadcast %cst_86 : bf16 to vector<8x128xbf16>
    %119 = arith.maximumf %117, %118 : vector<8x128xbf16>
    %c11 = arith.constant 11 : index
    %c0_87 = arith.constant 0 : index
    %c0_88 = arith.constant 0 : index
    %120 = vector.load %arg2[%c11, %c0_87, %c0_88] : memref<21x128x128xbf16, #tpu.memory_space<vmem>>, vector<1x128x128xbf16>
    %121 = vector.shape_cast %120 : vector<1x128x128xbf16> to vector<128x128xbf16>
    %cst_89 = arith.constant dense<0.000000e+00> : vector<8x128xf32>
    %122 = tpu.matmul %119, %121, %cst_89 {dimension_numbers = #tpu.dot_dimension_numbers<[1], [0], [0], [1], [0, 0, 1, 1], [], []>} : vector<8x128xbf16>, vector<128x128xbf16>, vector<8x128xf32> -> vector<8x128xf32>
    %123 = arith.truncf %122 : vector<8x128xf32> to vector<8x128xbf16>
    %c11_90 = arith.constant 11 : index
    %c0_91 = arith.constant 0 : index
    %c0_92 = arith.constant 0 : index
    %124 = vector.load %arg3[%c11_90, %c0_91, %c0_92] : memref<21x1x128xbf16, #tpu.memory_space<vmem>>, vector<1x1x128xbf16>
    %125 = vector.shape_cast %124 : vector<1x1x128xbf16> to vector<1x128xbf16>
    %126 = vector.broadcast %125 : vector<1x128xbf16> to vector<8x128xbf16>
    %127 = arith.addf %123, %126 : vector<8x128xbf16>
    %cst_93 = arith.constant 0.000000e+00 : bf16
    %128 = vector.broadcast %cst_93 : bf16 to vector<8x128xbf16>
    %129 = arith.maximumf %127, %128 : vector<8x128xbf16>
    %c2_94 = arith.constant 2 : index
    %c0_95 = arith.constant 0 : index
    %c0_96 = arith.constant 0 : index
    %130 = vector.load %arg5[%c2_94, %c0_95, %c0_96] : memref<3x8x128xbf16, #tpu.memory_space<vmem>>, vector<1x8x128xbf16>
    %131 = vector.shape_cast %130 : vector<1x8x128xbf16> to vector<8x128xbf16>
    %132 = arith.addf %129, %131 : vector<8x128xbf16>
    %c12 = arith.constant 12 : index
    %c0_97 = arith.constant 0 : index
    %c0_98 = arith.constant 0 : index
    %133 = vector.load %arg2[%c12, %c0_97, %c0_98] : memref<21x128x128xbf16, #tpu.memory_space<vmem>>, vector<1x128x128xbf16>
    %134 = vector.shape_cast %133 : vector<1x128x128xbf16> to vector<128x128xbf16>
    %cst_99 = arith.constant dense<0.000000e+00> : vector<8x128xf32>
    %135 = tpu.matmul %132, %134, %cst_99 {dimension_numbers = #tpu.dot_dimension_numbers<[1], [0], [0], [1], [0, 0, 1, 1], [], []>} : vector<8x128xbf16>, vector<128x128xbf16>, vector<8x128xf32> -> vector<8x128xf32>
    %136 = arith.truncf %135 : vector<8x128xf32> to vector<8x128xbf16>
    %c12_100 = arith.constant 12 : index
    %c0_101 = arith.constant 0 : index
    %c0_102 = arith.constant 0 : index
    %137 = vector.load %arg3[%c12_100, %c0_101, %c0_102] : memref<21x1x128xbf16, #tpu.memory_space<vmem>>, vector<1x1x128xbf16>
    %138 = vector.shape_cast %137 : vector<1x1x128xbf16> to vector<1x128xbf16>
    %139 = vector.broadcast %138 : vector<1x128xbf16> to vector<8x128xbf16>
    %140 = arith.addf %136, %139 : vector<8x128xbf16>
    %cst_103 = arith.constant 0.000000e+00 : bf16
    %141 = vector.broadcast %cst_103 : bf16 to vector<8x128xbf16>
    %142 = arith.maximumf %140, %141 : vector<8x128xbf16>
    %c13 = arith.constant 13 : index
    %c0_104 = arith.constant 0 : index
    %c0_105 = arith.constant 0 : index
    %143 = vector.load %arg2[%c13, %c0_104, %c0_105] : memref<21x128x128xbf16, #tpu.memory_space<vmem>>, vector<1x128x128xbf16>
    %144 = vector.shape_cast %143 : vector<1x128x128xbf16> to vector<128x128xbf16>
    %cst_106 = arith.constant dense<0.000000e+00> : vector<8x128xf32>
    %145 = tpu.matmul %142, %144, %cst_106 {dimension_numbers = #tpu.dot_dimension_numbers<[1], [0], [0], [1], [0, 0, 1, 1], [], []>} : vector<8x128xbf16>, vector<128x128xbf16>, vector<8x128xf32> -> vector<8x128xf32>
    %146 = arith.truncf %145 : vector<8x128xf32> to vector<8x128xbf16>
    %c13_107 = arith.constant 13 : index
    %c0_108 = arith.constant 0 : index
    %c0_109 = arith.constant 0 : index
    %147 = vector.load %arg3[%c13_107, %c0_108, %c0_109] : memref<21x1x128xbf16, #tpu.memory_space<vmem>>, vector<1x1x128xbf16>
    %148 = vector.shape_cast %147 : vector<1x1x128xbf16> to vector<1x128xbf16>
    %149 = vector.broadcast %148 : vector<1x128xbf16> to vector<8x128xbf16>
    %150 = arith.addf %146, %149 : vector<8x128xbf16>
    %cst_110 = arith.constant 0.000000e+00 : bf16
    %151 = vector.broadcast %cst_110 : bf16 to vector<8x128xbf16>
    %152 = arith.maximumf %150, %151 : vector<8x128xbf16>
    %c14 = arith.constant 14 : index
    %c0_111 = arith.constant 0 : index
    %c0_112 = arith.constant 0 : index
    %153 = vector.load %arg2[%c14, %c0_111, %c0_112] : memref<21x128x128xbf16, #tpu.memory_space<vmem>>, vector<1x128x128xbf16>
    %154 = vector.shape_cast %153 : vector<1x128x128xbf16> to vector<128x128xbf16>
    %cst_113 = arith.constant dense<0.000000e+00> : vector<8x128xf32>
    %155 = tpu.matmul %152, %154, %cst_113 {dimension_numbers = #tpu.dot_dimension_numbers<[1], [0], [0], [1], [0, 0, 1, 1], [], []>} : vector<8x128xbf16>, vector<128x128xbf16>, vector<8x128xf32> -> vector<8x128xf32>
    %156 = arith.truncf %155 : vector<8x128xf32> to vector<8x128xbf16>
    %c14_114 = arith.constant 14 : index
    %c0_115 = arith.constant 0 : index
    %c0_116 = arith.constant 0 : index
    %157 = vector.load %arg3[%c14_114, %c0_115, %c0_116] : memref<21x1x128xbf16, #tpu.memory_space<vmem>>, vector<1x1x128xbf16>
    %158 = vector.shape_cast %157 : vector<1x1x128xbf16> to vector<1x128xbf16>
    %159 = vector.broadcast %158 : vector<1x128xbf16> to vector<8x128xbf16>
    %160 = arith.addf %156, %159 : vector<8x128xbf16>
    %cst_117 = arith.constant 0.000000e+00 : bf16
    %161 = vector.broadcast %cst_117 : bf16 to vector<8x128xbf16>
    %162 = arith.maximumf %160, %161 : vector<8x128xbf16>
    %c1_118 = arith.constant 1 : index
    %c0_119 = arith.constant 0 : index
    %c0_120 = arith.constant 0 : index
    %163 = vector.load %arg5[%c1_118, %c0_119, %c0_120] : memref<3x8x128xbf16, #tpu.memory_space<vmem>>, vector<1x8x128xbf16>
    %164 = vector.shape_cast %163 : vector<1x8x128xbf16> to vector<8x128xbf16>
    %165 = arith.addf %162, %164 : vector<8x128xbf16>
    %c15 = arith.constant 15 : index
    %c0_121 = arith.constant 0 : index
    %c0_122 = arith.constant 0 : index
    %166 = vector.load %arg2[%c15, %c0_121, %c0_122] : memref<21x128x128xbf16, #tpu.memory_space<vmem>>, vector<1x128x128xbf16>
    %167 = vector.shape_cast %166 : vector<1x128x128xbf16> to vector<128x128xbf16>
    %cst_123 = arith.constant dense<0.000000e+00> : vector<8x128xf32>
    %168 = tpu.matmul %165, %167, %cst_123 {dimension_numbers = #tpu.dot_dimension_numbers<[1], [0], [0], [1], [0, 0, 1, 1], [], []>} : vector<8x128xbf16>, vector<128x128xbf16>, vector<8x128xf32> -> vector<8x128xf32>
    %169 = arith.truncf %168 : vector<8x128xf32> to vector<8x128xbf16>
    %c15_124 = arith.constant 15 : index
    %c0_125 = arith.constant 0 : index
    %c0_126 = arith.constant 0 : index
    %170 = vector.load %arg3[%c15_124, %c0_125, %c0_126] : memref<21x1x128xbf16, #tpu.memory_space<vmem>>, vector<1x1x128xbf16>
    %171 = vector.shape_cast %170 : vector<1x1x128xbf16> to vector<1x128xbf16>
    %172 = vector.broadcast %171 : vector<1x128xbf16> to vector<8x128xbf16>
    %173 = arith.addf %169, %172 : vector<8x128xbf16>
    %cst_127 = arith.constant 0.000000e+00 : bf16
    %174 = vector.broadcast %cst_127 : bf16 to vector<8x128xbf16>
    %175 = arith.maximumf %173, %174 : vector<8x128xbf16>
    %c16 = arith.constant 16 : index
    %c0_128 = arith.constant 0 : index
    %c0_129 = arith.constant 0 : index
    %176 = vector.load %arg2[%c16, %c0_128, %c0_129] : memref<21x128x128xbf16, #tpu.memory_space<vmem>>, vector<1x128x128xbf16>
    %177 = vector.shape_cast %176 : vector<1x128x128xbf16> to vector<128x128xbf16>
    %cst_130 = arith.constant dense<0.000000e+00> : vector<8x128xf32>
    %178 = tpu.matmul %175, %177, %cst_130 {dimension_numbers = #tpu.dot_dimension_numbers<[1], [0], [0], [1], [0, 0, 1, 1], [], []>} : vector<8x128xbf16>, vector<128x128xbf16>, vector<8x128xf32> -> vector<8x128xf32>
    %179 = arith.truncf %178 : vector<8x128xf32> to vector<8x128xbf16>
    %c16_131 = arith.constant 16 : index
    %c0_132 = arith.constant 0 : index
    %c0_133 = arith.constant 0 : index
    %180 = vector.load %arg3[%c16_131, %c0_132, %c0_133] : memref<21x1x128xbf16, #tpu.memory_space<vmem>>, vector<1x1x128xbf16>
    %181 = vector.shape_cast %180 : vector<1x1x128xbf16> to vector<1x128xbf16>
    %182 = vector.broadcast %181 : vector<1x128xbf16> to vector<8x128xbf16>
    %183 = arith.addf %179, %182 : vector<8x128xbf16>
    %cst_134 = arith.constant 0.000000e+00 : bf16
    %184 = vector.broadcast %cst_134 : bf16 to vector<8x128xbf16>
    %185 = arith.maximumf %183, %184 : vector<8x128xbf16>
    %c17 = arith.constant 17 : index
    %c0_135 = arith.constant 0 : index
    %c0_136 = arith.constant 0 : index
    %186 = vector.load %arg2[%c17, %c0_135, %c0_136] : memref<21x128x128xbf16, #tpu.memory_space<vmem>>, vector<1x128x128xbf16>
    %187 = vector.shape_cast %186 : vector<1x128x128xbf16> to vector<128x128xbf16>
    %cst_137 = arith.constant dense<0.000000e+00> : vector<8x128xf32>
    %188 = tpu.matmul %185, %187, %cst_137 {dimension_numbers = #tpu.dot_dimension_numbers<[1], [0], [0], [1], [0, 0, 1, 1], [], []>} : vector<8x128xbf16>, vector<128x128xbf16>, vector<8x128xf32> -> vector<8x128xf32>
    %189 = arith.truncf %188 : vector<8x128xf32> to vector<8x128xbf16>
    %c17_138 = arith.constant 17 : index
    %c0_139 = arith.constant 0 : index
    %c0_140 = arith.constant 0 : index
    %190 = vector.load %arg3[%c17_138, %c0_139, %c0_140] : memref<21x1x128xbf16, #tpu.memory_space<vmem>>, vector<1x1x128xbf16>
    %191 = vector.shape_cast %190 : vector<1x1x128xbf16> to vector<1x128xbf16>
    %192 = vector.broadcast %191 : vector<1x128xbf16> to vector<8x128xbf16>
    %193 = arith.addf %189, %192 : vector<8x128xbf16>
    %cst_141 = arith.constant 0.000000e+00 : bf16
    %194 = vector.broadcast %cst_141 : bf16 to vector<8x128xbf16>
    %195 = arith.maximumf %193, %194 : vector<8x128xbf16>
    %c0_142 = arith.constant 0 : index
    %c0_143 = arith.constant 0 : index
    %c0_144 = arith.constant 0 : index
    %196 = vector.load %arg5[%c0_142, %c0_143, %c0_144] : memref<3x8x128xbf16, #tpu.memory_space<vmem>>, vector<1x8x128xbf16>
    %197 = vector.shape_cast %196 : vector<1x8x128xbf16> to vector<8x128xbf16>
    %198 = arith.addf %195, %197 : vector<8x128xbf16>
    %c18 = arith.constant 18 : index
    %c0_145 = arith.constant 0 : index
    %c0_146 = arith.constant 0 : index
    %199 = vector.load %arg2[%c18, %c0_145, %c0_146] : memref<21x128x128xbf16, #tpu.memory_space<vmem>>, vector<1x128x128xbf16>
    %200 = vector.shape_cast %199 : vector<1x128x128xbf16> to vector<128x128xbf16>
    %cst_147 = arith.constant dense<0.000000e+00> : vector<8x128xf32>
    %201 = tpu.matmul %198, %200, %cst_147 {dimension_numbers = #tpu.dot_dimension_numbers<[1], [0], [0], [1], [0, 0, 1, 1], [], []>} : vector<8x128xbf16>, vector<128x128xbf16>, vector<8x128xf32> -> vector<8x128xf32>
    %202 = arith.truncf %201 : vector<8x128xf32> to vector<8x128xbf16>
    %c18_148 = arith.constant 18 : index
    %c0_149 = arith.constant 0 : index
    %c0_150 = arith.constant 0 : index
    %203 = vector.load %arg3[%c18_148, %c0_149, %c0_150] : memref<21x1x128xbf16, #tpu.memory_space<vmem>>, vector<1x1x128xbf16>
    %204 = vector.shape_cast %203 : vector<1x1x128xbf16> to vector<1x128xbf16>
    %205 = vector.broadcast %204 : vector<1x128xbf16> to vector<8x128xbf16>
    %206 = arith.addf %202, %205 : vector<8x128xbf16>
    %cst_151 = arith.constant 0.000000e+00 : bf16
    %207 = vector.broadcast %cst_151 : bf16 to vector<8x128xbf16>
    %208 = arith.maximumf %206, %207 : vector<8x128xbf16>
    %c19 = arith.constant 19 : index
    %c0_152 = arith.constant 0 : index
    %c0_153 = arith.constant 0 : index
    %209 = vector.load %arg2[%c19, %c0_152, %c0_153] : memref<21x128x128xbf16, #tpu.memory_space<vmem>>, vector<1x128x128xbf16>
    %210 = vector.shape_cast %209 : vector<1x128x128xbf16> to vector<128x128xbf16>
    %cst_154 = arith.constant dense<0.000000e+00> : vector<8x128xf32>
    %211 = tpu.matmul %208, %210, %cst_154 {dimension_numbers = #tpu.dot_dimension_numbers<[1], [0], [0], [1], [0, 0, 1, 1], [], []>} : vector<8x128xbf16>, vector<128x128xbf16>, vector<8x128xf32> -> vector<8x128xf32>
    %212 = arith.truncf %211 : vector<8x128xf32> to vector<8x128xbf16>
    %c19_155 = arith.constant 19 : index
    %c0_156 = arith.constant 0 : index
    %c0_157 = arith.constant 0 : index
    %213 = vector.load %arg3[%c19_155, %c0_156, %c0_157] : memref<21x1x128xbf16, #tpu.memory_space<vmem>>, vector<1x1x128xbf16>
    %214 = vector.shape_cast %213 : vector<1x1x128xbf16> to vector<1x128xbf16>
    %215 = vector.broadcast %214 : vector<1x128xbf16> to vector<8x128xbf16>
    %216 = arith.addf %212, %215 : vector<8x128xbf16>
    %cst_158 = arith.constant 0.000000e+00 : bf16
    %217 = vector.broadcast %cst_158 : bf16 to vector<8x128xbf16>
    %218 = arith.maximumf %216, %217 : vector<8x128xbf16>
    %c20 = arith.constant 20 : index
    %c0_159 = arith.constant 0 : index
    %c0_160 = arith.constant 0 : index
    %219 = vector.load %arg2[%c20, %c0_159, %c0_160] : memref<21x128x128xbf16, #tpu.memory_space<vmem>>, vector<1x128x128xbf16>
    %220 = vector.shape_cast %219 : vector<1x128x128xbf16> to vector<128x128xbf16>
    %cst_161 = arith.constant dense<0.000000e+00> : vector<8x128xf32>
    %221 = tpu.matmul %218, %220, %cst_161 {dimension_numbers = #tpu.dot_dimension_numbers<[1], [0], [0], [1], [0, 0, 1, 1], [], []>} : vector<8x128xbf16>, vector<128x128xbf16>, vector<8x128xf32> -> vector<8x128xf32>
    %c20_162 = arith.constant 20 : index
    %c0_163 = arith.constant 0 : index
    %c0_164 = arith.constant 0 : index
    %222 = vector.load %arg3[%c20_162, %c0_163, %c0_164] : memref<21x1x128xbf16, #tpu.memory_space<vmem>>, vector<1x1x128xbf16>
    %223 = vector.shape_cast %222 : vector<1x1x128xbf16> to vector<1x128xbf16>
    %224 = arith.extf %223 : vector<1x128xbf16> to vector<1x128xf32>
    %225 = vector.broadcast %224 : vector<1x128xf32> to vector<8x128xf32>
    %226 = arith.addf %221, %225 : vector<8x128xf32>
    %c0_165 = arith.constant 0 : index
    %c0_166 = arith.constant 0 : index
    %227 = vector.load %arg4[%c0_165, %c0_166] : memref<8x128xf32, #tpu.memory_space<vmem>>, vector<8x128xf32>
    tpu.vector_store %arg4[%c0_165, %c0_166], %226 {strides = array<i32>} : memref<8x128xf32, #tpu.memory_space<vmem>>, vector<8x128xf32>,
    return
  }
  func.func @transform_0(%arg0: i32) -> (i32, i32) {
    %c0_i32 = arith.constant 0 : i32
    %c0_i32_0 = arith.constant 0 : i32
    return %arg0, %c0_i32 : i32, i32
  }
  func.func @transform_1(%arg0: i32) -> (i32, i32, i32) {
    %c0_i32 = arith.constant 0 : i32
    %c0_i32_0 = arith.constant 0 : i32
    %c0_i32_1 = arith.constant 0 : i32
    %c0_i32_2 = arith.constant 0 : i32
    return %c0_i32, %c0_i32_0, %c0_i32_1 : i32, i32, i32
  }
  func.func @transform_2(%arg0: i32) -> (i32, i32, i32) {
    %c0_i32 = arith.constant 0 : i32
    %c0_i32_0 = arith.constant 0 : i32
    %c0_i32_1 = arith.constant 0 : i32
    %c0_i32_2 = arith.constant 0 : i32
    return %c0_i32, %c0_i32_0, %c0_i32_1 : i32, i32, i32
  }
  func.func @transform_3(%arg0: i32) -> (i32, i32) {
    %c0_i32 = arith.constant 0 : i32
    %c0_i32_0 = arith.constant 0 : i32
    return %arg0, %c0_i32 : i32, i32
  }
}

</mosaic_0001>

<llo_original>
// kernel: _lambda_.1
$region0: #{_lambda_.1}
  #allocation0 [shape = 'u32[]', space=smem, size = 0x4, offset = 0x4, fixed_abs, tag = 'smem constant byte address 0x4 - core index']
  #allocation1 [shape = 'u32[144,128]{1,0:T(1,128)}', space=vmem, size = 0x12000, scoped, tag = 'internal scratch']
  #allocation2 [shape = 'bf16[3,8,128]{2,1,0:T(8,128)(2,1)}', space=vmem, size = 0x1800, scoped, tag = 'scratch operand']
  %s0 = inlined_call_operand.vmem [shape: bf16[8,128], index: 0, kind: input, shape index: {}]
  %s1 = inlined_call_operand.hbm [shape: bf16[21,128,128], index: 1, kind: input, shape index: {}]
  %s2 = inlined_call_operand.vmem [shape: bf16[21,1,128], index: 2, kind: input, shape index: {}]
  %s3 = inlined_call_operand.hbm [shape: f32[8,128], index: 3, kind: output, shape index: {}]
  %s4 = sld [smem:[#allocation0]]
  $region26: #{_lambda_.1} parent=0
    _
  %s6 = ssub.s32 1, %s4
  %s7 = scalar_select 0, %s6, %s4
  $region1: #{_lambda_.1} parent=0
    #allocation3 [shape = 'u8[688128]{0}', space=vmem, size = 0xa8000, scoped, tag = 'input window, operand 1, single buffered']
    #allocation4 [shape = 's32[1]{0}', space=sflag, size = 0x4, scoped, tag = 'scoped memory for _lambda_.1']
    #allocation5 [shape = 's32[1]{0}', space=sflag, size = 0x4, scoped, tag = 'scoped memory for _lambda_.1']
    #allocation6 [shape = 'u8[4096]{0}', space=vmem, size = 0x1000, scoped, tag = 'output window, operand 0, single buffered']
    %8 = vsyncpa [#allocation4], 0
    %9 = vsyncpa [#allocation5], 0
    // Predicated region
    $region2: #{_lambda_.1} parent=1 // pred_check
      _
    $region3: #{_lambda_.1} parent=1 // pred_check_branch
      %11 = sbr.rel (0) target = $region5
    $region4: #{_lambda_.1} parent=1 // pred_region
      _
    $region5: #{_lambda_.1} parent=1 // pred_fallthru
      _
    // Predicated region
    $region6: #{_lambda_.1} parent=1 // pred_check
      _
    $region7: #{_lambda_.1} parent=1 // pred_check_branch
      %13 = sbr.rel (0) target = $region9
    $region8: #{_lambda_.1} parent=1 // pred_region
      %s15 = ssub.s32 21504, 21504
      %16 = vsyncadd [#allocation4], %s15
      %s17 = sshll.u32 [#allocation3], 4
      %s18 = int_to_ptr.vmem [resolvable:$true] %s17
      %23 = dma.hbm_to_vmem [thread:$0]  %s1, 21504, %s18, [#allocation4], 64, 64, 4
    $region9: #{_lambda_.1} parent=1 // pred_fallthru
      _
    // Predicated region
    $region10: #{_lambda_.1} parent=1 // pred_check
      _
    $region11: #{_lambda_.1} parent=1 // pred_check_branch
      %25 = sbr.rel (0) target = $region13
    $region12: #{_lambda_.1} parent=1 // pred_region
      _
    $region13: #{_lambda_.1} parent=1 // pred_fallthru
      _
    // Predicated region
    $region14: #{_lambda_.1} parent=1 // pred_check
      _
    $region15: #{_lambda_.1} parent=1 // pred_check_branch
      %27 = sbr.rel (0) target = $region17
    $region16: #{_lambda_.1} parent=1 // pred_region
      %28 = dma.done [#allocation4], 21504
    $region17: #{_lambda_.1} parent=1 // pred_fallthru
      _
    %v30 = vld [vmem:[%s0] sm:$0xf]
    %v31 = vld [vmem:[#allocation3] sm:$0xf]
    %v32 = vld [vmem:[#allocation3 + $0x4] sm:$0xf]
    %v33 = vld [vmem:[#allocation3 + $0x8] sm:$0xf]
    %v34 = vld [vmem:[#allocation3 + $0xc] sm:$0xf]
    %v35 = vld [vmem:[#allocation3 + $0x10] sm:$0xf]
    %v36 = vld [vmem:[#allocation3 + $0x14] sm:$0xf]
    %v37 = vld [vmem:[#allocation3 + $0x18] sm:$0xf]
    %v38 = vld [vmem:[#allocation3 + $0x1c] sm:$0xf]
    %v39 = vld [vmem:[#allocation3 + $0x20] sm:$0xf]
    %v40 = vld [vmem:[#allocation3 + $0x24] sm:$0xf]
    %v41 = vld [vmem:[#allocation3 + $0x28] sm:$0xf]
    %v42 = vld [vmem:[#allocation3 + $0x2c] sm:$0xf]
    %v43 = vld [vmem:[#allocation3 + $0x30] sm:$0xf]
    %v44 = vld [vmem:[#allocation3 + $0x34] sm:$0xf]
    %v45 = vld [vmem:[#allocation3 + $0x38] sm:$0xf]
    %v46 = vld [vmem:[#allocation3 + $0x3c] sm:$0xf]
    %v63 = vunpack.c.l.b16 %v31
    %v64 = vunpack.c.l.b16 %v32
    %v65 = vunpack.c.l.b16 %v33
    %v66 = vunpack.c.l.b16 %v34
    %v67 = vunpack.c.l.b16 %v35
    %v68 = vunpack.c.l.b16 %v36
    %v69 = vunpack.c.l.b16 %v37
    %v70 = vunpack.c.l.b16 %v38
    %v71 = vunpack.c.l.b16 %v39
    %v72 = vunpack.c.l.b16 %v40
    %v73 = vunpack.c.l.b16 %v41
    %v74 = vunpack.c.l.b16 %v42
    %v75 = vunpack.c.l.b16 %v43
    %v76 = vunpack.c.l.b16 %v44
    %v77 = vunpack.c.l.b16 %v45
    %v78 = vunpack.c.l.b16 %v46
    %v79 = vpack.c.b16 %v64, %v63
    %v80 = vpack.c.b16 %v66, %v65
    %v81 = vpack.c.b16 %v68, %v67
    %v82 = vpack.c.b16 %v70, %v69
    %v83 = vpack.c.b16 %v72, %v71
    %v84 = vpack.c.b16 %v74, %v73
    %v85 = vpack.c.b16 %v76, %v75
    %v86 = vpack.c.b16 %v78, %v77
    %95 = vmatprep.subr.bf16.mxu0 0
    %96 = vmatpush1.bf16.msra.mxu0 %v79
    %97 = vmatprep.subr.bf16.mxu0 0
    %98 = vmatpush1.bf16.msra.mxu0 %v80
    %99 = vmatprep.subr.bf16.mxu0 0
    %100 = vmatpush1.bf16.msra.mxu0 %v81
    %101 = vmatprep.subr.bf16.mxu0 0
    %102 = vmatpush1.bf16.msra.mxu0 %v82
    %103 = vmatprep.subr.bf16.mxu0 0
    %104 = vmatpush1.bf16.msra.mxu0 %v83
    %105 = vmatprep.subr.bf16.mxu0 0
    %106 = vmatpush1.bf16.msra.mxu0 %v84
    %107 = vmatprep.subr.bf16.mxu0 0
    %108 = vmatpush1.bf16.msra.mxu0 %v85
    %109 = vmatprep.subr.bf16.mxu0 0
    %110 = vmatpush1.bf16.msra.mxu0 %v86
    %111 = vmatprep.subr.bf16.mxu0 0
    %112 = vmatpush1.bf16.msra.mxu0 0
    %113 = vmatprep.subr.bf16.mxu0 0
    %114 = vmatpush1.bf16.msra.mxu0 0
    %115 = vmatprep.subr.bf16.mxu0 0
    %116 = vmatpush1.bf16.msra.mxu0 0
    %117 = vmatprep.subr.bf16.mxu0 0
    %118 = vmatpush1.bf16.msra.mxu0 0
    %119 = vmatprep.subr.bf16.mxu0 0
    %120 = vmatpush1.bf16.msra.mxu0 0
    %121 = vmatprep.subr.bf16.mxu0 0
    %122 = vmatpush1.bf16.msra.mxu0 0
    %123 = vmatprep.subr.bf16.mxu0 0
    %124 = vmatpush1.bf16.msra.mxu0 0
    %125 = vmatprep.subr.bf16.mxu0 0
    %126 = vmatpush1.bf16.msra.mxu0 0
    %127 = vmatprep.mubr.bf16.mxu0 0
    %128 = vmatmul.mubr.bf16.gmra.mrb[0].mxu0 %v30
    %v129 = vpop.f32.mrb[0].mxu0
    %v130 = vadd.f32 0.0, %v129
    %v131 = vpop.f32.mrb[0].mxu0
    %v132 = vpop.f32.mrb[0].mxu0
    %v133 = vpop.f32.mrb[0].mxu0
    %134 = vdwg.mxu0
    %v135 = vpack.c.bf16 %v130, %v130
    %v136 = vld [vmem:[%s2] sm:$0x1]
    %v138 = vpack.i.b16 %v136, %v136
    %v140 = vlaneseq
    %v141 = vshrl.u32 %v140, 7
    %v142 = vsub.s32 0, %v141
    %v143 = vrot.slane %v138, %v142
    %v144 = vadd.bf16 %v135, %v143
    %v145 = vmax.bf16 %v144, 0
    %s146 = scalar_lea.vmem [#allocation3], 64
    %v147 = vld [vmem:[%s146] sm:$0xf]
    %v148 = vld [vmem:[%s146 + $0x4] sm:$0xf]
    %v149 = vld [vmem:[%s146 + $0x8] sm:$0xf]
    %v150 = vld [vmem:[%s146 + $0xc] sm:$0xf]
    %v151 = vld [vmem:[%s146 + $0x10] sm:$0xf]
    %v152 = vld [vmem:[%s146 + $0x14] sm:$0xf]
    %v153 = vld [vmem:[%s146 + $0x18] sm:$0xf]
    %v154 = vld [vmem:[%s146 + $0x1c] sm:$0xf]
    %v155 = vld [vmem:[%s146 + $0x20] sm:$0xf]
    %v156 = vld [vmem:[%s146 + $0x24] sm:$0xf]
    %v157 = vld [vmem:[%s146 + $0x28] sm:$0xf]
    %v158 = vld [vmem:[%s146 + $0x2c] sm:$0xf]
    %v159 = vld [vmem:[%s146 + $0x30] sm:$0xf]
    %v160 = vld [vmem:[%s146 + $0x34] sm:$0xf]
    %v161 = vld [vmem:[%s146 + $0x38] sm:$0xf]
    %v162 = vld [vmem:[%s146 + $0x3c] sm:$0xf]
    %v179 = vunpack.c.l.b16 %v147
    %v180 = vunpack.c.l.b16 %v148
    %v181 = vunpack.c.l.b16 %v149
    %v182 = vunpack.c.l.b16 %v150
    %v183 = vunpack.c.l.b16 %v151
    %v184 = vunpack.c.l.b16 %v152
    %v185 = vunpack.c.l.b16 %v153
    %v186 = vunpack.c.l.b16 %v154
    %v187 = vunpack.c.l.b16 %v155
    %v188 = vunpack.c.l.b16 %v156
    %v189 = vunpack.c.l.b16 %v157
    %v190 = vunpack.c.l.b16 %v158
    %v191 = vunpack.c.l.b16 %v159
    %v192 = vunpack.c.l.b16 %v160
    %v193 = vunpack.c.l.b16 %v161
    %v194 = vunpack.c.l.b16 %v162
    %v195 = vpack.c.b16 %v180, %v179
    %v196 = vpack.c.b16 %v182, %v181
    %v197 = vpack.c.b16 %v184, %v183
    %v198 = vpack.c.b16 %v186, %v185
    %v199 = vpack.c.b16 %v188, %v187
    %v200 = vpack.c.b16 %v190, %v189
    %v201 = vpack.c.b16 %v192, %v191
    %v202 = vpack.c.b16 %v194, %v193
    %211 = vmatprep.subr.bf16.mxu0 0
    %212 = vmatpush1.bf16.msra.mxu0 %v195
    %213 = vmatprep.subr.bf16.mxu0 0
    %214 = vmatpush1.bf16.msra.mxu0 %v196
    %215 = vmatprep.subr.bf16.mxu0 0
    %216 = vmatpush1.bf16.msra.mxu0 %v197
    %217 = vmatprep.subr.bf16.mxu0 0
    %218 = vmatpush1.bf16.msra.mxu0 %v198
    %219 = vmatprep.subr.bf16.mxu0 0
    %220 = vmatpush1.bf16.msra.mxu0 %v199
    %221 = vmatprep.subr.bf16.mxu0 0
    %222 = vmatpush1.bf16.msra.mxu0 %v200
    %223 = vmatprep.subr.bf16.mxu0 0
    %224 = vmatpush1.bf16.msra.mxu0 %v201
    %225 = vmatprep.subr.bf16.mxu0 0
    %226 = vmatpush1.bf16.msra.mxu0 %v202
    %227 = vmatprep.subr.bf16.mxu0 0
    %228 = vmatpush1.bf16.msra.mxu0 0
    %229 = vmatprep.subr.bf16.mxu0 0
    %230 = vmatpush1.bf16.msra.mxu0 0
    %231 = vmatprep.subr.bf16.mxu0 0
    %232 = vmatpush1.bf16.msra.mxu0 0
    %233 = vmatprep.subr.bf16.mxu0 0
    %234 = vmatpush1.bf16.msra.mxu0 0
    %235 = vmatprep.subr.bf16.mxu0 0
    %236 = vmatpush1.bf16.msra.mxu0 0
    %237 = vmatprep.subr.bf16.mxu0 0
    %238 = vmatpush1.bf16.msra.mxu0 0
    %239 = vmatprep.subr.bf16.mxu0 0
    %240 = vmatpush1.bf16.msra.mxu0 0
    %241 = vmatprep.subr.bf16.mxu0 0
    %242 = vmatpush1.bf16.msra.mxu0 0
    %243 = vmatprep.mubr.bf16.mxu0 0
    %244 = vmatmul.mubr.bf16.gmra.mrb[0].mxu0 %v145
    %v245 = vpop.f32.mrb[0].mxu0
    %v246 = vadd.f32 0.0, %v245
    %v247 = vpop.f32.mrb[0].mxu0
    %v248 = vpop.f32.mrb[0].mxu0
    %v249 = vpop.f32.mrb[0].mxu0
    %250 = vdwg.mxu0
    %v251 = vpack.c.bf16 %v246, %v246
    %s252 = scalar_lea.vmem %s2, 1
    %v253 = vld [vmem:[%s252] sm:$0x1]
    %v255 = vpack.i.b16 %v253, %v253
    %v257 = vlaneseq
    %v258 = vshrl.u32 %v257, 7
    %v259 = vsub.s32 0, %v258
    %v260 = vrot.slane %v255, %v259
    %v261 = vadd.bf16 %v251, %v260
    %v262 = vmax.bf16 %v261, 0
    %s263 = scalar_lea.vmem [#allocation3], 128
    %v264 = vld [vmem:[%s263] sm:$0xf]
    %v265 = vld [vmem:[%s263 + $0x4] sm:$0xf]
    %v266 = vld [vmem:[%s263 + $0x8] sm:$0xf]
    %v267 = vld [vmem:[%s263 + $0xc] sm:$0xf]
    %v268 = vld [vmem:[%s263 + $0x10] sm:$0xf]
    %v269 = vld [vmem:[%s263 + $0x14] sm:$0xf]
    %v270 = vld [vmem:[%s263 + $0x18] sm:$0xf]
    %v271 = vld [vmem:[%s263 + $0x1c] sm:$0xf]
    %v272 = vld [vmem:[%s263 + $0x20] sm:$0xf]
    %v273 = vld [vmem:[%s263 + $0x24] sm:$0xf]
    %v274 = vld [vmem:[%s263 + $0x28] sm:$0xf]
    %v275 = vld [vmem:[%s263 + $0x2c] sm:$0xf]
    %v276 = vld [vmem:[%s263 + $0x30] sm:$0xf]
    %v277 = vld [vmem:[%s263 + $0x34] sm:$0xf]
    %v278 = vld [vmem:[%s263 + $0x38] sm:$0xf]
    %v279 = vld [vmem:[%s263 + $0x3c] sm:$0xf]
    %v296 = vunpack.c.l.b16 %v264
    %v297 = vunpack.c.l.b16 %v265
    %v298 = vunpack.c.l.b16 %v266
    %v299 = vunpack.c.l.b16 %v267
    %v300 = vunpack.c.l.b16 %v268
    %v301 = vunpack.c.l.b16 %v269
    %v302 = vunpack.c.l.b16 %v270
    %v303 = vunpack.c.l.b16 %v271
    %v304 = vunpack.c.l.b16 %v272
    %v305 = vunpack.c.l.b16 %v273
    %v306 = vunpack.c.l.b16 %v274
    %v307 = vunpack.c.l.b16 %v275
    %v308 = vunpack.c.l.b16 %v276
    %v309 = vunpack.c.l.b16 %v277
    %v310 = vunpack.c.l.b16 %v278
    %v311 = vunpack.c.l.b16 %v279
    %v312 = vpack.c.b16 %v297, %v296
    %v313 = vpack.c.b16 %v299, %v298
    %v314 = vpack.c.b16 %v301, %v300
    %v315 = vpack.c.b16 %v303, %v302
    %v316 = vpack.c.b16 %v305, %v304
    %v317 = vpack.c.b16 %v307, %v306
    %v318 = vpack.c.b16 %v309, %v308
    %v319 = vpack.c.b16 %v311, %v310
    %328 = vmatprep.subr.bf16.mxu0 0
    %329 = vmatpush1.bf16.msra.mxu0 %v312
    %330 = vmatprep.subr.bf16.mxu0 0
    %331 = vmatpush1.bf16.msra.mxu0 %v313
    %332 = vmatprep.subr.bf16.mxu0 0
    %333 = vmatpush1.bf16.msra.mxu0 %v314
    %334 = vmatprep.subr.bf16.mxu0 0
    %335 = vmatpush1.bf16.msra.mxu0 %v315
    %336 = vmatprep.subr.bf16.mxu0 0
    %337 = vmatpush1.bf16.msra.mxu0 %v316
    %338 = vmatprep.subr.bf16.mxu0 0
    %339 = vmatpush1.bf16.msra.mxu0 %v317
    %340 = vmatprep.subr.bf16.mxu0 0
    %341 = vmatpush1.bf16.msra.mxu0 %v318
    %342 = vmatprep.subr.bf16.mxu0 0
    %343 = vmatpush1.bf16.msra.mxu0 %v319
    %344 = vmatprep.subr.bf16.mxu0 0
    %345 = vmatpush1.bf16.msra.mxu0 0
    %346 = vmatprep.subr.bf16.mxu0 0
    %347 = vmatpush1.bf16.msra.mxu0 0
    %348 = vmatprep.subr.bf16.mxu0 0
    %349 = vmatpush1.bf16.msra.mxu0 0
    %350 = vmatprep.subr.bf16.mxu0 0
    %351 = vmatpush1.bf16.msra.mxu0 0
    %352 = vmatprep.subr.bf16.mxu0 0
    %353 = vmatpush1.bf16.msra.mxu0 0
    %354 = vmatprep.subr.bf16.mxu0 0
    %355 = vmatpush1.bf16.msra.mxu0 0
    %356 = vmatprep.subr.bf16.mxu0 0
    %357 = vmatpush1.bf16.msra.mxu0 0
    %358 = vmatprep.subr.bf16.mxu0 0
    %359 = vmatpush1.bf16.msra.mxu0 0
    %360 = vmatprep.mubr.bf16.mxu0 0
    %361 = vmatmul.mubr.bf16.gmra.mrb[0].mxu0 %v262
    %v362 = vpop.f32.mrb[0].mxu0
    %v363 = vadd.f32 0.0, %v362
    %v364 = vpop.f32.mrb[0].mxu0
    %v365 = vpop.f32.mrb[0].mxu0
    %v366 = vpop.f32.mrb[0].mxu0
    %367 = vdwg.mxu0
    %v368 = vpack.c.bf16 %v363, %v363
    %s369 = scalar_lea.vmem %s2, 2
    %v370 = vld [vmem:[%s369] sm:$0x1]
    %v372 = vpack.i.b16 %v370, %v370
    %v374 = vlaneseq
    %v375 = vshrl.u32 %v374, 7
    %v376 = vsub.s32 0, %v375
    %v377 = vrot.slane %v372, %v376
    %v378 = vadd.bf16 %v368, %v377
    %v379 = vmax.bf16 %v378, 0
    %380 = vst [vmem:[#allocation2] sm:$0xf] %v379
    %s381 = scalar_lea.vmem [#allocation3], 192
    %v382 = vld [vmem:[%s381] sm:$0xf]
    %v383 = vld [vmem:[%s381 + $0x4] sm:$0xf]
    %v384 = vld [vmem:[%s381 + $0x8] sm:$0xf]
    %v385 = vld [vmem:[%s381 + $0xc] sm:$0xf]
    %v386 = vld [vmem:[%s381 + $0x10] sm:$0xf]
    %v387 = vld [vmem:[%s381 + $0x14] sm:$0xf]
    %v388 = vld [vmem:[%s381 + $0x18] sm:$0xf]
    %v389 = vld [vmem:[%s381 + $0x1c] sm:$0xf]
    %v390 = vld [vmem:[%s381 + $0x20] sm:$0xf]
    %v391 = vld [vmem:[%s381 + $0x24] sm:$0xf]
    %v392 = vld [vmem:[%s381 + $0x28] sm:$0xf]
    %v393 = vld [vmem:[%s381 + $0x2c] sm:$0xf]
    %v394 = vld [vmem:[%s381 + $0x30] sm:$0xf]
    %v395 = vld [vmem:[%s381 + $0x34] sm:$0xf]
    %v396 = vld [vmem:[%s381 + $0x38] sm:$0xf]
    %v397 = vld [vmem:[%s381 + $0x3c] sm:$0xf]
    %v414 = vunpack.c.l.b16 %v382
    %v415 = vunpack.c.l.b16 %v383
    %v416 = vunpack.c.l.b16 %v384
    %v417 = vunpack.c.l.b16 %v385
    %v418 = vunpack.c.l.b16 %v386
    %v419 = vunpack.c.l.b16 %v387
    %v420 = vunpack.c.l.b16 %v388
    %v421 = vunpack.c.l.b16 %v389
    %v422 = vunpack.c.l.b16 %v390
    %v423 = vunpack.c.l.b16 %v391
    %v424 = vunpack.c.l.b16 %v392
    %v425 = vunpack.c.l.b16 %v393
    %v426 = vunpack.c.l.b16 %v394
    %v427 = vunpack.c.l.b16 %v395
    %v428 = vunpack.c.l.b16 %v396
    %v429 = vunpack.c.l.b16 %v397
    %v430 = vpack.c.b16 %v415, %v414
    %v431 = vpack.c.b16 %v417, %v416
    %v432 = vpack.c.b16 %v419, %v418
    %v433 = vpack.c.b16 %v421, %v420
    %v434 = vpack.c.b16 %v423, %v422
    %v435 = vpack.c.b16 %v425, %v424
    %v436 = vpack.c.b16 %v427, %v426
    %v437 = vpack.c.b16 %v429, %v428
    %446 = vmatprep.subr.bf16.mxu0 0
    %447 = vmatpush1.bf16.msra.mxu0 %v430
    %448 = vmatprep.subr.bf16.mxu0 0
    %449 = vmatpush1.bf16.msra.mxu0 %v431
    %450 = vmatprep.subr.bf16.mxu0 0
    %451 = vmatpush1.bf16.msra.mxu0 %v432
    %452 = vmatprep.subr.bf16.mxu0 0
    %453 = vmatpush1.bf16.msra.mxu0 %v433
    %454 = vmatprep.subr.bf16.mxu0 0
    %455 = vmatpush1.bf16.msra.mxu0 %v434
    %456 = vmatprep.subr.bf16.mxu0 0
    %457 = vmatpush1.bf16.msra.mxu0 %v435
    %458 = vmatprep.subr.bf16.mxu0 0
    %459 = vmatpush1.bf16.msra.mxu0 %v436
    %460 = vmatprep.subr.bf16.mxu0 0
    %461 = vmatpush1.bf16.msra.mxu0 %v437
    %462 = vmatprep.subr.bf16.mxu0 0
    %463 = vmatpush1.bf16.msra.mxu0 0
    %464 = vmatprep.subr.bf16.mxu0 0
    %465 = vmatpush1.bf16.msra.mxu0 0
    %466 = vmatprep.subr.bf16.mxu0 0
    %467 = vmatpush1.bf16.msra.mxu0 0
    %468 = vmatprep.subr.bf16.mxu0 0
    %469 = vmatpush1.bf16.msra.mxu0 0
    %470 = vmatprep.subr.bf16.mxu0 0
    %471 = vmatpush1.bf16.msra.mxu0 0
    %472 = vmatprep.subr.bf16.mxu0 0
    %473 = vmatpush1.bf16.msra.mxu0 0
    %474 = vmatprep.subr.bf16.mxu0 0
    %475 = vmatpush1.bf16.msra.mxu0 0
    %476 = vmatprep.subr.bf16.mxu0 0
    %477 = vmatpush1.bf16.msra.mxu0 0
    %478 = vmatprep.mubr.bf16.mxu0 0
    %479 = vmatmul.mubr.bf16.gmra.mrb[0].mxu0 %v379
    %v480 = vpop.f32.mrb[0].mxu0
    %v481 = vadd.f32 0.0, %v480
    %v482 = vpop.f32.mrb[0].mxu0
    %v483 = vpop.f32.mrb[0].mxu0
    %v484 = vpop.f32.mrb[0].mxu0
    %485 = vdwg.mxu0
    %v486 = vpack.c.bf16 %v481, %v481
    %s487 = scalar_lea.vmem %s2, 3
    %v488 = vld [vmem:[%s487] sm:$0x1]
    %v490 = vpack.i.b16 %v488, %v488
    %v492 = vlaneseq
    %v493 = vshrl.u32 %v492, 7
    %v494 = vsub.s32 0, %v493
    %v495 = vrot.slane %v490, %v494
    %v496 = vadd.bf16 %v486, %v495
    %v497 = vmax.bf16 %v496, 0
    %s498 = scalar_lea.vmem [#allocation3], 256
    %v499 = vld [vmem:[%s498] sm:$0xf]
    %v500 = vld [vmem:[%s498 + $0x4] sm:$0xf]
    %v501 = vld [vmem:[%s498 + $0x8] sm:$0xf]
    %v502 = vld [vmem:[%s498 + $0xc] sm:$0xf]
    %v503 = vld [vmem:[%s498 + $0x10] sm:$0xf]
    %v504 = vld [vmem:[%s498 + $0x14] sm:$0xf]
    %v505 = vld [vmem:[%s498 + $0x18] sm:$0xf]
    %v506 = vld [vmem:[%s498 + $0x1c] sm:$0xf]
    %v507 = vld [vmem:[%s498 + $0x20] sm:$0xf]
    %v508 = vld [vmem:[%s498 + $0x24] sm:$0xf]
    %v509 = vld [vmem:[%s498 + $0x28] sm:$0xf]
    %v510 = vld [vmem:[%s498 + $0x2c] sm:$0xf]
    %v511 = vld [vmem:[%s498 + $0x30] sm:$0xf]
    %v512 = vld [vmem:[%s498 + $0x34] sm:$0xf]
    %v513 = vld [vmem:[%s498 + $0x38] sm:$0xf]
    %v514 = vld [vmem:[%s498 + $0x3c] sm:$0xf]
    %v531 = vunpack.c.l.b16 %v499
    %v532 = vunpack.c.l.b16 %v500
    %v533 = vunpack.c.l.b16 %v501
    %v534 = vunpack.c.l.b16 %v502
    %v535 = vunpack.c.l.b16 %v503
    %v536 = vunpack.c.l.b16 %v504
    %v537 = vunpack.c.l.b16 %v505
    %v538 = vunpack.c.l.b16 %v506
    %v539 = vunpack.c.l.b16 %v507
    %v540 = vunpack.c.l.b16 %v508
    %v541 = vunpack.c.l.b16 %v509
    %v542 = vunpack.c.l.b16 %v510
    %v543 = vunpack.c.l.b16 %v511
    %v544 = vunpack.c.l.b16 %v512
    %v545 = vunpack.c.l.b16 %v513
    %v546 = vunpack.c.l.b16 %v514
    %v547 = vpack.c.b16 %v532, %v531
    %v548 = vpack.c.b16 %v534, %v533
    %v549 = vpack.c.b16 %v536, %v535
    %v550 = vpack.c.b16 %v538, %v537
    %v551 = vpack.c.b16 %v540, %v539
    %v552 = vpack.c.b16 %v542, %v541
    %v553 = vpack.c.b16 %v544, %v543
    %v554 = vpack.c.b16 %v546, %v545
    %563 = vmatprep.subr.bf16.mxu0 0
    %564 = vmatpush1.bf16.msra.mxu0 %v547
    %565 = vmatprep.subr.bf16.mxu0 0
    %566 = vmatpush1.bf16.msra.mxu0 %v548
    %567 = vmatprep.subr.bf16.mxu0 0
    %568 = vmatpush1.bf16.msra.mxu0 %v549
    %569 = vmatprep.subr.bf16.mxu0 0
    %570 = vmatpush1.bf16.msra.mxu0 %v550
    %571 = vmatprep.subr.bf16.mxu0 0
    %572 = vmatpush1.bf16.msra.mxu0 %v551
    %573 = vmatprep.subr.bf16.mxu0 0
    %574 = vmatpush1.bf16.msra.mxu0 %v552
    %575 = vmatprep.subr.bf16.mxu0 0
    %576 = vmatpush1.bf16.msra.mxu0 %v553
    %577 = vmatprep.subr.bf16.mxu0 0
    %578 = vmatpush1.bf16.msra.mxu0 %v554
    %579 = vmatprep.subr.bf16.mxu0 0
    %580 = vmatpush1.bf16.msra.mxu0 0
    %581 = vmatprep.subr.bf16.mxu0 0
    %582 = vmatpush1.bf16.msra.mxu0 0
    %583 = vmatprep.subr.bf16.mxu0 0
    %584 = vmatpush1.bf16.msra.mxu0 0
    %585 = vmatprep.subr.bf16.mxu0 0
    %586 = vmatpush1.bf16.msra.mxu0 0
    %587 = vmatprep.subr.bf16.mxu0 0
    %588 = vmatpush1.bf16.msra.mxu0 0
    %589 = vmatprep.subr.bf16.mxu0 0
    %590 = vmatpush1.bf16.msra.mxu0 0
    %591 = vmatprep.subr.bf16.mxu0 0
    %592 = vmatpush1.bf16.msra.mxu0 0
    %593 = vmatprep.subr.bf16.mxu0 0
    %594 = vmatpush1.bf16.msra.mxu0 0
    %595 = vmatprep.mubr.bf16.mxu0 0
    %596 = vmatmul.mubr.bf16.gmra.mrb[0].mxu0 %v497
    %v597 = vpop.f32.mrb[0].mxu0
    %v598 = vadd.f32 0.0, %v597
    %v599 = vpop.f32.mrb[0].mxu0
    %v600 = vpop.f32.mrb[0].mxu0
    %v601 = vpop.f32.mrb[0].mxu0
    %602 = vdwg.mxu0
    %v603 = vpack.c.bf16 %v598, %v598
    %s604 = scalar_lea.vmem %s2, 4
    %v605 = vld [vmem:[%s604] sm:$0x1]
    %v607 = vpack.i.b16 %v605, %v605
    %v609 = vlaneseq
    %v610 = vshrl.u32 %v609, 7
    %v611 = vsub.s32 0, %v610
    %v612 = vrot.slane %v607, %v611
    %v613 = vadd.bf16 %v603, %v612
    %v614 = vmax.bf16 %v613, 0
    %s615 = scalar_lea.vmem [#allocation3], 320
    %v616 = vld [vmem:[%s615] sm:$0xf]
    %v617 = vld [vmem:[%s615 + $0x4] sm:$0xf]
    %v618 = vld [vmem:[%s615 + $0x8] sm:$0xf]
    %v619 = vld [vmem:[%s615 + $0xc] sm:$0xf]
    %v620 = vld [vmem:[%s615 + $0x10] sm:$0xf]
    %v621 = vld [vmem:[%s615 + $0x14] sm:$0xf]
    %v622 = vld [vmem:[%s615 + $0x18] sm:$0xf]
    %v623 = vld [vmem:[%s615 + $0x1c] sm:$0xf]
    %v624 = vld [vmem:[%s615 + $0x20] sm:$0xf]
    %v625 = vld [vmem:[%s615 + $0x24] sm:$0xf]
    %v626 = vld [vmem:[%s615 + $0x28] sm:$0xf]
    %v627 = vld [vmem:[%s615 + $0x2c] sm:$0xf]
    %v628 = vld [vmem:[%s615 + $0x30] sm:$0xf]
    %v629 = vld [vmem:[%s615 + $0x34] sm:$0xf]
    %v630 = vld [vmem:[%s615 + $0x38] sm:$0xf]
    %v631 = vld [vmem:[%s615 + $0x3c] sm:$0xf]
    %v648 = vunpack.c.l.b16 %v616
    %v649 = vunpack.c.l.b16 %v617
    %v650 = vunpack.c.l.b16 %v618
    %v651 = vunpack.c.l.b16 %v619
    %v652 = vunpack.c.l.b16 %v620
    %v653 = vunpack.c.l.b16 %v621
    %v654 = vunpack.c.l.b16 %v622
    %v655 = vunpack.c.l.b16 %v623
    %v656 = vunpack.c.l.b16 %v624
    %v657 = vunpack.c.l.b16 %v625
    %v658 = vunpack.c.l.b16 %v626
    %v659 = vunpack.c.l.b16 %v627
    %v660 = vunpack.c.l.b16 %v628
    %v661 = vunpack.c.l.b16 %v629
    %v662 = vunpack.c.l.b16 %v630
    %v663 = vunpack.c.l.b16 %v631
    %v664 = vpack.c.b16 %v649, %v648
    %v665 = vpack.c.b16 %v651, %v650
    %v666 = vpack.c.b16 %v653, %v652
    %v667 = vpack.c.b16 %v655, %v654
    %v668 = vpack.c.b16 %v657, %v656
    %v669 = vpack.c.b16 %v659, %v658
    %v670 = vpack.c.b16 %v661, %v660
    %v671 = vpack.c.b16 %v663, %v662
    %680 = vmatprep.subr.bf16.mxu0 0
    %681 = vmatpush1.bf16.msra.mxu0 %v664
    %682 = vmatprep.subr.bf16.mxu0 0
    %683 = vmatpush1.bf16.msra.mxu0 %v665
    %684 = vmatprep.subr.bf16.mxu0 0
    %685 = vmatpush1.bf16.msra.mxu0 %v666
    %686 = vmatprep.subr.bf16.mxu0 0
    %687 = vmatpush1.bf16.msra.mxu0 %v667
    %688 = vmatprep.subr.bf16.mxu0 0
    %689 = vmatpush1.bf16.msra.mxu0 %v668
    %690 = vmatprep.subr.bf16.mxu0 0
    %691 = vmatpush1.bf16.msra.mxu0 %v669
    %692 = vmatprep.subr.bf16.mxu0 0
    %693 = vmatpush1.bf16.msra.mxu0 %v670
    %694 = vmatprep.subr.bf16.mxu0 0
    %695 = vmatpush1.bf16.msra.mxu0 %v671
    %696 = vmatprep.subr.bf16.mxu0 0
    %697 = vmatpush1.bf16.msra.mxu0 0
    %698 = vmatprep.subr.bf16.mxu0 0
    %699 = vmatpush1.bf16.msra.mxu0 0
    %700 = vmatprep.subr.bf16.mxu0 0
    %701 = vmatpush1.bf16.msra.mxu0 0
    %702 = vmatprep.subr.bf16.mxu0 0
    %703 = vmatpush1.bf16.msra.mxu0 0
    %704 = vmatprep.subr.bf16.mxu0 0
    %705 = vmatpush1.bf16.msra.mxu0 0
    %706 = vmatprep.subr.bf16.mxu0 0
    %707 = vmatpush1.bf16.msra.mxu0 0
    %708 = vmatprep.subr.bf16.mxu0 0
    %709 = vmatpush1.bf16.msra.mxu0 0
    %710 = vmatprep.subr.bf16.mxu0 0
    %711 = vmatpush1.bf16.msra.mxu0 0
    %712 = vmatprep.mubr.bf16.mxu0 0
    %713 = vmatmul.mubr.bf16.gmra.mrb[0].mxu0 %v614
    %v714 = vpop.f32.mrb[0].mxu0
    %v715 = vadd.f32 0.0, %v714
    %v716 = vpop.f32.mrb[0].mxu0
    %v717 = vpop.f32.mrb[0].mxu0
    %v718 = vpop.f32.mrb[0].mxu0
    %719 = vdwg.mxu0
    %v720 = vpack.c.bf16 %v715, %v715
    %s721 = scalar_lea.vmem %s2, 5
    %v722 = vld [vmem:[%s721] sm:$0x1]
    %v724 = vpack.i.b16 %v722, %v722
    %v726 = vlaneseq
    %v727 = vshrl.u32 %v726, 7
    %v728 = vsub.s32 0, %v727
    %v729 = vrot.slane %v724, %v728
    %v730 = vadd.bf16 %v720, %v729
    %v731 = vmax.bf16 %v730, 0
    %s732 = scalar_lea.vmem [#allocation2], 4
    %733 = vst [vmem:[%s732] sm:$0xf] %v731
    %s734 = scalar_lea.vmem [#allocation3], 384
    %v735 = vld [vmem:[%s734] sm:$0xf]
    %v736 = vld [vmem:[%s734 + $0x4] sm:$0xf]
    %v737 = vld [vmem:[%s734 + $0x8] sm:$0xf]
    %v738 = vld [vmem:[%s734 + $0xc] sm:$0xf]
    %v739 = vld [vmem:[%s734 + $0x10] sm:$0xf]
    %v740 = vld [vmem:[%s734 + $0x14] sm:$0xf]
    %v741 = vld [vmem:[%s734 + $0x18] sm:$0xf]
    %v742 = vld [vmem:[%s734 + $0x1c] sm:$0xf]
    %v743 = vld [vmem:[%s734 + $0x20] sm:$0xf]
    %v744 = vld [vmem:[%s734 + $0x24] sm:$0xf]
    %v745 = vld [vmem:[%s734 + $0x28] sm:$0xf]
    %v746 = vld [vmem:[%s734 + $0x2c] sm:$0xf]
    %v747 = vld [vmem:[%s734 + $0x30] sm:$0xf]
    %v748 = vld [vmem:[%s734 + $0x34] sm:$0xf]
    %v749 = vld [vmem:[%s734 + $0x38] sm:$0xf]
    %v750 = vld [vmem:[%s734 + $0x3c] sm:$0xf]
    %v767 = vunpack.c.l.b16 %v735
    %v768 = vunpack.c.l.b16 %v736
    %v769 = vunpack.c.l.b16 %v737
    %v770 = vunpack.c.l.b16 %v738
    %v771 = vunpack.c.l.b16 %v739
    %v772 = vunpack.c.l.b16 %v740
    %v773 = vunpack.c.l.b16 %v741
    %v774 = vunpack.c.l.b16 %v742
    %v775 = vunpack.c.l.b16 %v743
    %v776 = vunpack.c.l.b16 %v744
    %v777 = vunpack.c.l.b16 %v745
    %v778 = vunpack.c.l.b16 %v746
    %v779 = vunpack.c.l.b16 %v747
    %v780 = vunpack.c.l.b16 %v748
    %v781 = vunpack.c.l.b16 %v749
    %v782 = vunpack.c.l.b16 %v750
    %v783 = vpack.c.b16 %v768, %v767
    %v784 = vpack.c.b16 %v770, %v769
    %v785 = vpack.c.b16 %v772, %v771
    %v786 = vpack.c.b16 %v774, %v773
    %v787 = vpack.c.b16 %v776, %v775
    %v788 = vpack.c.b16 %v778, %v777
    %v789 = vpack.c.b16 %v780, %v779
    %v790 = vpack.c.b16 %v782, %v781
    %799 = vmatprep.subr.bf16.mxu0 0
    %800 = vmatpush1.bf16.msra.mxu0 %v783
    %801 = vmatprep.subr.bf16.mxu0 0
    %802 = vmatpush1.bf16.msra.mxu0 %v784
    %803 = vmatprep.subr.bf16.mxu0 0
    %804 = vmatpush1.bf16.msra.mxu0 %v785
    %805 = vmatprep.subr.bf16.mxu0 0
    %806 = vmatpush1.bf16.msra.mxu0 %v786
    %807 = vmatprep.subr.bf16.mxu0 0
    %808 = vmatpush1.bf16.msra.mxu0 %v787
    %809 = vmatprep.subr.bf16.mxu0 0
    %810 = vmatpush1.bf16.msra.mxu0 %v788
    %811 = vmatprep.subr.bf16.mxu0 0
    %812 = vmatpush1.bf16.msra.mxu0 %v789
    %813 = vmatprep.subr.bf16.mxu0 0
    %814 = vmatpush1.bf16.msra.mxu0 %v790
    %815 = vmatprep.subr.bf16.mxu0 0
    %816 = vmatpush1.bf16.msra.mxu0 0
    %817 = vmatprep.subr.bf16.mxu0 0
    %818 = vmatpush1.bf16.msra.mxu0 0
    %819 = vmatprep.subr.bf16.mxu0 0
    %820 = vmatpush1.bf16.msra.mxu0 0
    %821 = vmatprep.subr.bf16.mxu0 0
    %822 = vmatpush1.bf16.msra.mxu0 0
    %823 = vmatprep.subr.bf16.mxu0 0
    %824 = vmatpush1.bf16.msra.mxu0 0
    %825 = vmatprep.subr.bf16.mxu0 0
    %826 = vmatpush1.bf16.msra.mxu0 0
    %827 = vmatprep.subr.bf16.mxu0 0
    %828 = vmatpush1.bf16.msra.mxu0 0
    %829 = vmatprep.subr.bf16.mxu0 0
    %830 = vmatpush1.bf16.msra.mxu0 0
    %831 = vmatprep.mubr.bf16.mxu0 0
    %832 = vmatmul.mubr.bf16.gmra.mrb[0].mxu0 %v731
    %v833 = vpop.f32.mrb[0].mxu0
    %v834 = vadd.f32 0.0, %v833
    %v835 = vpop.f32.mrb[0].mxu0
    %v836 = vpop.f32.mrb[0].mxu0
    %v837 = vpop.f32.mrb[0].mxu0
    %838 = vdwg.mxu0
    %v839 = vpack.c.bf16 %v834, %v834
    %s840 = scalar_lea.vmem %s2, 6
    %v841 = vld [vmem:[%s840] sm:$0x1]
    %v843 = vpack.i.b16 %v841, %v841
    %v845 = vlaneseq
    %v846 = vshrl.u32 %v845, 7
    %v847 = vsub.s32 0, %v846
    %v848 = vrot.slane %v843, %v847
    %v849 = vadd.bf16 %v839, %v848
    %v850 = vmax.bf16 %v849, 0
    %s851 = scalar_lea.vmem [#allocation3], 448
    %v852 = vld [vmem:[%s851] sm:$0xf]
    %v853 = vld [vmem:[%s851 + $0x4] sm:$0xf]
    %v854 = vld [vmem:[%s851 + $0x8] sm:$0xf]
    %v855 = vld [vmem:[%s851 + $0xc] sm:$0xf]
    %v856 = vld [vmem:[%s851 + $0x10] sm:$0xf]
    %v857 = vld [vmem:[%s851 + $0x14] sm:$0xf]
    %v858 = vld [vmem:[%s851 + $0x18] sm:$0xf]
    %v859 = vld [vmem:[%s851 + $0x1c] sm:$0xf]
    %v860 = vld [vmem:[%s851 + $0x20] sm:$0xf]
    %v861 = vld [vmem:[%s851 + $0x24] sm:$0xf]
    %v862 = vld [vmem:[%s851 + $0x28] sm:$0xf]
    %v863 = vld [vmem:[%s851 + $0x2c] sm:$0xf]
    %v864 = vld [vmem:[%s851 + $0x30] sm:$0xf]
    %v865 = vld [vmem:[%s851 + $0x34] sm:$0xf]
    %v866 = vld [vmem:[%s851 + $0x38] sm:$0xf]
    %v867 = vld [vmem:[%s851 + $0x3c] sm:$0xf]
    %v884 = vunpack.c.l.b16 %v852
    %v885 = vunpack.c.l.b16 %v853
    %v886 = vunpack.c.l.b16 %v854
    %v887 = vunpack.c.l.b16 %v855
    %v888 = vunpack.c.l.b16 %v856
    %v889 = vunpack.c.l.b16 %v857
    %v890 = vunpack.c.l.b16 %v858
    %v891 = vunpack.c.l.b16 %v859
    %v892 = vunpack.c.l.b16 %v860
    %v893 = vunpack.c.l.b16 %v861
    %v894 = vunpack.c.l.b16 %v862
    %v895 = vunpack.c.l.b16 %v863
    %v896 = vunpack.c.l.b16 %v864
    %v897 = vunpack.c.l.b16 %v865
    %v898 = vunpack.c.l.b16 %v866
    %v899 = vunpack.c.l.b16 %v867
    %v900 = vpack.c.b16 %v885, %v884
    %v901 = vpack.c.b16 %v887, %v886
    %v902 = vpack.c.b16 %v889, %v888
    %v903 = vpack.c.b16 %v891, %v890
    %v904 = vpack.c.b16 %v893, %v892
    %v905 = vpack.c.b16 %v895, %v894
    %v906 = vpack.c.b16 %v897, %v896
    %v907 = vpack.c.b16 %v899, %v898
    %916 = vmatprep.subr.bf16.mxu0 0
    %917 = vmatpush1.bf16.msra.mxu0 %v900
    %918 = vmatprep.subr.bf16.mxu0 0
    %919 = vmatpush1.bf16.msra.mxu0 %v901
    %920 = vmatprep.subr.bf16.mxu0 0
    %921 = vmatpush1.bf16.msra.mxu0 %v902
    %922 = vmatprep.subr.bf16.mxu0 0
    %923 = vmatpush1.bf16.msra.mxu0 %v903
    %924 = vmatprep.subr.bf16.mxu0 0
    %925 = vmatpush1.bf16.msra.mxu0 %v904
    %926 = vmatprep.subr.bf16.mxu0 0
    %927 = vmatpush1.bf16.msra.mxu0 %v905
    %928 = vmatprep.subr.bf16.mxu0 0
    %929 = vmatpush1.bf16.msra.mxu0 %v906
    %930 = vmatprep.subr.bf16.mxu0 0
    %931 = vmatpush1.bf16.msra.mxu0 %v907
    %932 = vmatprep.subr.bf16.mxu0 0
    %933 = vmatpush1.bf16.msra.mxu0 0
    %934 = vmatprep.subr.bf16.mxu0 0
    %935 = vmatpush1.bf16.msra.mxu0 0
    %936 = vmatprep.subr.bf16.mxu0 0
    %937 = vmatpush1.bf16.msra.mxu0 0
    %938 = vmatprep.subr.bf16.mxu0 0
    %939 = vmatpush1.bf16.msra.mxu0 0
    %940 = vmatprep.subr.bf16.mxu0 0
    %941 = vmatpush1.bf16.msra.mxu0 0
    %942 = vmatprep.subr.bf16.mxu0 0
    %943 = vmatpush1.bf16.msra.mxu0 0
    %944 = vmatprep.subr.bf16.mxu0 0
    %945 = vmatpush1.bf16.msra.mxu0 0
    %946 = vmatprep.subr.bf16.mxu0 0
    %947 = vmatpush1.bf16.msra.mxu0 0
    %948 = vmatprep.mubr.bf16.mxu0 0
    %949 = vmatmul.mubr.bf16.gmra.mrb[0].mxu0 %v850
    %v950 = vpop.f32.mrb[0].mxu0
    %v951 = vadd.f32 0.0, %v950
    %v952 = vpop.f32.mrb[0].mxu0
    %v953 = vpop.f32.mrb[0].mxu0
    %v954 = vpop.f32.mrb[0].mxu0
    %955 = vdwg.mxu0
    %v956 = vpack.c.bf16 %v951, %v951
    %s957 = scalar_lea.vmem %s2, 7
    %v958 = vld [vmem:[%s957] sm:$0x1]
    %v960 = vpack.i.b16 %v958, %v958
    %v962 = vlaneseq
    %v963 = vshrl.u32 %v962, 7
    %v964 = vsub.s32 0, %v963
    %v965 = vrot.slane %v960, %v964
    %v966 = vadd.bf16 %v956, %v965
    %v967 = vmax.bf16 %v966, 0
    %s968 = scalar_lea.vmem [#allocation3], 512
    %v969 = vld [vmem:[%s968] sm:$0xf]
    %v970 = vld [vmem:[%s968 + $0x4] sm:$0xf]
    %v971 = vld [vmem:[%s968 + $0x8] sm:$0xf]
    %v972 = vld [vmem:[%s968 + $0xc] sm:$0xf]
    %v973 = vld [vmem:[%s968 + $0x10] sm:$0xf]
    %v974 = vld [vmem:[%s968 + $0x14] sm:$0xf]
    %v975 = vld [vmem:[%s968 + $0x18] sm:$0xf]
    %v976 = vld [vmem:[%s968 + $0x1c] sm:$0xf]
    %v977 = vld [vmem:[%s968 + $0x20] sm:$0xf]
    %v978 = vld [vmem:[%s968 + $0x24] sm:$0xf]
    %v979 = vld [vmem:[%s968 + $0x28] sm:$0xf]
    %v980 = vld [vmem:[%s968 + $0x2c] sm:$0xf]
    %v981 = vld [vmem:[%s968 + $0x30] sm:$0xf]
    %v982 = vld [vmem:[%s968 + $0x34] sm:$0xf]
    %v983 = vld [vmem:[%s968 + $0x38] sm:$0xf]
    %v984 = vld [vmem:[%s968 + $0x3c] sm:$0xf]
    %v1001 = vunpack.c.l.b16 %v969
    %v1002 = vunpack.c.l.b16 %v970
    %v1003 = vunpack.c.l.b16 %v971
    %v1004 = vunpack.c.l.b16 %v972
    %v1005 = vunpack.c.l.b16 %v973
    %v1006 = vunpack.c.l.b16 %v974
    %v1007 = vunpack.c.l.b16 %v975
    %v1008 = vunpack.c.l.b16 %v976
    %v1009 = vunpack.c.l.b16 %v977
    %v1010 = vunpack.c.l.b16 %v978
    %v1011 = vunpack.c.l.b16 %v979
    %v1012 = vunpack.c.l.b16 %v980
    %v1013 = vunpack.c.l.b16 %v981
    %v1014 = vunpack.c.l.b16 %v982
    %v1015 = vunpack.c.l.b16 %v983
    %v1016 = vunpack.c.l.b16 %v984
    %v1017 = vpack.c.b16 %v1002, %v1001
    %v1018 = vpack.c.b16 %v1004, %v1003
    %v1019 = vpack.c.b16 %v1006, %v1005
    %v1020 = vpack.c.b16 %v1008, %v1007
    %v1021 = vpack.c.b16 %v1010, %v1009
    %v1022 = vpack.c.b16 %v1012, %v1011
    %v1023 = vpack.c.b16 %v1014, %v1013
    %v1024 = vpack.c.b16 %v1016, %v1015
    %1033 = vmatprep.subr.bf16.mxu0 0
    %1034 = vmatpush1.bf16.msra.mxu0 %v1017
    %1035 = vmatprep.subr.bf16.mxu0 0
    %1036 = vmatpush1.bf16.msra.mxu0 %v1018
    %1037 = vmatprep.subr.bf16.mxu0 0
    %1038 = vmatpush1.bf16.msra.mxu0 %v1019
    %1039 = vmatprep.subr.bf16.mxu0 0
    %1040 = vmatpush1.bf16.msra.mxu0 %v1020
    %1041 = vmatprep.subr.bf16.mxu0 0
    %1042 = vmatpush1.bf16.msra.mxu0 %v1021
    %1043 = vmatprep.subr.bf16.mxu0 0
    %1044 = vmatpush1.bf16.msra.mxu0 %v1022
    %1045 = vmatprep.subr.bf16.mxu0 0
    %1046 = vmatpush1.bf16.msra.mxu0 %v1023
    %1047 = vmatprep.subr.bf16.mxu0 0
    %1048 = vmatpush1.bf16.msra.mxu0 %v1024
    %1049 = vmatprep.subr.bf16.mxu0 0
    %1050 = vmatpush1.bf16.msra.mxu0 0
    %1051 = vmatprep.subr.bf16.mxu0 0
    %1052 = vmatpush1.bf16.msra.mxu0 0
    %1053 = vmatprep.subr.bf16.mxu0 0
    %1054 = vmatpush1.bf16.msra.mxu0 0
    %1055 = vmatprep.subr.bf16.mxu0 0
    %1056 = vmatpush1.bf16.msra.mxu0 0
    %1057 = vmatprep.subr.bf16.mxu0 0
    %1058 = vmatpush1.bf16.msra.mxu0 0
    %1059 = vmatprep.subr.bf16.mxu0 0
    %1060 = vmatpush1.bf16.msra.mxu0 0
    %1061 = vmatprep.subr.bf16.mxu0 0
    %1062 = vmatpush1.bf16.msra.mxu0 0
    %1063 = vmatprep.subr.bf16.mxu0 0
    %1064 = vmatpush1.bf16.msra.mxu0 0
    %1065 = vmatprep.mubr.bf16.mxu0 0
    %1066 = vmatmul.mubr.bf16.gmra.mrb[0].mxu0 %v967
    %v1067 = vpop.f32.mrb[0].mxu0
    %v1068 = vadd.f32 0.0, %v1067
    %v1069 = vpop.f32.mrb[0].mxu0
    %v1070 = vpop.f32.mrb[0].mxu0
    %v1071 = vpop.f32.mrb[0].mxu0
    %1072 = vdwg.mxu0
    %v1073 = vpack.c.bf16 %v1068, %v1068
    %s1074 = scalar_lea.vmem %s2, 8
    %v1075 = vld [vmem:[%s1074] sm:$0x1]
    %v1077 = vpack.i.b16 %v1075, %v1075
    %v1079 = vlaneseq
    %v1080 = vshrl.u32 %v1079, 7
    %v1081 = vsub.s32 0, %v1080
    %v1082 = vrot.slane %v1077, %v1081
    %v1083 = vadd.bf16 %v1073, %v1082
    %v1084 = vmax.bf16 %v1083, 0
    %s1085 = scalar_lea.vmem [#allocation2], 8
    %1086 = vst [vmem:[%s1085] sm:$0xf] %v1084
    %s1087 = scalar_lea.vmem [#allocation3], 576
    %v1088 = vld [vmem:[%s1087] sm:$0xf]
    %v1089 = vld [vmem:[%s1087 + $0x4] sm:$0xf]
    %v1090 = vld [vmem:[%s1087 + $0x8] sm:$0xf]
    %v1091 = vld [vmem:[%s1087 + $0xc] sm:$0xf]
    %v1092 = vld [vmem:[%s1087 + $0x10] sm:$0xf]
    %v1093 = vld [vmem:[%s1087 + $0x14] sm:$0xf]
    %v1094 = vld [vmem:[%s1087 + $0x18] sm:$0xf]
    %v1095 = vld [vmem:[%s1087 + $0x1c] sm:$0xf]
    %v1096 = vld [vmem:[%s1087 + $0x20] sm:$0xf]
    %v1097 = vld [vmem:[%s1087 + $0x24] sm:$0xf]
    %v1098 = vld [vmem:[%s1087 + $0x28] sm:$0xf]
    %v1099 = vld [vmem:[%s1087 + $0x2c] sm:$0xf]
    %v1100 = vld [vmem:[%s1087 + $0x30] sm:$0xf]
    %v1101 = vld [vmem:[%s1087 + $0x34] sm:$0xf]
    %v1102 = vld [vmem:[%s1087 + $0x38] sm:$0xf]
    %v1103 = vld [vmem:[%s1087 + $0x3c] sm:$0xf]
    %v1120 = vunpack.c.l.b16 %v1088
    %v1121 = vunpack.c.l.b16 %v1089
    %v1122 = vunpack.c.l.b16 %v1090
    %v1123 = vunpack.c.l.b16 %v1091
    %v1124 = vunpack.c.l.b16 %v1092
    %v1125 = vunpack.c.l.b16 %v1093
    %v1126 = vunpack.c.l.b16 %v1094
    %v1127 = vunpack.c.l.b16 %v1095
    %v1128 = vunpack.c.l.b16 %v1096
    %v1129 = vunpack.c.l.b16 %v1097
    %v1130 = vunpack.c.l.b16 %v1098
    %v1131 = vunpack.c.l.b16 %v1099
    %v1132 = vunpack.c.l.b16 %v1100
    %v1133 = vunpack.c.l.b16 %v1101
    %v1134 = vunpack.c.l.b16 %v1102
    %v1135 = vunpack.c.l.b16 %v1103
    %v1136 = vpack.c.b16 %v1121, %v1120
    %v1137 = vpack.c.b16 %v1123, %v1122
    %v1138 = vpack.c.b16 %v1125, %v1124
    %v1139 = vpack.c.b16 %v1127, %v1126
    %v1140 = vpack.c.b16 %v1129, %v1128
    %v1141 = vpack.c.b16 %v1131, %v1130
    %v1142 = vpack.c.b16 %v1133, %v1132
    %v1143 = vpack.c.b16 %v1135, %v1134
    %1152 = vmatprep.subr.bf16.mxu0 0
    %1153 = vmatpush1.bf16.msra.mxu0 %v1136
    %1154 = vmatprep.subr.bf16.mxu0 0
    %1155 = vmatpush1.bf16.msra.mxu0 %v1137
    %1156 = vmatprep.subr.bf16.mxu0 0
    %1157 = vmatpush1.bf16.msra.mxu0 %v1138
    %1158 = vmatprep.subr.bf16.mxu0 0
    %1159 = vmatpush1.bf16.msra.mxu0 %v1139
    %1160 = vmatprep.subr.bf16.mxu0 0
    %1161 = vmatpush1.bf16.msra.mxu0 %v1140
    %1162 = vmatprep.subr.bf16.mxu0 0
    %1163 = vmatpush1.bf16.msra.mxu0 %v1141
    %1164 = vmatprep.subr.bf16.mxu0 0
    %1165 = vmatpush1.bf16.msra.mxu0 %v1142
    %1166 = vmatprep.subr.bf16.mxu0 0
    %1167 = vmatpush1.bf16.msra.mxu0 %v1143
    %1168 = vmatprep.subr.bf16.mxu0 0
    %1169 = vmatpush1.bf16.msra.mxu0 0
    %1170 = vmatprep.subr.bf16.mxu0 0
    %1171 = vmatpush1.bf16.msra.mxu0 0
    %1172 = vmatprep.subr.bf16.mxu0 0
    %1173 = vmatpush1.bf16.msra.mxu0 0
    %1174 = vmatprep.subr.bf16.mxu0 0
    %1175 = vmatpush1.bf16.msra.mxu0 0
    %1176 = vmatprep.subr.bf16.mxu0 0
    %1177 = vmatpush1.bf16.msra.mxu0 0
    %1178 = vmatprep.subr.bf16.mxu0 0
    %1179 = vmatpush1.bf16.msra.mxu0 0
    %1180 = vmatprep.subr.bf16.mxu0 0
    %1181 = vmatpush1.bf16.msra.mxu0 0
    %1182 = vmatprep.subr.bf16.mxu0 0
    %1183 = vmatpush1.bf16.msra.mxu0 0
    %1184 = vmatprep.mubr.bf16.mxu0 0
    %1185 = vmatmul.mubr.bf16.gmra.mrb[0].mxu0 %v1084
    %v1186 = vpop.f32.mrb[0].mxu0
    %v1187 = vadd.f32 0.0, %v1186
    %v1188 = vpop.f32.mrb[0].mxu0
    %v1189 = vpop.f32.mrb[0].mxu0
    %v1190 = vpop.f32.mrb[0].mxu0
    %1191 = vdwg.mxu0
    %v1192 = vpack.c.bf16 %v1187, %v1187
    %s1193 = scalar_lea.vmem %s2, 9
    %v1194 = vld [vmem:[%s1193] sm:$0x1]
    %v1196 = vpack.i.b16 %v1194, %v1194
    %v1198 = vlaneseq
    %v1199 = vshrl.u32 %v1198, 7
    %v1200 = vsub.s32 0, %v1199
    %v1201 = vrot.slane %v1196, %v1200
    %v1202 = vadd.bf16 %v1192, %v1201
    %v1203 = vmax.bf16 %v1202, 0
    %s1204 = scalar_lea.vmem [#allocation3], 640
    %v1205 = vld [vmem:[%s1204] sm:$0xf]
    %v1206 = vld [vmem:[%s1204 + $0x4] sm:$0xf]
    %v1207 = vld [vmem:[%s1204 + $0x8] sm:$0xf]
    %v1208 = vld [vmem:[%s1204 + $0xc] sm:$0xf]
    %v1209 = vld [vmem:[%s1204 + $0x10] sm:$0xf]
    %v1210 = vld [vmem:[%s1204 + $0x14] sm:$0xf]
    %v1211 = vld [vmem:[%s1204 + $0x18] sm:$0xf]
    %v1212 = vld [vmem:[%s1204 + $0x1c] sm:$0xf]
    %v1213 = vld [vmem:[%s1204 + $0x20] sm:$0xf]
    %v1214 = vld [vmem:[%s1204 + $0x24] sm:$0xf]
    %v1215 = vld [vmem:[%s1204 + $0x28] sm:$0xf]
    %v1216 = vld [vmem:[%s1204 + $0x2c] sm:$0xf]
    %v1217 = vld [vmem:[%s1204 + $0x30] sm:$0xf]
    %v1218 = vld [vmem:[%s1204 + $0x34] sm:$0xf]
    %v1219 = vld [vmem:[%s1204 + $0x38] sm:$0xf]
    %v1220 = vld [vmem:[%s1204 + $0x3c] sm:$0xf]
    %v1237 = vunpack.c.l.b16 %v1205
    %v1238 = vunpack.c.l.b16 %v1206
    %v1239 = vunpack.c.l.b16 %v1207
    %v1240 = vunpack.c.l.b16 %v1208
    %v1241 = vunpack.c.l.b16 %v1209
    %v1242 = vunpack.c.l.b16 %v1210
    %v1243 = vunpack.c.l.b16 %v1211
    %v1244 = vunpack.c.l.b16 %v1212
    %v1245 = vunpack.c.l.b16 %v1213
    %v1246 = vunpack.c.l.b16 %v1214
    %v1247 = vunpack.c.l.b16 %v1215
    %v1248 = vunpack.c.l.b16 %v1216
    %v1249 = vunpack.c.l.b16 %v1217
    %v1250 = vunpack.c.l.b16 %v1218
    %v1251 = vunpack.c.l.b16 %v1219
    %v1252 = vunpack.c.l.b16 %v1220
    %v1253 = vpack.c.b16 %v1238, %v1237
    %v1254 = vpack.c.b16 %v1240, %v1239
    %v1255 = vpack.c.b16 %v1242, %v1241
    %v1256 = vpack.c.b16 %v1244, %v1243
    %v1257 = vpack.c.b16 %v1246, %v1245
    %v1258 = vpack.c.b16 %v1248, %v1247
    %v1259 = vpack.c.b16 %v1250, %v1249
    %v1260 = vpack.c.b16 %v1252, %v1251
    %1269 = vmatprep.subr.bf16.mxu0 0
    %1270 = vmatpush1.bf16.msra.mxu0 %v1253
    %1271 = vmatprep.subr.bf16.mxu0 0
    %1272 = vmatpush1.bf16.msra.mxu0 %v1254
    %1273 = vmatprep.subr.bf16.mxu0 0
    %1274 = vmatpush1.bf16.msra.mxu0 %v1255
    %1275 = vmatprep.subr.bf16.mxu0 0
    %1276 = vmatpush1.bf16.msra.mxu0 %v1256
    %1277 = vmatprep.subr.bf16.mxu0 0
    %1278 = vmatpush1.bf16.msra.mxu0 %v1257
    %1279 = vmatprep.subr.bf16.mxu0 0
    %1280 = vmatpush1.bf16.msra.mxu0 %v1258
    %1281 = vmatprep.subr.bf16.mxu0 0
    %1282 = vmatpush1.bf16.msra.mxu0 %v1259
    %1283 = vmatprep.subr.bf16.mxu0 0
    %1284 = vmatpush1.bf16.msra.mxu0 %v1260
    %1285 = vmatprep.subr.bf16.mxu0 0
    %1286 = vmatpush1.bf16.msra.mxu0 0
    %1287 = vmatprep.subr.bf16.mxu0 0
    %1288 = vmatpush1.bf16.msra.mxu0 0
    %1289 = vmatprep.subr.bf16.mxu0 0
    %1290 = vmatpush1.bf16.msra.mxu0 0
    %1291 = vmatprep.subr.bf16.mxu0 0
    %1292 = vmatpush1.bf16.msra.mxu0 0
    %1293 = vmatprep.subr.bf16.mxu0 0
    %1294 = vmatpush1.bf16.msra.mxu0 0
    %1295 = vmatprep.subr.bf16.mxu0 0
    %1296 = vmatpush1.bf16.msra.mxu0 0
    %1297 = vmatprep.subr.bf16.mxu0 0
    %1298 = vmatpush1.bf16.msra.mxu0 0
    %1299 = vmatprep.subr.bf16.mxu0 0
    %1300 = vmatpush1.bf16.msra.mxu0 0
    %1301 = vmatprep.mubr.bf16.mxu0 0
    %1302 = vmatmul.mubr.bf16.gmra.mrb[0].mxu0 %v1203
    %v1303 = vpop.f32.mrb[0].mxu0
    %v1304 = vadd.f32 0.0, %v1303
    %v1305 = vpop.f32.mrb[0].mxu0
    %v1306 = vpop.f32.mrb[0].mxu0
    %v1307 = vpop.f32.mrb[0].mxu0
    %1308 = vdwg.mxu0
    %v1309 = vpack.c.bf16 %v1304, %v1304
    %s1310 = scalar_lea.vmem %s2, 10
    %v1311 = vld [vmem:[%s1310] sm:$0x1]
    %v1313 = vpack.i.b16 %v1311, %v1311
    %v1315 = vlaneseq
    %v1316 = vshrl.u32 %v1315, 7
    %v1317 = vsub.s32 0, %v1316
    %v1318 = vrot.slane %v1313, %v1317
    %v1319 = vadd.bf16 %v1309, %v1318
    %v1320 = vmax.bf16 %v1319, 0
    %s1321 = scalar_lea.vmem [#allocation3], 704
    %v1322 = vld [vmem:[%s1321] sm:$0xf]
    %v1323 = vld [vmem:[%s1321 + $0x4] sm:$0xf]
    %v1324 = vld [vmem:[%s1321 + $0x8] sm:$0xf]
    %v1325 = vld [vmem:[%s1321 + $0xc] sm:$0xf]
    %v1326 = vld [vmem:[%s1321 + $0x10] sm:$0xf]
    %v1327 = vld [vmem:[%s1321 + $0x14] sm:$0xf]
    %v1328 = vld [vmem:[%s1321 + $0x18] sm:$0xf]
    %v1329 = vld [vmem:[%s1321 + $0x1c] sm:$0xf]
    %v1330 = vld [vmem:[%s1321 + $0x20] sm:$0xf]
    %v1331 = vld [vmem:[%s1321 + $0x24] sm:$0xf]
    %v1332 = vld [vmem:[%s1321 + $0x28] sm:$0xf]
    %v1333 = vld [vmem:[%s1321 + $0x2c] sm:$0xf]
    %v1334 = vld [vmem:[%s1321 + $0x30] sm:$0xf]
    %v1335 = vld [vmem:[%s1321 + $0x34] sm:$0xf]
    %v1336 = vld [vmem:[%s1321 + $0x38] sm:$0xf]
    %v1337 = vld [vmem:[%s1321 + $0x3c] sm:$0xf]
    %v1354 = vunpack.c.l.b16 %v1322
    %v1355 = vunpack.c.l.b16 %v1323
    %v1356 = vunpack.c.l.b16 %v1324
    %v1357 = vunpack.c.l.b16 %v1325
    %v1358 = vunpack.c.l.b16 %v1326
    %v1359 = vunpack.c.l.b16 %v1327
    %v1360 = vunpack.c.l.b16 %v1328
    %v1361 = vunpack.c.l.b16 %v1329
    %v1362 = vunpack.c.l.b16 %v1330
    %v1363 = vunpack.c.l.b16 %v1331
    %v1364 = vunpack.c.l.b16 %v1332
    %v1365 = vunpack.c.l.b16 %v1333
    %v1366 = vunpack.c.l.b16 %v1334
    %v1367 = vunpack.c.l.b16 %v1335
    %v1368 = vunpack.c.l.b16 %v1336
    %v1369 = vunpack.c.l.b16 %v1337
    %v1370 = vpack.c.b16 %v1355, %v1354
    %v1371 = vpack.c.b16 %v1357, %v1356
    %v1372 = vpack.c.b16 %v1359, %v1358
    %v1373 = vpack.c.b16 %v1361, %v1360
    %v1374 = vpack.c.b16 %v1363, %v1362
    %v1375 = vpack.c.b16 %v1365, %v1364
    %v1376 = vpack.c.b16 %v1367, %v1366
    %v1377 = vpack.c.b16 %v1369, %v1368
    %1386 = vmatprep.subr.bf16.mxu0 0
    %1387 = vmatpush1.bf16.msra.mxu0 %v1370
    %1388 = vmatprep.subr.bf16.mxu0 0
    %1389 = vmatpush1.bf16.msra.mxu0 %v1371
    %1390 = vmatprep.subr.bf16.mxu0 0
    %1391 = vmatpush1.bf16.msra.mxu0 %v1372
    %1392 = vmatprep.subr.bf16.mxu0 0
    %1393 = vmatpush1.bf16.msra.mxu0 %v1373
    %1394 = vmatprep.subr.bf16.mxu0 0
    %1395 = vmatpush1.bf16.msra.mxu0 %v1374
    %1396 = vmatprep.subr.bf16.mxu0 0
    %1397 = vmatpush1.bf16.msra.mxu0 %v1375
    %1398 = vmatprep.subr.bf16.mxu0 0
    %1399 = vmatpush1.bf16.msra.mxu0 %v1376
    %1400 = vmatprep.subr.bf16.mxu0 0
    %1401 = vmatpush1.bf16.msra.mxu0 %v1377
    %1402 = vmatprep.subr.bf16.mxu0 0
    %1403 = vmatpush1.bf16.msra.mxu0 0
    %1404 = vmatprep.subr.bf16.mxu0 0
    %1405 = vmatpush1.bf16.msra.mxu0 0
    %1406 = vmatprep.subr.bf16.mxu0 0
    %1407 = vmatpush1.bf16.msra.mxu0 0
    %1408 = vmatprep.subr.bf16.mxu0 0
    %1409 = vmatpush1.bf16.msra.mxu0 0
    %1410 = vmatprep.subr.bf16.mxu0 0
    %1411 = vmatpush1.bf16.msra.mxu0 0
    %1412 = vmatprep.subr.bf16.mxu0 0
    %1413 = vmatpush1.bf16.msra.mxu0 0
    %1414 = vmatprep.subr.bf16.mxu0 0
    %1415 = vmatpush1.bf16.msra.mxu0 0
    %1416 = vmatprep.subr.bf16.mxu0 0
    %1417 = vmatpush1.bf16.msra.mxu0 0
    %1418 = vmatprep.mubr.bf16.mxu0 0
    %1419 = vmatmul.mubr.bf16.gmra.mrb[0].mxu0 %v1320
    %v1420 = vpop.f32.mrb[0].mxu0
    %v1421 = vadd.f32 0.0, %v1420
    %v1422 = vpop.f32.mrb[0].mxu0
    %v1423 = vpop.f32.mrb[0].mxu0
    %v1424 = vpop.f32.mrb[0].mxu0
    %1425 = vdwg.mxu0
    %v1426 = vpack.c.bf16 %v1421, %v1421
    %s1427 = scalar_lea.vmem %s2, 11
    %v1428 = vld [vmem:[%s1427] sm:$0x1]
    %v1430 = vpack.i.b16 %v1428, %v1428
    %v1432 = vlaneseq
    %v1433 = vshrl.u32 %v1432, 7
    %v1434 = vsub.s32 0, %v1433
    %v1435 = vrot.slane %v1430, %v1434
    %v1436 = vadd.bf16 %v1426, %v1435
    %v1437 = vmax.bf16 %v1436, 0
    %v1438 = vld [vmem:[%s1085] sm:$0xf]
    %v1439 = vadd.bf16 %v1437, %v1438
    %s1440 = scalar_lea.vmem [#allocation3], 768
    %v1441 = vld [vmem:[%s1440] sm:$0xf]
    %v1442 = vld [vmem:[%s1440 + $0x4] sm:$0xf]
    %v1443 = vld [vmem:[%s1440 + $0x8] sm:$0xf]
    %v1444 = vld [vmem:[%s1440 + $0xc] sm:$0xf]
    %v1445 = vld [vmem:[%s1440 + $0x10] sm:$0xf]
    %v1446 = vld [vmem:[%s1440 + $0x14] sm:$0xf]
    %v1447 = vld [vmem:[%s1440 + $0x18] sm:$0xf]
    %v1448 = vld [vmem:[%s1440 + $0x1c] sm:$0xf]
    %v1449 = vld [vmem:[%s1440 + $0x20] sm:$0xf]
    %v1450 = vld [vmem:[%s1440 + $0x24] sm:$0xf]
    %v1451 = vld [vmem:[%s1440 + $0x28] sm:$0xf]
    %v1452 = vld [vmem:[%s1440 + $0x2c] sm:$0xf]
    %v1453 = vld [vmem:[%s1440 + $0x30] sm:$0xf]
    %v1454 = vld [vmem:[%s1440 + $0x34] sm:$0xf]
    %v1455 = vld [vmem:[%s1440 + $0x38] sm:$0xf]
    %v1456 = vld [vmem:[%s1440 + $0x3c] sm:$0xf]
    %v1473 = vunpack.c.l.b16 %v1441
    %v1474 = vunpack.c.l.b16 %v1442
    %v1475 = vunpack.c.l.b16 %v1443
    %v1476 = vunpack.c.l.b16 %v1444
    %v1477 = vunpack.c.l.b16 %v1445
    %v1478 = vunpack.c.l.b16 %v1446
    %v1479 = vunpack.c.l.b16 %v1447
    %v1480 = vunpack.c.l.b16 %v1448
    %v1481 = vunpack.c.l.b16 %v1449
    %v1482 = vunpack.c.l.b16 %v1450
    %v1483 = vunpack.c.l.b16 %v1451
    %v1484 = vunpack.c.l.b16 %v1452
    %v1485 = vunpack.c.l.b16 %v1453
    %v1486 = vunpack.c.l.b16 %v1454
    %v1487 = vunpack.c.l.b16 %v1455
    %v1488 = vunpack.c.l.b16 %v1456
    %v1489 = vpack.c.b16 %v1474, %v1473
    %v1490 = vpack.c.b16 %v1476, %v1475
    %v1491 = vpack.c.b16 %v1478, %v1477
    %v1492 = vpack.c.b16 %v1480, %v1479
    %v1493 = vpack.c.b16 %v1482, %v1481
    %v1494 = vpack.c.b16 %v1484, %v1483
    %v1495 = vpack.c.b16 %v1486, %v1485
    %v1496 = vpack.c.b16 %v1488, %v1487
    %1505 = vmatprep.subr.bf16.mxu0 0
    %1506 = vmatpush1.bf16.msra.mxu0 %v1489
    %1507 = vmatprep.subr.bf16.mxu0 0
    %1508 = vmatpush1.bf16.msra.mxu0 %v1490
    %1509 = vmatprep.subr.bf16.mxu0 0
    %1510 = vmatpush1.bf16.msra.mxu0 %v1491
    %1511 = vmatprep.subr.bf16.mxu0 0
    %1512 = vmatpush1.bf16.msra.mxu0 %v1492
    %1513 = vmatprep.subr.bf16.mxu0 0
    %1514 = vmatpush1.bf16.msra.mxu0 %v1493
    %1515 = vmatprep.subr.bf16.mxu0 0
    %1516 = vmatpush1.bf16.msra.mxu0 %v1494
    %1517 = vmatprep.subr.bf16.mxu0 0
    %1518 = vmatpush1.bf16.msra.mxu0 %v1495
    %1519 = vmatprep.subr.bf16.mxu0 0
    %1520 = vmatpush1.bf16.msra.mxu0 %v1496
    %1521 = vmatprep.subr.bf16.mxu0 0
    %1522 = vmatpush1.bf16.msra.mxu0 0
    %1523 = vmatprep.subr.bf16.mxu0 0
    %1524 = vmatpush1.bf16.msra.mxu0 0
    %1525 = vmatprep.subr.bf16.mxu0 0
    %1526 = vmatpush1.bf16.msra.mxu0 0
    %1527 = vmatprep.subr.bf16.mxu0 0
    %1528 = vmatpush1.bf16.msra.mxu0 0
    %1529 = vmatprep.subr.bf16.mxu0 0
    %1530 = vmatpush1.bf16.msra.mxu0 0
    %1531 = vmatprep.subr.bf16.mxu0 0
    %1532 = vmatpush1.bf16.msra.mxu0 0
    %1533 = vmatprep.subr.bf16.mxu0 0
    %1534 = vmatpush1.bf16.msra.mxu0 0
    %1535 = vmatprep.subr.bf16.mxu0 0
    %1536 = vmatpush1.bf16.msra.mxu0 0
    %1537 = vmatprep.mubr.bf16.mxu0 0
    %1538 = vmatmul.mubr.bf16.gmra.mrb[0].mxu0 %v1439
    %v1539 = vpop.f32.mrb[0].mxu0
    %v1540 = vadd.f32 0.0, %v1539
    %v1541 = vpop.f32.mrb[0].mxu0
    %v1542 = vpop.f32.mrb[0].mxu0
    %v1543 = vpop.f32.mrb[0].mxu0
    %1544 = vdwg.mxu0
    %v1545 = vpack.c.bf16 %v1540, %v1540
    %s1546 = scalar_lea.vmem %s2, 12
    %v1547 = vld [vmem:[%s1546] sm:$0x1]
    %v1549 = vpack.i.b16 %v1547, %v1547
    %v1551 = vlaneseq
    %v1552 = vshrl.u32 %v1551, 7
    %v1553 = vsub.s32 0, %v1552
    %v1554 = vrot.slane %v1549, %v1553
    %v1555 = vadd.bf16 %v1545, %v1554
    %v1556 = vmax.bf16 %v1555, 0
    %s1557 = scalar_lea.vmem [#allocation3], 832
    %v1558 = vld [vmem:[%s1557] sm:$0xf]
    %v1559 = vld [vmem:[%s1557 + $0x4] sm:$0xf]
    %v1560 = vld [vmem:[%s1557 + $0x8] sm:$0xf]
    %v1561 = vld [vmem:[%s1557 + $0xc] sm:$0xf]
    %v1562 = vld [vmem:[%s1557 + $0x10] sm:$0xf]
    %v1563 = vld [vmem:[%s1557 + $0x14] sm:$0xf]
    %v1564 = vld [vmem:[%s1557 + $0x18] sm:$0xf]
    %v1565 = vld [vmem:[%s1557 + $0x1c] sm:$0xf]
    %v1566 = vld [vmem:[%s1557 + $0x20] sm:$0xf]
    %v1567 = vld [vmem:[%s1557 + $0x24] sm:$0xf]
    %v1568 = vld [vmem:[%s1557 + $0x28] sm:$0xf]
    %v1569 = vld [vmem:[%s1557 + $0x2c] sm:$0xf]
    %v1570 = vld [vmem:[%s1557 + $0x30] sm:$0xf]
    %v1571 = vld [vmem:[%s1557 + $0x34] sm:$0xf]
    %v1572 = vld [vmem:[%s1557 + $0x38] sm:$0xf]
    %v1573 = vld [vmem:[%s1557 + $0x3c] sm:$0xf]
    %v1590 = vunpack.c.l.b16 %v1558
    %v1591 = vunpack.c.l.b16 %v1559
    %v1592 = vunpack.c.l.b16 %v1560
    %v1593 = vunpack.c.l.b16 %v1561
    %v1594 = vunpack.c.l.b16 %v1562
    %v1595 = vunpack.c.l.b16 %v1563
    %v1596 = vunpack.c.l.b16 %v1564
    %v1597 = vunpack.c.l.b16 %v1565
    %v1598 = vunpack.c.l.b16 %v1566
    %v1599 = vunpack.c.l.b16 %v1567
    %v1600 = vunpack.c.l.b16 %v1568
    %v1601 = vunpack.c.l.b16 %v1569
    %v1602 = vunpack.c.l.b16 %v1570
    %v1603 = vunpack.c.l.b16 %v1571
    %v1604 = vunpack.c.l.b16 %v1572
    %v1605 = vunpack.c.l.b16 %v1573
    %v1606 = vpack.c.b16 %v1591, %v1590
    %v1607 = vpack.c.b16 %v1593, %v1592
    %v1608 = vpack.c.b16 %v1595, %v1594
    %v1609 = vpack.c.b16 %v1597, %v1596
    %v1610 = vpack.c.b16 %v1599, %v1598
    %v1611 = vpack.c.b16 %v1601, %v1600
    %v1612 = vpack.c.b16 %v1603, %v1602
    %v1613 = vpack.c.b16 %v1605, %v1604
    %1622 = vmatprep.subr.bf16.mxu0 0
    %1623 = vmatpush1.bf16.msra.mxu0 %v1606
    %1624 = vmatprep.subr.bf16.mxu0 0
    %1625 = vmatpush1.bf16.msra.mxu0 %v1607
    %1626 = vmatprep.subr.bf16.mxu0 0
    %1627 = vmatpush1.bf16.msra.mxu0 %v1608
    %1628 = vmatprep.subr.bf16.mxu0 0
    %1629 = vmatpush1.bf16.msra.mxu0 %v1609
    %1630 = vmatprep.subr.bf16.mxu0 0
    %1631 = vmatpush1.bf16.msra.mxu0 %v1610
    %1632 = vmatprep.subr.bf16.mxu0 0
    %1633 = vmatpush1.bf16.msra.mxu0 %v1611
    %1634 = vmatprep.subr.bf16.mxu0 0
    %1635 = vmatpush1.bf16.msra.mxu0 %v1612
    %1636 = vmatprep.subr.bf16.mxu0 0
    %1637 = vmatpush1.bf16.msra.mxu0 %v1613
    %1638 = vmatprep.subr.bf16.mxu0 0
    %1639 = vmatpush1.bf16.msra.mxu0 0
    %1640 = vmatprep.subr.bf16.mxu0 0
    %1641 = vmatpush1.bf16.msra.mxu0 0
    %1642 = vmatprep.subr.bf16.mxu0 0
    %1643 = vmatpush1.bf16.msra.mxu0 0
    %1644 = vmatprep.subr.bf16.mxu0 0
    %1645 = vmatpush1.bf16.msra.mxu0 0
    %1646 = vmatprep.subr.bf16.mxu0 0
    %1647 = vmatpush1.bf16.msra.mxu0 0
    %1648 = vmatprep.subr.bf16.mxu0 0
    %1649 = vmatpush1.bf16.msra.mxu0 0
    %1650 = vmatprep.subr.bf16.mxu0 0
    %1651 = vmatpush1.bf16.msra.mxu0 0
    %1652 = vmatprep.subr.bf16.mxu0 0
    %1653 = vmatpush1.bf16.msra.mxu0 0
    %1654 = vmatprep.mubr.bf16.mxu0 0
    %1655 = vmatmul.mubr.bf16.gmra.mrb[0].mxu0 %v1556
    %v1656 = vpop.f32.mrb[0].mxu0
    %v1657 = vadd.f32 0.0, %v1656
    %v1658 = vpop.f32.mrb[0].mxu0
    %v1659 = vpop.f32.mrb[0].mxu0
    %v1660 = vpop.f32.mrb[0].mxu0
    %1661 = vdwg.mxu0
    %v1662 = vpack.c.bf16 %v1657, %v1657
    %s1663 = scalar_lea.vmem %s2, 13
    %v1664 = vld [vmem:[%s1663] sm:$0x1]
    %v1666 = vpack.i.b16 %v1664, %v1664
    %v1668 = vlaneseq
    %v1669 = vshrl.u32 %v1668, 7
    %v1670 = vsub.s32 0, %v1669
    %v1671 = vrot.slane %v1666, %v1670
    %v1672 = vadd.bf16 %v1662, %v1671
    %v1673 = vmax.bf16 %v1672, 0
    %s1674 = scalar_lea.vmem [#allocation3], 896
    %v1675 = vld [vmem:[%s1674] sm:$0xf]
    %v1676 = vld [vmem:[%s1674 + $0x4] sm:$0xf]
    %v1677 = vld [vmem:[%s1674 + $0x8] sm:$0xf]
    %v1678 = vld [vmem:[%s1674 + $0xc] sm:$0xf]
    %v1679 = vld [vmem:[%s1674 + $0x10] sm:$0xf]
    %v1680 = vld [vmem:[%s1674 + $0x14] sm:$0xf]
    %v1681 = vld [vmem:[%s1674 + $0x18] sm:$0xf]
    %v1682 = vld [vmem:[%s1674 + $0x1c] sm:$0xf]
    %v1683 = vld [vmem:[%s1674 + $0x20] sm:$0xf]
    %v1684 = vld [vmem:[%s1674 + $0x24] sm:$0xf]
    %v1685 = vld [vmem:[%s1674 + $0x28] sm:$0xf]
    %v1686 = vld [vmem:[%s1674 + $0x2c] sm:$0xf]
    %v1687 = vld [vmem:[%s1674 + $0x30] sm:$0xf]
    %v1688 = vld [vmem:[%s1674 + $0x34] sm:$0xf]
    %v1689 = vld [vmem:[%s1674 + $0x38] sm:$0xf]
    %v1690 = vld [vmem:[%s1674 + $0x3c] sm:$0xf]
    %v1707 = vunpack.c.l.b16 %v1675
    %v1708 = vunpack.c.l.b16 %v1676
    %v1709 = vunpack.c.l.b16 %v1677
    %v1710 = vunpack.c.l.b16 %v1678
    %v1711 = vunpack.c.l.b16 %v1679
    %v1712 = vunpack.c.l.b16 %v1680
    %v1713 = vunpack.c.l.b16 %v1681
    %v1714 = vunpack.c.l.b16 %v1682
    %v1715 = vunpack.c.l.b16 %v1683
    %v1716 = vunpack.c.l.b16 %v1684
    %v1717 = vunpack.c.l.b16 %v1685
    %v1718 = vunpack.c.l.b16 %v1686
    %v1719 = vunpack.c.l.b16 %v1687
    %v1720 = vunpack.c.l.b16 %v1688
    %v1721 = vunpack.c.l.b16 %v1689
    %v1722 = vunpack.c.l.b16 %v1690
    %v1723 = vpack.c.b16 %v1708, %v1707
    %v1724 = vpack.c.b16 %v1710, %v1709
    %v1725 = vpack.c.b16 %v1712, %v1711
    %v1726 = vpack.c.b16 %v1714, %v1713
    %v1727 = vpack.c.b16 %v1716, %v1715
    %v1728 = vpack.c.b16 %v1718, %v1717
    %v1729 = vpack.c.b16 %v1720, %v1719
    %v1730 = vpack.c.b16 %v1722, %v1721
    %1739 = vmatprep.subr.bf16.mxu0 0
    %1740 = vmatpush1.bf16.msra.mxu0 %v1723
    %1741 = vmatprep.subr.bf16.mxu0 0
    %1742 = vmatpush1.bf16.msra.mxu0 %v1724
    %1743 = vmatprep.subr.bf16.mxu0 0
    %1744 = vmatpush1.bf16.msra.mxu0 %v1725
    %1745 = vmatprep.subr.bf16.mxu0 0
    %1746 = vmatpush1.bf16.msra.mxu0 %v1726
    %1747 = vmatprep.subr.bf16.mxu0 0
    %1748 = vmatpush1.bf16.msra.mxu0 %v1727
    %1749 = vmatprep.subr.bf16.mxu0 0
    %1750 = vmatpush1.bf16.msra.mxu0 %v1728
    %1751 = vmatprep.subr.bf16.mxu0 0
    %1752 = vmatpush1.bf16.msra.mxu0 %v1729
    %1753 = vmatprep.subr.bf16.mxu0 0
    %1754 = vmatpush1.bf16.msra.mxu0 %v1730
    %1755 = vmatprep.subr.bf16.mxu0 0
    %1756 = vmatpush1.bf16.msra.mxu0 0
    %1757 = vmatprep.subr.bf16.mxu0 0
    %1758 = vmatpush1.bf16.msra.mxu0 0
    %1759 = vmatprep.subr.bf16.mxu0 0
    %1760 = vmatpush1.bf16.msra.mxu0 0
    %1761 = vmatprep.subr.bf16.mxu0 0
    %1762 = vmatpush1.bf16.msra.mxu0 0
    %1763 = vmatprep.subr.bf16.mxu0 0
    %1764 = vmatpush1.bf16.msra.mxu0 0
    %1765 = vmatprep.subr.bf16.mxu0 0
    %1766 = vmatpush1.bf16.msra.mxu0 0
    %1767 = vmatprep.subr.bf16.mxu0 0
    %1768 = vmatpush1.bf16.msra.mxu0 0
    %1769 = vmatprep.subr.bf16.mxu0 0
    %1770 = vmatpush1.bf16.msra.mxu0 0
    %1771 = vmatprep.mubr.bf16.mxu0 0
    %1772 = vmatmul.mubr.bf16.gmra.mrb[0].mxu0 %v1673
    %v1773 = vpop.f32.mrb[0].mxu0
    %v1774 = vadd.f32 0.0, %v1773
    %v1775 = vpop.f32.mrb[0].mxu0
    %v1776 = vpop.f32.mrb[0].mxu0
    %v1777 = vpop.f32.mrb[0].mxu0
    %1778 = vdwg.mxu0
    %v1779 = vpack.c.bf16 %v1774, %v1774
    %s1780 = scalar_lea.vmem %s2, 14
    %v1781 = vld [vmem:[%s1780] sm:$0x1]
    %v1783 = vpack.i.b16 %v1781, %v1781
    %v1785 = vlaneseq
    %v1786 = vshrl.u32 %v1785, 7
    %v1787 = vsub.s32 0, %v1786
    %v1788 = vrot.slane %v1783, %v1787
    %v1789 = vadd.bf16 %v1779, %v1788
    %v1790 = vmax.bf16 %v1789, 0
    %v1791 = vld [vmem:[%s732] sm:$0xf]
    %v1792 = vadd.bf16 %v1790, %v1791
    %s1793 = scalar_lea.vmem [#allocation3], 960
    %v1794 = vld [vmem:[%s1793] sm:$0xf]
    %v1795 = vld [vmem:[%s1793 + $0x4] sm:$0xf]
    %v1796 = vld [vmem:[%s1793 + $0x8] sm:$0xf]
    %v1797 = vld [vmem:[%s1793 + $0xc] sm:$0xf]
    %v1798 = vld [vmem:[%s1793 + $0x10] sm:$0xf]
    %v1799 = vld [vmem:[%s1793 + $0x14] sm:$0xf]
    %v1800 = vld [vmem:[%s1793 + $0x18] sm:$0xf]
    %v1801 = vld [vmem:[%s1793 + $0x1c] sm:$0xf]
    %v1802 = vld [vmem:[%s1793 + $0x20] sm:$0xf]
    %v1803 = vld [vmem:[%s1793 + $0x24] sm:$0xf]
    %v1804 = vld [vmem:[%s1793 + $0x28] sm:$0xf]
    %v1805 = vld [vmem:[%s1793 + $0x2c] sm:$0xf]
    %v1806 = vld [vmem:[%s1793 + $0x30] sm:$0xf]
    %v1807 = vld [vmem:[%s1793 + $0x34] sm:$0xf]
    %v1808 = vld [vmem:[%s1793 + $0x38] sm:$0xf]
    %v1809 = vld [vmem:[%s1793 + $0x3c] sm:$0xf]
    %v1826 = vunpack.c.l.b16 %v1794
    %v1827 = vunpack.c.l.b16 %v1795
    %v1828 = vunpack.c.l.b16 %v1796
    %v1829 = vunpack.c.l.b16 %v1797
    %v1830 = vunpack.c.l.b16 %v1798
    %v1831 = vunpack.c.l.b16 %v1799
    %v1832 = vunpack.c.l.b16 %v1800
    %v1833 = vunpack.c.l.b16 %v1801
    %v1834 = vunpack.c.l.b16 %v1802
    %v1835 = vunpack.c.l.b16 %v1803
    %v1836 = vunpack.c.l.b16 %v1804
    %v1837 = vunpack.c.l.b16 %v1805
    %v1838 = vunpack.c.l.b16 %v1806
    %v1839 = vunpack.c.l.b16 %v1807
    %v1840 = vunpack.c.l.b16 %v1808
    %v1841 = vunpack.c.l.b16 %v1809
    %v1842 = vpack.c.b16 %v1827, %v1826
    %v1843 = vpack.c.b16 %v1829, %v1828
    %v1844 = vpack.c.b16 %v1831, %v1830
    %v1845 = vpack.c.b16 %v1833, %v1832
    %v1846 = vpack.c.b16 %v1835, %v1834
    %v1847 = vpack.c.b16 %v1837, %v1836
    %v1848 = vpack.c.b16 %v1839, %v1838
    %v1849 = vpack.c.b16 %v1841, %v1840
    %1858 = vmatprep.subr.bf16.mxu0 0
    %1859 = vmatpush1.bf16.msra.mxu0 %v1842
    %1860 = vmatprep.subr.bf16.mxu0 0
    %1861 = vmatpush1.bf16.msra.mxu0 %v1843
    %1862 = vmatprep.subr.bf16.mxu0 0
    %1863 = vmatpush1.bf16.msra.mxu0 %v1844
    %1864 = vmatprep.subr.bf16.mxu0 0
    %1865 = vmatpush1.bf16.msra.mxu0 %v1845
    %1866 = vmatprep.subr.bf16.mxu0 0
    %1867 = vmatpush1.bf16.msra.mxu0 %v1846
    %1868 = vmatprep.subr.bf16.mxu0 0
    %1869 = vmatpush1.bf16.msra.mxu0 %v1847
    %1870 = vmatprep.subr.bf16.mxu0 0
    %1871 = vmatpush1.bf16.msra.mxu0 %v1848
    %1872 = vmatprep.subr.bf16.mxu0 0
    %1873 = vmatpush1.bf16.msra.mxu0 %v1849
    %1874 = vmatprep.subr.bf16.mxu0 0
    %1875 = vmatpush1.bf16.msra.mxu0 0
    %1876 = vmatprep.subr.bf16.mxu0 0
    %1877 = vmatpush1.bf16.msra.mxu0 0
    %1878 = vmatprep.subr.bf16.mxu0 0
    %1879 = vmatpush1.bf16.msra.mxu0 0
    %1880 = vmatprep.subr.bf16.mxu0 0
    %1881 = vmatpush1.bf16.msra.mxu0 0
    %1882 = vmatprep.subr.bf16.mxu0 0
    %1883 = vmatpush1.bf16.msra.mxu0 0
    %1884 = vmatprep.subr.bf16.mxu0 0
    %1885 = vmatpush1.bf16.msra.mxu0 0
    %1886 = vmatprep.subr.bf16.mxu0 0
    %1887 = vmatpush1.bf16.msra.mxu0 0
    %1888 = vmatprep.subr.bf16.mxu0 0
    %1889 = vmatpush1.bf16.msra.mxu0 0
    %1890 = vmatprep.mubr.bf16.mxu0 0
    %1891 = vmatmul.mubr.bf16.gmra.mrb[0].mxu0 %v1792
    %v1892 = vpop.f32.mrb[0].mxu0
    %v1893 = vadd.f32 0.0, %v1892
    %v1894 = vpop.f32.mrb[0].mxu0
    %v1895 = vpop.f32.mrb[0].mxu0
    %v1896 = vpop.f32.mrb[0].mxu0
    %1897 = vdwg.mxu0
    %v1898 = vpack.c.bf16 %v1893, %v1893
    %s1899 = scalar_lea.vmem %s2, 15
    %v1900 = vld [vmem:[%s1899] sm:$0x1]
    %v1902 = vpack.i.b16 %v1900, %v1900
    %v1904 = vlaneseq
    %v1905 = vshrl.u32 %v1904, 7
    %v1906 = vsub.s32 0, %v1905
    %v1907 = vrot.slane %v1902, %v1906
    %v1908 = vadd.bf16 %v1898, %v1907
    %v1909 = vmax.bf16 %v1908, 0
    %s1910 = scalar_lea.vmem [#allocation3], 1024
    %v1911 = vld [vmem:[%s1910] sm:$0xf]
    %v1912 = vld [vmem:[%s1910 + $0x4] sm:$0xf]
    %v1913 = vld [vmem:[%s1910 + $0x8] sm:$0xf]
    %v1914 = vld [vmem:[%s1910 + $0xc] sm:$0xf]
    %v1915 = vld [vmem:[%s1910 + $0x10] sm:$0xf]
    %v1916 = vld [vmem:[%s1910 + $0x14] sm:$0xf]
    %v1917 = vld [vmem:[%s1910 + $0x18] sm:$0xf]
    %v1918 = vld [vmem:[%s1910 + $0x1c] sm:$0xf]
    %v1919 = vld [vmem:[%s1910 + $0x20] sm:$0xf]
    %v1920 = vld [vmem:[%s1910 + $0x24] sm:$0xf]
    %v1921 = vld [vmem:[%s1910 + $0x28] sm:$0xf]
    %v1922 = vld [vmem:[%s1910 + $0x2c] sm:$0xf]
    %v1923 = vld [vmem:[%s1910 + $0x30] sm:$0xf]
    %v1924 = vld [vmem:[%s1910 + $0x34] sm:$0xf]
    %v1925 = vld [vmem:[%s1910 + $0x38] sm:$0xf]
    %v1926 = vld [vmem:[%s1910 + $0x3c] sm:$0xf]
    %v1943 = vunpack.c.l.b16 %v1911
    %v1944 = vunpack.c.l.b16 %v1912
    %v1945 = vunpack.c.l.b16 %v1913
    %v1946 = vunpack.c.l.b16 %v1914
    %v1947 = vunpack.c.l.b16 %v1915
    %v1948 = vunpack.c.l.b16 %v1916
    %v1949 = vunpack.c.l.b16 %v1917
    %v1950 = vunpack.c.l.b16 %v1918
    %v1951 = vunpack.c.l.b16 %v1919
    %v1952 = vunpack.c.l.b16 %v1920
    %v1953 = vunpack.c.l.b16 %v1921
    %v1954 = vunpack.c.l.b16 %v1922
    %v1955 = vunpack.c.l.b16 %v1923
    %v1956 = vunpack.c.l.b16 %v1924
    %v1957 = vunpack.c.l.b16 %v1925
    %v1958 = vunpack.c.l.b16 %v1926
    %v1959 = vpack.c.b16 %v1944, %v1943
    %v1960 = vpack.c.b16 %v1946, %v1945
    %v1961 = vpack.c.b16 %v1948, %v1947
    %v1962 = vpack.c.b16 %v1950, %v1949
    %v1963 = vpack.c.b16 %v1952, %v1951
    %v1964 = vpack.c.b16 %v1954, %v1953
    %v1965 = vpack.c.b16 %v1956, %v1955
    %v1966 = vpack.c.b16 %v1958, %v1957
    %1975 = vmatprep.subr.bf16.mxu0 0
    %1976 = vmatpush1.bf16.msra.mxu0 %v1959
    %1977 = vmatprep.subr.bf16.mxu0 0
    %1978 = vmatpush1.bf16.msra.mxu0 %v1960
    %1979 = vmatprep.subr.bf16.mxu0 0
    %1980 = vmatpush1.bf16.msra.mxu0 %v1961
    %1981 = vmatprep.subr.bf16.mxu0 0
    %1982 = vmatpush1.bf16.msra.mxu0 %v1962
    %1983 = vmatprep.subr.bf16.mxu0 0
    %1984 = vmatpush1.bf16.msra.mxu0 %v1963
    %1985 = vmatprep.subr.bf16.mxu0 0
    %1986 = vmatpush1.bf16.msra.mxu0 %v1964
    %1987 = vmatprep.subr.bf16.mxu0 0
    %1988 = vmatpush1.bf16.msra.mxu0 %v1965
    %1989 = vmatprep.subr.bf16.mxu0 0
    %1990 = vmatpush1.bf16.msra.mxu0 %v1966
    %1991 = vmatprep.subr.bf16.mxu0 0
    %1992 = vmatpush1.bf16.msra.mxu0 0
    %1993 = vmatprep.subr.bf16.mxu0 0
    %1994 = vmatpush1.bf16.msra.mxu0 0
    %1995 = vmatprep.subr.bf16.mxu0 0
    %1996 = vmatpush1.bf16.msra.mxu0 0
    %1997 = vmatprep.subr.bf16.mxu0 0
    %1998 = vmatpush1.bf16.msra.mxu0 0
    %1999 = vmatprep.subr.bf16.mxu0 0
    %2000 = vmatpush1.bf16.msra.mxu0 0
    %2001 = vmatprep.subr.bf16.mxu0 0
    %2002 = vmatpush1.bf16.msra.mxu0 0
    %2003 = vmatprep.subr.bf16.mxu0 0
    %2004 = vmatpush1.bf16.msra.mxu0 0
    %2005 = vmatprep.subr.bf16.mxu0 0
    %2006 = vmatpush1.bf16.msra.mxu0 0
    %2007 = vmatprep.mubr.bf16.mxu0 0
    %2008 = vmatmul.mubr.bf16.gmra.mrb[0].mxu0 %v1909
    %v2009 = vpop.f32.mrb[0].mxu0
    %v2010 = vadd.f32 0.0, %v2009
    %v2011 = vpop.f32.mrb[0].mxu0
    %v2012 = vpop.f32.mrb[0].mxu0
    %v2013 = vpop.f32.mrb[0].mxu0
    %2014 = vdwg.mxu0
    %v2015 = vpack.c.bf16 %v2010, %v2010
    %s2016 = scalar_lea.vmem %s2, 16
    %v2017 = vld [vmem:[%s2016] sm:$0x1]
    %v2019 = vpack.i.b16 %v2017, %v2017
    %v2021 = vlaneseq
    %v2022 = vshrl.u32 %v2021, 7
    %v2023 = vsub.s32 0, %v2022
    %v2024 = vrot.slane %v2019, %v2023
    %v2025 = vadd.bf16 %v2015, %v2024
    %v2026 = vmax.bf16 %v2025, 0
    %s2027 = scalar_lea.vmem [#allocation3], 1088
    %v2028 = vld [vmem:[%s2027] sm:$0xf]
    %v2029 = vld [vmem:[%s2027 + $0x4] sm:$0xf]
    %v2030 = vld [vmem:[%s2027 + $0x8] sm:$0xf]
    %v2031 = vld [vmem:[%s2027 + $0xc] sm:$0xf]
    %v2032 = vld [vmem:[%s2027 + $0x10] sm:$0xf]
    %v2033 = vld [vmem:[%s2027 + $0x14] sm:$0xf]
    %v2034 = vld [vmem:[%s2027 + $0x18] sm:$0xf]
    %v2035 = vld [vmem:[%s2027 + $0x1c] sm:$0xf]
    %v2036 = vld [vmem:[%s2027 + $0x20] sm:$0xf]
    %v2037 = vld [vmem:[%s2027 + $0x24] sm:$0xf]
    %v2038 = vld [vmem:[%s2027 + $0x28] sm:$0xf]
    %v2039 = vld [vmem:[%s2027 + $0x2c] sm:$0xf]
    %v2040 = vld [vmem:[%s2027 + $0x30] sm:$0xf]
    %v2041 = vld [vmem:[%s2027 + $0x34] sm:$0xf]
    %v2042 = vld [vmem:[%s2027 + $0x38] sm:$0xf]
    %v2043 = vld [vmem:[%s2027 + $0x3c] sm:$0xf]
    %v2060 = vunpack.c.l.b16 %v2028
    %v2061 = vunpack.c.l.b16 %v2029
    %v2062 = vunpack.c.l.b16 %v2030
    %v2063 = vunpack.c.l.b16 %v2031
    %v2064 = vunpack.c.l.b16 %v2032
    %v2065 = vunpack.c.l.b16 %v2033
    %v2066 = vunpack.c.l.b16 %v2034
    %v2067 = vunpack.c.l.b16 %v2035
    %v2068 = vunpack.c.l.b16 %v2036
    %v2069 = vunpack.c.l.b16 %v2037
    %v2070 = vunpack.c.l.b16 %v2038
    %v2071 = vunpack.c.l.b16 %v2039
    %v2072 = vunpack.c.l.b16 %v2040
    %v2073 = vunpack.c.l.b16 %v2041
    %v2074 = vunpack.c.l.b16 %v2042
    %v2075 = vunpack.c.l.b16 %v2043
    %v2076 = vpack.c.b16 %v2061, %v2060
    %v2077 = vpack.c.b16 %v2063, %v2062
    %v2078 = vpack.c.b16 %v2065, %v2064
    %v2079 = vpack.c.b16 %v2067, %v2066
    %v2080 = vpack.c.b16 %v2069, %v2068
    %v2081 = vpack.c.b16 %v2071, %v2070
    %v2082 = vpack.c.b16 %v2073, %v2072
    %v2083 = vpack.c.b16 %v2075, %v2074
    %2092 = vmatprep.subr.bf16.mxu0 0
    %2093 = vmatpush1.bf16.msra.mxu0 %v2076
    %2094 = vmatprep.subr.bf16.mxu0 0
    %2095 = vmatpush1.bf16.msra.mxu0 %v2077
    %2096 = vmatprep.subr.bf16.mxu0 0
    %2097 = vmatpush1.bf16.msra.mxu0 %v2078
    %2098 = vmatprep.subr.bf16.mxu0 0
    %2099 = vmatpush1.bf16.msra.mxu0 %v2079
    %2100 = vmatprep.subr.bf16.mxu0 0
    %2101 = vmatpush1.bf16.msra.mxu0 %v2080
    %2102 = vmatprep.subr.bf16.mxu0 0
    %2103 = vmatpush1.bf16.msra.mxu0 %v2081
    %2104 = vmatprep.subr.bf16.mxu0 0
    %2105 = vmatpush1.bf16.msra.mxu0 %v2082
    %2106 = vmatprep.subr.bf16.mxu0 0
    %2107 = vmatpush1.bf16.msra.mxu0 %v2083
    %2108 = vmatprep.subr.bf16.mxu0 0
    %2109 = vmatpush1.bf16.msra.mxu0 0
    %2110 = vmatprep.subr.bf16.mxu0 0
    %2111 = vmatpush1.bf16.msra.mxu0 0
    %2112 = vmatprep.subr.bf16.mxu0 0
    %2113 = vmatpush1.bf16.msra.mxu0 0
    %2114 = vmatprep.subr.bf16.mxu0 0
    %2115 = vmatpush1.bf16.msra.mxu0 0
    %2116 = vmatprep.subr.bf16.mxu0 0
    %2117 = vmatpush1.bf16.msra.mxu0 0
    %2118 = vmatprep.subr.bf16.mxu0 0
    %2119 = vmatpush1.bf16.msra.mxu0 0
    %2120 = vmatprep.subr.bf16.mxu0 0
    %2121 = vmatpush1.bf16.msra.mxu0 0
    %2122 = vmatprep.subr.bf16.mxu0 0
    %2123 = vmatpush1.bf16.msra.mxu0 0
    %2124 = vmatprep.mubr.bf16.mxu0 0
    %2125 = vmatmul.mubr.bf16.gmra.mrb[0].mxu0 %v2026
    %v2126 = vpop.f32.mrb[0].mxu0
    %v2127 = vadd.f32 0.0, %v2126
    %v2128 = vpop.f32.mrb[0].mxu0
    %v2129 = vpop.f32.mrb[0].mxu0
    %v2130 = vpop.f32.mrb[0].mxu0
    %2131 = vdwg.mxu0
    %v2132 = vpack.c.bf16 %v2127, %v2127
    %s2133 = scalar_lea.vmem %s2, 17
    %v2134 = vld [vmem:[%s2133] sm:$0x1]
    %v2136 = vpack.i.b16 %v2134, %v2134
    %v2138 = vlaneseq
    %v2139 = vshrl.u32 %v2138, 7
    %v2140 = vsub.s32 0, %v2139
    %v2141 = vrot.slane %v2136, %v2140
    %v2142 = vadd.bf16 %v2132, %v2141
    %v2143 = vmax.bf16 %v2142, 0
    %v2144 = vld [vmem:[#allocation2] sm:$0xf]
    %v2145 = vadd.bf16 %v2143, %v2144
    %s2146 = scalar_lea.vmem [#allocation3], 1152
    %v2147 = vld [vmem:[%s2146] sm:$0xf]
    %v2148 = vld [vmem:[%s2146 + $0x4] sm:$0xf]
    %v2149 = vld [vmem:[%s2146 + $0x8] sm:$0xf]
    %v2150 = vld [vmem:[%s2146 + $0xc] sm:$0xf]
    %v2151 = vld [vmem:[%s2146 + $0x10] sm:$0xf]
    %v2152 = vld [vmem:[%s2146 + $0x14] sm:$0xf]
    %v2153 = vld [vmem:[%s2146 + $0x18] sm:$0xf]
    %v2154 = vld [vmem:[%s2146 + $0x1c] sm:$0xf]
    %v2155 = vld [vmem:[%s2146 + $0x20] sm:$0xf]
    %v2156 = vld [vmem:[%s2146 + $0x24] sm:$0xf]
    %v2157 = vld [vmem:[%s2146 + $0x28] sm:$0xf]
    %v2158 = vld [vmem:[%s2146 + $0x2c] sm:$0xf]
    %v2159 = vld [vmem:[%s2146 + $0x30] sm:$0xf]
    %v2160 = vld [vmem:[%s2146 + $0x34] sm:$0xf]
    %v2161 = vld [vmem:[%s2146 + $0x38] sm:$0xf]
    %v2162 = vld [vmem:[%s2146 + $0x3c] sm:$0xf]
    %v2179 = vunpack.c.l.b16 %v2147
    %v2180 = vunpack.c.l.b16 %v2148
    %v2181 = vunpack.c.l.b16 %v2149
    %v2182 = vunpack.c.l.b16 %v2150
    %v2183 = vunpack.c.l.b16 %v2151
    %v2184 = vunpack.c.l.b16 %v2152
    %v2185 = vunpack.c.l.b16 %v2153
    %v2186 = vunpack.c.l.b16 %v2154
    %v2187 = vunpack.c.l.b16 %v2155
    %v2188 = vunpack.c.l.b16 %v2156
    %v2189 = vunpack.c.l.b16 %v2157
    %v2190 = vunpack.c.l.b16 %v2158
    %v2191 = vunpack.c.l.b16 %v2159
    %v2192 = vunpack.c.l.b16 %v2160
    %v2193 = vunpack.c.l.b16 %v2161
    %v2194 = vunpack.c.l.b16 %v2162
    %v2195 = vpack.c.b16 %v2180, %v2179
    %v2196 = vpack.c.b16 %v2182, %v2181
    %v2197 = vpack.c.b16 %v2184, %v2183
    %v2198 = vpack.c.b16 %v2186, %v2185
    %v2199 = vpack.c.b16 %v2188, %v2187
    %v2200 = vpack.c.b16 %v2190, %v2189
    %v2201 = vpack.c.b16 %v2192, %v2191
    %v2202 = vpack.c.b16 %v2194, %v2193
    %2211 = vmatprep.subr.bf16.mxu0 0
    %2212 = vmatpush1.bf16.msra.mxu0 %v2195
    %2213 = vmatprep.subr.bf16.mxu0 0
    %2214 = vmatpush1.bf16.msra.mxu0 %v2196
    %2215 = vmatprep.subr.bf16.mxu0 0
    %2216 = vmatpush1.bf16.msra.mxu0 %v2197
    %2217 = vmatprep.subr.bf16.mxu0 0
    %2218 = vmatpush1.bf16.msra.mxu0 %v2198
    %2219 = vmatprep.subr.bf16.mxu0 0
    %2220 = vmatpush1.bf16.msra.mxu0 %v2199
    %2221 = vmatprep.subr.bf16.mxu0 0
    %2222 = vmatpush1.bf16.msra.mxu0 %v2200
    %2223 = vmatprep.subr.bf16.mxu0 0
    %2224 = vmatpush1.bf16.msra.mxu0 %v2201
    %2225 = vmatprep.subr.bf16.mxu0 0
    %2226 = vmatpush1.bf16.msra.mxu0 %v2202
    %2227 = vmatprep.subr.bf16.mxu0 0
    %2228 = vmatpush1.bf16.msra.mxu0 0
    %2229 = vmatprep.subr.bf16.mxu0 0
    %2230 = vmatpush1.bf16.msra.mxu0 0
    %2231 = vmatprep.subr.bf16.mxu0 0
    %2232 = vmatpush1.bf16.msra.mxu0 0
    %2233 = vmatprep.subr.bf16.mxu0 0
    %2234 = vmatpush1.bf16.msra.mxu0 0
    %2235 = vmatprep.subr.bf16.mxu0 0
    %2236 = vmatpush1.bf16.msra.mxu0 0
    %2237 = vmatprep.subr.bf16.mxu0 0
    %2238 = vmatpush1.bf16.msra.mxu0 0
    %2239 = vmatprep.subr.bf16.mxu0 0
    %2240 = vmatpush1.bf16.msra.mxu0 0
    %2241 = vmatprep.subr.bf16.mxu0 0
    %2242 = vmatpush1.bf16.msra.mxu0 0
    %2243 = vmatprep.mubr.bf16.mxu0 0
    %2244 = vmatmul.mubr.bf16.gmra.mrb[0].mxu0 %v2145
    %v2245 = vpop.f32.mrb[0].mxu0
    %v2246 = vadd.f32 0.0, %v2245
    %v2247 = vpop.f32.mrb[0].mxu0
    %v2248 = vpop.f32.mrb[0].mxu0
    %v2249 = vpop.f32.mrb[0].mxu0
    %2250 = vdwg.mxu0
    %v2251 = vpack.c.bf16 %v2246, %v2246
    %s2252 = scalar_lea.vmem %s2, 18
    %v2253 = vld [vmem:[%s2252] sm:$0x1]
    %v2255 = vpack.i.b16 %v2253, %v2253
    %v2257 = vlaneseq
    %v2258 = vshrl.u32 %v2257, 7
    %v2259 = vsub.s32 0, %v2258
    %v2260 = vrot.slane %v2255, %v2259
    %v2261 = vadd.bf16 %v2251, %v2260
    %v2262 = vmax.bf16 %v2261, 0
    %s2263 = scalar_lea.vmem [#allocation3], 1216
    %v2264 = vld [vmem:[%s2263] sm:$0xf]
    %v2265 = vld [vmem:[%s2263 + $0x4] sm:$0xf]
    %v2266 = vld [vmem:[%s2263 + $0x8] sm:$0xf]
    %v2267 = vld [vmem:[%s2263 + $0xc] sm:$0xf]
    %v2268 = vld [vmem:[%s2263 + $0x10] sm:$0xf]
    %v2269 = vld [vmem:[%s2263 + $0x14] sm:$0xf]
    %v2270 = vld [vmem:[%s2263 + $0x18] sm:$0xf]
    %v2271 = vld [vmem:[%s2263 + $0x1c] sm:$0xf]
    %v2272 = vld [vmem:[%s2263 + $0x20] sm:$0xf]
    %v2273 = vld [vmem:[%s2263 + $0x24] sm:$0xf]
    %v2274 = vld [vmem:[%s2263 + $0x28] sm:$0xf]
    %v2275 = vld [vmem:[%s2263 + $0x2c] sm:$0xf]
    %v2276 = vld [vmem:[%s2263 + $0x30] sm:$0xf]
    %v2277 = vld [vmem:[%s2263 + $0x34] sm:$0xf]
    %v2278 = vld [vmem:[%s2263 + $0x38] sm:$0xf]
    %v2279 = vld [vmem:[%s2263 + $0x3c] sm:$0xf]
    %v2296 = vunpack.c.l.b16 %v2264
    %v2297 = vunpack.c.l.b16 %v2265
    %v2298 = vunpack.c.l.b16 %v2266
    %v2299 = vunpack.c.l.b16 %v2267
    %v2300 = vunpack.c.l.b16 %v2268
    %v2301 = vunpack.c.l.b16 %v2269
    %v2302 = vunpack.c.l.b16 %v2270
    %v2303 = vunpack.c.l.b16 %v2271
    %v2304 = vunpack.c.l.b16 %v2272
    %v2305 = vunpack.c.l.b16 %v2273
    %v2306 = vunpack.c.l.b16 %v2274
    %v2307 = vunpack.c.l.b16 %v2275
    %v2308 = vunpack.c.l.b16 %v2276
    %v2309 = vunpack.c.l.b16 %v2277
    %v2310 = vunpack.c.l.b16 %v2278
    %v2311 = vunpack.c.l.b16 %v2279
    %v2312 = vpack.c.b16 %v2297, %v2296
    %v2313 = vpack.c.b16 %v2299, %v2298
    %v2314 = vpack.c.b16 %v2301, %v2300
    %v2315 = vpack.c.b16 %v2303, %v2302
    %v2316 = vpack.c.b16 %v2305, %v2304
    %v2317 = vpack.c.b16 %v2307, %v2306
    %v2318 = vpack.c.b16 %v2309, %v2308
    %v2319 = vpack.c.b16 %v2311, %v2310
    %2328 = vmatprep.subr.bf16.mxu0 0
    %2329 = vmatpush1.bf16.msra.mxu0 %v2312
    %2330 = vmatprep.subr.bf16.mxu0 0
    %2331 = vmatpush1.bf16.msra.mxu0 %v2313
    %2332 = vmatprep.subr.bf16.mxu0 0
    %2333 = vmatpush1.bf16.msra.mxu0 %v2314
    %2334 = vmatprep.subr.bf16.mxu0 0
    %2335 = vmatpush1.bf16.msra.mxu0 %v2315
    %2336 = vmatprep.subr.bf16.mxu0 0
    %2337 = vmatpush1.bf16.msra.mxu0 %v2316
    %2338 = vmatprep.subr.bf16.mxu0 0
    %2339 = vmatpush1.bf16.msra.mxu0 %v2317
    %2340 = vmatprep.subr.bf16.mxu0 0
    %2341 = vmatpush1.bf16.msra.mxu0 %v2318
    %2342 = vmatprep.subr.bf16.mxu0 0
    %2343 = vmatpush1.bf16.msra.mxu0 %v2319
    %2344 = vmatprep.subr.bf16.mxu0 0
    %2345 = vmatpush1.bf16.msra.mxu0 0
    %2346 = vmatprep.subr.bf16.mxu0 0
    %2347 = vmatpush1.bf16.msra.mxu0 0
    %2348 = vmatprep.subr.bf16.mxu0 0
    %2349 = vmatpush1.bf16.msra.mxu0 0
    %2350 = vmatprep.subr.bf16.mxu0 0
    %2351 = vmatpush1.bf16.msra.mxu0 0
    %2352 = vmatprep.subr.bf16.mxu0 0
    %2353 = vmatpush1.bf16.msra.mxu0 0
    %2354 = vmatprep.subr.bf16.mxu0 0
    %2355 = vmatpush1.bf16.msra.mxu0 0
    %2356 = vmatprep.subr.bf16.mxu0 0
    %2357 = vmatpush1.bf16.msra.mxu0 0
    %2358 = vmatprep.subr.bf16.mxu0 0
    %2359 = vmatpush1.bf16.msra.mxu0 0
    %2360 = vmatprep.mubr.bf16.mxu0 0
    %2361 = vmatmul.mubr.bf16.gmra.mrb[0].mxu0 %v2262
    %v2362 = vpop.f32.mrb[0].mxu0
    %v2363 = vadd.f32 0.0, %v2362
    %v2364 = vpop.f32.mrb[0].mxu0
    %v2365 = vpop.f32.mrb[0].mxu0
    %v2366 = vpop.f32.mrb[0].mxu0
    %2367 = vdwg.mxu0
    %v2368 = vpack.c.bf16 %v2363, %v2363
    %s2369 = scalar_lea.vmem %s2, 19
    %v2370 = vld [vmem:[%s2369] sm:$0x1]
    %v2372 = vpack.i.b16 %v2370, %v2370
    %v2374 = vlaneseq
    %v2375 = vshrl.u32 %v2374, 7
    %v2376 = vsub.s32 0, %v2375
    %v2377 = vrot.slane %v2372, %v2376
    %v2378 = vadd.bf16 %v2368, %v2377
    %v2379 = vmax.bf16 %v2378, 0
    %s2380 = scalar_lea.vmem [#allocation3], 1280
    %v2381 = vld [vmem:[%s2380] sm:$0xf]
    %v2382 = vld [vmem:[%s2380 + $0x4] sm:$0xf]
    %v2383 = vld [vmem:[%s2380 + $0x8] sm:$0xf]
    %v2384 = vld [vmem:[%s2380 + $0xc] sm:$0xf]
    %v2385 = vld [vmem:[%s2380 + $0x10] sm:$0xf]
    %v2386 = vld [vmem:[%s2380 + $0x14] sm:$0xf]
    %v2387 = vld [vmem:[%s2380 + $0x18] sm:$0xf]
    %v2388 = vld [vmem:[%s2380 + $0x1c] sm:$0xf]
    %v2389 = vld [vmem:[%s2380 + $0x20] sm:$0xf]
    %v2390 = vld [vmem:[%s2380 + $0x24] sm:$0xf]
    %v2391 = vld [vmem:[%s2380 + $0x28] sm:$0xf]
    %v2392 = vld [vmem:[%s2380 + $0x2c] sm:$0xf]
    %v2393 = vld [vmem:[%s2380 + $0x30] sm:$0xf]
    %v2394 = vld [vmem:[%s2380 + $0x34] sm:$0xf]
    %v2395 = vld [vmem:[%s2380 + $0x38] sm:$0xf]
    %v2396 = vld [vmem:[%s2380 + $0x3c] sm:$0xf]
    %s2397 = scalar_lea.vmem %s2, 20
    %v2398 = vld [vmem:[%s2397] sm:$0x1]
    %v2399 = vunpack.c.l.bf16 %v2398
    %v2400 = vlaneseq
    %v2401 = vshrl.u32 %v2400, 7
    %v2402 = vsub.s32 0, %v2401
    %v2403 = vrot.slane %v2399, %v2402
    %v2420 = vunpack.c.l.b16 %v2381
    %v2421 = vunpack.c.l.b16 %v2382
    %v2422 = vunpack.c.l.b16 %v2383
    %v2423 = vunpack.c.l.b16 %v2384
    %v2424 = vunpack.c.l.b16 %v2385
    %v2425 = vunpack.c.l.b16 %v2386
    %v2426 = vunpack.c.l.b16 %v2387
    %v2427 = vunpack.c.l.b16 %v2388
    %v2428 = vunpack.c.l.b16 %v2389
    %v2429 = vunpack.c.l.b16 %v2390
    %v2430 = vunpack.c.l.b16 %v2391
    %v2431 = vunpack.c.l.b16 %v2392
    %v2432 = vunpack.c.l.b16 %v2393
    %v2433 = vunpack.c.l.b16 %v2394
    %v2434 = vunpack.c.l.b16 %v2395
    %v2435 = vunpack.c.l.b16 %v2396
    %v2436 = vpack.c.b16 %v2421, %v2420
    %v2437 = vpack.c.b16 %v2423, %v2422
    %v2438 = vpack.c.b16 %v2425, %v2424
    %v2439 = vpack.c.b16 %v2427, %v2426
    %v2440 = vpack.c.b16 %v2429, %v2428
    %v2441 = vpack.c.b16 %v2431, %v2430
    %v2442 = vpack.c.b16 %v2433, %v2432
    %v2443 = vpack.c.b16 %v2435, %v2434
    %2452 = vmatprep.subr.bf16.mxu0 0
    %2453 = vmatpush1.bf16.msra.mxu0 %v2436
    %2454 = vmatprep.subr.bf16.mxu0 0
    %2455 = vmatpush1.bf16.msra.mxu0 %v2437
    %2456 = vmatprep.subr.bf16.mxu0 0
    %2457 = vmatpush1.bf16.msra.mxu0 %v2438
    %2458 = vmatprep.subr.bf16.mxu0 0
    %2459 = vmatpush1.bf16.msra.mxu0 %v2439
    %2460 = vmatprep.subr.bf16.mxu0 0
    %2461 = vmatpush1.bf16.msra.mxu0 %v2440
    %2462 = vmatprep.subr.bf16.mxu0 0
    %2463 = vmatpush1.bf16.msra.mxu0 %v2441
    %2464 = vmatprep.subr.bf16.mxu0 0
    %2465 = vmatpush1.bf16.msra.mxu0 %v2442
    %2466 = vmatprep.subr.bf16.mxu0 0
    %2467 = vmatpush1.bf16.msra.mxu0 %v2443
    %2468 = vmatprep.subr.bf16.mxu0 0
    %2469 = vmatpush1.bf16.msra.mxu0 0
    %2470 = vmatprep.subr.bf16.mxu0 0
    %2471 = vmatpush1.bf16.msra.mxu0 0
    %2472 = vmatprep.subr.bf16.mxu0 0
    %2473 = vmatpush1.bf16.msra.mxu0 0
    %2474 = vmatprep.subr.bf16.mxu0 0
    %2475 = vmatpush1.bf16.msra.mxu0 0
    %2476 = vmatprep.subr.bf16.mxu0 0
    %2477 = vmatpush1.bf16.msra.mxu0 0
    %2478 = vmatprep.subr.bf16.mxu0 0
    %2479 = vmatpush1.bf16.msra.mxu0 0
    %2480 = vmatprep.subr.bf16.mxu0 0
    %2481 = vmatpush1.bf16.msra.mxu0 0
    %2482 = vmatprep.subr.bf16.mxu0 0
    %2483 = vmatpush1.bf16.msra.mxu0 0
    %2484 = vmatprep.mubr.bf16.mxu0 0
    %2485 = vmatmul.mubr.bf16.gmra.mrb[0].mxu0 %v2379
    %v2486 = vpop.f32.mrb[0].mxu0
    %v2487 = vadd.f32 %v2403, %v2486
    %v2488 = vpop.f32.mrb[0].mxu0
    %v2489 = vpop.f32.mrb[0].mxu0
    %v2490 = vpop.f32.mrb[0].mxu0
    %2491 = vdwg.mxu0
    %2492 = vst [vmem:[#allocation6] sm:$0xff] %v2487
    // Predicated region
    $region18: #{_lambda_.1} parent=1 // pred_check
      _
    $region19: #{_lambda_.1} parent=1 // pred_check_branch
      %2494 = sbr.rel (0) target = $region21
    $region20: #{_lambda_.1} parent=1 // pred_region
      %s2496 = ssub.s32 128, 128
      %2497 = vsyncadd [#allocation5], %s2496
      %s2499 = sshll.u32 [#allocation6], 4
      %s2500 = int_to_ptr.vmem [resolvable:$true] %s2499
      %2502 = dma.vmem_to_hbm [thread:$0]  %s2500, 128, %s3, [#allocation5]
    $region21: #{_lambda_.1} parent=1 // pred_fallthru
      _
    // Predicated region
    $region22: #{_lambda_.1} parent=1 // pred_check
      _
    $region23: #{_lambda_.1} parent=1 // pred_check_branch
      %2504 = sbr.rel (0) target = $region25
    $region24: #{_lambda_.1} parent=1 // pred_region
      %2505 = dma.done [#allocation5], 128
    $region25: #{_lambda_.1} parent=1 // pred_fallthru
      _
    %2506 = vsyncpa [#allocation4], 1
    %2507 = vsyncpa [#allocation5], 1

// kernel: _lambda_.1
$region0: #{_lambda_.1}
  #allocation0 [shape = 'u32[]', space=smem, size = 0x4, offset = 0x4, fixed_abs, tag = 'smem constant byte address 0x4 - core index']
  #allocation1 [shape = 'u32[144,128]{1,0:T(1,128)}', space=vmem, size = 0x12000, scoped, tag = 'internal scratch']
  #allocation2 [shape = 'bf16[3,8,128]{2,1,0:T(8,128)(2,1)}', space=vmem, size = 0x1800, scoped, tag = 'scratch operand']
  %s0 = inlined_call_operand.vmem [shape: bf16[8,128], index: 0, kind: input, shape index: {}]
  %s1 = inlined_call_operand.hbm [shape: bf16[21,128,128], index: 1, kind: input, shape index: {}]
  %s2 = inlined_call_operand.vmem [shape: bf16[21,1,128], index: 2, kind: input, shape index: {}]
  %s3 = inlined_call_operand.hbm [shape: f32[8,128], index: 3, kind: output, shape index: {}]
  %s4 = sld [smem:[#allocation0]]
  $region26: #{_lambda_.1} parent=0
    _
  %s6 = ssub.s32 1, %s4
  %s7 = scalar_select 0, %s6, %s4
  $region1: #{_lambda_.1} parent=0
    #allocation3 [shape = 'u8[688128]{0}', space=vmem, size = 0xa8000, scoped, tag = 'input window, operand 1, single buffered']
    #allocation4 [shape = 's32[1]{0}', space=sflag, size = 0x4, scoped, tag = 'scoped memory for _lambda_.1']
    #allocation5 [shape = 's32[1]{0}', space=sflag, size = 0x4, scoped, tag = 'scoped memory for _lambda_.1']
    #allocation6 [shape = 'u8[4096]{0}', space=vmem, size = 0x1000, scoped, tag = 'output window, operand 0, single buffered']
    %8 = vsyncpa [#allocation4], 0
    %9 = vsyncpa [#allocation5], 0
    // Predicated region
    $region2: #{_lambda_.1} parent=1 // pred_check
      _
    $region3: #{_lambda_.1} parent=1 // pred_check_branch
      %11 = sbr.rel (0) target = $region5
    $region4: #{_lambda_.1} parent=1 // pred_region
      _
    $region5: #{_lambda_.1} parent=1 // pred_fallthru
      _
    // Predicated region
    $region6: #{_lambda_.1} parent=1 // pred_check
      _
    $region7: #{_lambda_.1} parent=1 // pred_check_branch
      %13 = sbr.rel (0) target = $region9
    $region8: #{_lambda_.1} parent=1 // pred_region
      %s15 = ssub.s32 21504, 21504
      %16 = vsyncadd [#allocation4], %s15
      %s17 = sshll.u32 [#allocation3], 4
      %s18 = int_to_ptr.vmem [resolvable:$true] %s17
      %23 = dma.hbm_to_vmem [thread:$0]  %s1, 21504, %s18, [#allocation4], 64, 64, 4
    $region9: #{_lambda_.1} parent=1 // pred_fallthru
      _
    // Predicated region
    $region10: #{_lambda_.1} parent=1 // pred_check
      _
    $region11: #{_lambda_.1} parent=1 // pred_check_branch
      %25 = sbr.rel (0) target = $region13
    $region12: #{_lambda_.1} parent=1 // pred_region
      _
    $region13: #{_lambda_.1} parent=1 // pred_fallthru
      _
    // Predicated region
    $region14: #{_lambda_.1} parent=1 // pred_check
      _
    $region15: #{_lambda_.1} parent=1 // pred_check_branch
      %27 = sbr.rel (0) target = $region17
    $region16: #{_lambda_.1} parent=1 // pred_region
      %28 = dma.done [#allocation4], 21504
    $region17: #{_lambda_.1} parent=1 // pred_fallthru
      _
    %v30 = vld [vmem:[%s0] sm:$0xf]
    %v31 = vld [vmem:[#allocation3] sm:$0xf]
    %v32 = vld [vmem:[#allocation3 + $0x4] sm:$0xf]
    %v33 = vld [vmem:[#allocation3 + $0x8] sm:$0xf]
    %v34 = vld [vmem:[#allocation3 + $0xc] sm:$0xf]
    %v35 = vld [vmem:[#allocation3 + $0x10] sm:$0xf]
    %v36 = vld [vmem:[#allocation3 + $0x14] sm:$0xf]
    %v37 = vld [vmem:[#allocation3 + $0x18] sm:$0xf]
    %v38 = vld [vmem:[#allocation3 + $0x1c] sm:$0xf]
    %v39 = vld [vmem:[#allocation3 + $0x20] sm:$0xf]
    %v40 = vld [vmem:[#allocation3 + $0x24] sm:$0xf]
    %v41 = vld [vmem:[#allocation3 + $0x28] sm:$0xf]
    %v42 = vld [vmem:[#allocation3 + $0x2c] sm:$0xf]
    %v43 = vld [vmem:[#allocation3 + $0x30] sm:$0xf]
    %v44 = vld [vmem:[#allocation3 + $0x34] sm:$0xf]
    %v45 = vld [vmem:[#allocation3 + $0x38] sm:$0xf]
    %v46 = vld [vmem:[#allocation3 + $0x3c] sm:$0xf]
    %v63 = vunpack.c.l.b16 %v31
    %v64 = vunpack.c.l.b16 %v32
    %v65 = vunpack.c.l.b16 %v33
    %v66 = vunpack.c.l.b16 %v34
    %v67 = vunpack.c.l.b16 %v35
    %v68 = vunpack.c.l.b16 %v36
    %v69 = vunpack.c.l.b16 %v37
    %v70 = vunpack.c.l.b16 %v38
    %v71 = vunpack.c.l.b16 %v39
    %v72 = vunpack.c.l.b16 %v40
    %v73 = vunpack.c.l.b16 %v41
    %v74 = vunpack.c.l.b16 %v42
    %v75 = vunpack.c.l.b16 %v43
    %v76 = vunpack.c.l.b16 %v44
    %v77 = vunpack.c.l.b16 %v45
    %v78 = vunpack.c.l.b16 %v46
    %v79 = vpack.c.b16 %v64, %v63
    %v80 = vpack.c.b16 %v66, %v65
    %v81 = vpack.c.b16 %v68, %v67
    %v82 = vpack.c.b16 %v70, %v69
    %v83 = vpack.c.b16 %v72, %v71
    %v84 = vpack.c.b16 %v74, %v73
    %v85 = vpack.c.b16 %v76, %v75
    %v86 = vpack.c.b16 %v78, %v77
    %95 = vmatprep.subr.bf16.mxu0 0
    %96 = vmatpush1.bf16.msra.mxu0 %v79
    %97 = vmatprep.subr.bf16.mxu0 0
    %98 = vmatpush1.bf16.msra.mxu0 %v80
    %99 = vmatprep.subr.bf16.mxu0 0
    %100 = vmatpush1.bf16.msra.mxu0 %v81
    %101 = vmatprep.subr.bf16.mxu0 0
    %102 = vmatpush1.bf16.msra.mxu0 %v82
    %103 = vmatprep.subr.bf16.mxu0 0
    %104 = vmatpush1.bf16.msra.mxu0 %v83
    %105 = vmatprep.subr.bf16.mxu0 0
    %106 = vmatpush1.bf16.msra.mxu0 %v84
    %107 = vmatprep.subr.bf16.mxu0 0
    %108 = vmatpush1.bf16.msra.mxu0 %v85
    %109 = vmatprep.subr.bf16.mxu0 0
    %110 = vmatpush1.bf16.msra.mxu0 %v86
    %111 = vmatprep.subr.bf16.mxu0 0
    %112 = vmatpush1.bf16.msra.mxu0 0
    %113 = vmatprep.subr.bf16.mxu0 0
    %114 = vmatpush1.bf16.msra.mxu0 0
    %115 = vmatprep.subr.bf16.mxu0 0
    %116 = vmatpush1.bf16.msra.mxu0 0
    %117 = vmatprep.subr.bf16.mxu0 0
    %118 = vmatpush1.bf16.msra.mxu0 0
    %119 = vmatprep.subr.bf16.mxu0 0
    %120 = vmatpush1.bf16.msra.mxu0 0
    %121 = vmatprep.subr.bf16.mxu0 0
    %122 = vmatpush1.bf16.msra.mxu0 0
    %123 = vmatprep.subr.bf16.mxu0 0
    %124 = vmatpush1.bf16.msra.mxu0 0
    %125 = vmatprep.subr.bf16.mxu0 0
    %126 = vmatpush1.bf16.msra.mxu0 0
    %127 = vmatprep.mubr.bf16.mxu0 0
    %128 = vmatmul.mubr.bf16.gmra.mrb[0].mxu0 %v30
    %v129 = vpop.f32.mrb[0].mxu0
    %v130 = vadd.f32 0.0, %v129
    %v131 = vpop.f32.mrb[0].mxu0
    %v132 = vpop.f32.mrb[0].mxu0
    %v133 = vpop.f32.mrb[0].mxu0
    %134 = vdwg.mxu0
    %v135 = vpack.c.bf16 %v130, %v130
    %v136 = vld [vmem:[%s2] sm:$0x1]
    %v138 = vpack.i.b16 %v136, %v136
    %v140 = vlaneseq
    %v141 = vshrl.u32 %v140, 7
    %v142 = vsub.s32 0, %v141
    %v143 = vrot.slane %v138, %v142
    %v144 = vadd.bf16 %v135, %v143
    %v145 = vmax.bf16 %v144, 0
    %s146 = scalar_lea.vmem [#allocation3], 64
    %v147 = vld [vmem:[%s146] sm:$0xf]
    %v148 = vld [vmem:[%s146 + $0x4] sm:$0xf]
    %v149 = vld [vmem:[%s146 + $0x8] sm:$0xf]
    %v150 = vld [vmem:[%s146 + $0xc] sm:$0xf]
    %v151 = vld [vmem:[%s146 + $0x10] sm:$0xf]
    %v152 = vld [vmem:[%s146 + $0x14] sm:$0xf]
    %v153 = vld [vmem:[%s146 + $0x18] sm:$0xf]
    %v154 = vld [vmem:[%s146 + $0x1c] sm:$0xf]
    %v155 = vld [vmem:[%s146 + $0x20] sm:$0xf]
    %v156 = vld [vmem:[%s146 + $0x24] sm:$0xf]
    %v157 = vld [vmem:[%s146 + $0x28] sm:$0xf]
    %v158 = vld [vmem:[%s146 + $0x2c] sm:$0xf]
    %v159 = vld [vmem:[%s146 + $0x30] sm:$0xf]
    %v160 = vld [vmem:[%s146 + $0x34] sm:$0xf]
    %v161 = vld [vmem:[%s146 + $0x38] sm:$0xf]
    %v162 = vld [vmem:[%s146 + $0x3c] sm:$0xf]
    %v179 = vunpack.c.l.b16 %v147
    %v180 = vunpack.c.l.b16 %v148
    %v181 = vunpack.c.l.b16 %v149
    %v182 = vunpack.c.l.b16 %v150
    %v183 = vunpack.c.l.b16 %v151
    %v184 = vunpack.c.l.b16 %v152
    %v185 = vunpack.c.l.b16 %v153
    %v186 = vunpack.c.l.b16 %v154
    %v187 = vunpack.c.l.b16 %v155
    %v188 = vunpack.c.l.b16 %v156
    %v189 = vunpack.c.l.b16 %v157
    %v190 = vunpack.c.l.b16 %v158
    %v191 = vunpack.c.l.b16 %v159
    %v192 = vunpack.c.l.b16 %v160
    %v193 = vunpack.c.l.b16 %v161
    %v194 = vunpack.c.l.b16 %v162
    %v195 = vpack.c.b16 %v180, %v179
    %v196 = vpack.c.b16 %v182, %v181
    %v197 = vpack.c.b16 %v184, %v183
    %v198 = vpack.c.b16 %v186, %v185
    %v199 = vpack.c.b16 %v188, %v187
    %v200 = vpack.c.b16 %v190, %v189
    %v201 = vpack.c.b16 %v192, %v191
    %v202 = vpack.c.b16 %v194, %v193
    %211 = vmatprep.subr.bf16.mxu0 0
    %212 = vmatpush1.bf16.msra.mxu0 %v195
    %213 = vmatprep.subr.bf16.mxu0 0
    %214 = vmatpush1.bf16.msra.mxu0 %v196
    %215 = vmatprep.subr.bf16.mxu0 0
    %216 = vmatpush1.bf16.msra.mxu0 %v197
    %217 = vmatprep.subr.bf16.mxu0 0
    %218 = vmatpush1.bf16.msra.mxu0 %v198
    %219 = vmatprep.subr.bf16.mxu0 0
    %220 = vmatpush1.bf16.msra.mxu0 %v199
    %221 = vmatprep.subr.bf16.mxu0 0
    %222 = vmatpush1.bf16.msra.mxu0 %v200
    %223 = vmatprep.subr.bf16.mxu0 0
    %224 = vmatpush1.bf16.msra.mxu0 %v201
    %225 = vmatprep.subr.bf16.mxu0 0
    %226 = vmatpush1.bf16.msra.mxu0 %v202
    %227 = vmatprep.subr.bf16.mxu0 0
    %228 = vmatpush1.bf16.msra.mxu0 0
    %229 = vmatprep.subr.bf16.mxu0 0
    %230 = vmatpush1.bf16.msra.mxu0 0
    %231 = vmatprep.subr.bf16.mxu0 0
    %232 = vmatpush1.bf16.msra.mxu0 0
    %233 = vmatprep.subr.bf16.mxu0 0
    %234 = vmatpush1.bf16.msra.mxu0 0
    %235 = vmatprep.subr.bf16.mxu0 0
    %236 = vmatpush1.bf16.msra.mxu0 0
    %237 = vmatprep.subr.bf16.mxu0 0
    %238 = vmatpush1.bf16.msra.mxu0 0
    %239 = vmatprep.subr.bf16.mxu0 0
    %240 = vmatpush1.bf16.msra.mxu0 0
    %241 = vmatprep.subr.bf16.mxu0 0
    %242 = vmatpush1.bf16.msra.mxu0 0
    %243 = vmatprep.mubr.bf16.mxu0 0
    %244 = vmatmul.mubr.bf16.gmra.mrb[0].mxu0 %v145
    %v245 = vpop.f32.mrb[0].mxu0
    %v246 = vadd.f32 0.0, %v245
    %v247 = vpop.f32.mrb[0].mxu0
    %v248 = vpop.f32.mrb[0].mxu0
    %v249 = vpop.f32.mrb[0].mxu0
    %250 = vdwg.mxu0
    %v251 = vpack.c.bf16 %v246, %v246
    %s252 = scalar_lea.vmem %s2, 1
    %v253 = vld [vmem:[%s252] sm:$0x1]
    %v255 = vpack.i.b16 %v253, %v253
    %v257 = vlaneseq
    %v258 = vshrl.u32 %v257, 7
    %v259 = vsub.s32 0, %v258
    %v260 = vrot.slane %v255, %v259
    %v261 = vadd.bf16 %v251, %v260
    %v262 = vmax.bf16 %v261, 0
    %s263 = scalar_lea.vmem [#allocation3], 128
    %v264 = vld [vmem:[%s263] sm:$0xf]
    %v265 = vld [vmem:[%s263 + $0x4] sm:$0xf]
    %v266 = vld [vmem:[%s263 + $0x8] sm:$0xf]
    %v267 = vld [vmem:[%s263 + $0xc] sm:$0xf]
    %v268 = vld [vmem:[%s263 + $0x10] sm:$0xf]
    %v269 = vld [vmem:[%s263 + $0x14] sm:$0xf]
    %v270 = vld [vmem:[%s263 + $0x18] sm:$0xf]
    %v271 = vld [vmem:[%s263 + $0x1c] sm:$0xf]
    %v272 = vld [vmem:[%s263 + $0x20] sm:$0xf]
    %v273 = vld [vmem:[%s263 + $0x24] sm:$0xf]
    %v274 = vld [vmem:[%s263 + $0x28] sm:$0xf]
    %v275 = vld [vmem:[%s263 + $0x2c] sm:$0xf]
    %v276 = vld [vmem:[%s263 + $0x30] sm:$0xf]
    %v277 = vld [vmem:[%s263 + $0x34] sm:$0xf]
    %v278 = vld [vmem:[%s263 + $0x38] sm:$0xf]
    %v279 = vld [vmem:[%s263 + $0x3c] sm:$0xf]
    %v296 = vunpack.c.l.b16 %v264
    %v297 = vunpack.c.l.b16 %v265
    %v298 = vunpack.c.l.b16 %v266
    %v299 = vunpack.c.l.b16 %v267
    %v300 = vunpack.c.l.b16 %v268
    %v301 = vunpack.c.l.b16 %v269
    %v302 = vunpack.c.l.b16 %v270
    %v303 = vunpack.c.l.b16 %v271
    %v304 = vunpack.c.l.b16 %v272
    %v305 = vunpack.c.l.b16 %v273
    %v306 = vunpack.c.l.b16 %v274
    %v307 = vunpack.c.l.b16 %v275
    %v308 = vunpack.c.l.b16 %v276
    %v309 = vunpack.c.l.b16 %v277
    %v310 = vunpack.c.l.b16 %v278
    %v311 = vunpack.c.l.b16 %v279
    %v312 = vpack.c.b16 %v297, %v296
    %v313 = vpack.c.b16 %v299, %v298
    %v314 = vpack.c.b16 %v301, %v300
    %v315 = vpack.c.b16 %v303, %v302
    %v316 = vpack.c.b16 %v305, %v304
    %v317 = vpack.c.b16 %v307, %v306
    %v318 = vpack.c.b16 %v309, %v308
    %v319 = vpack.c.b16 %v311, %v310
    %328 = vmatprep.subr.bf16.mxu0 0
    %329 = vmatpush1.bf16.msra.mxu0 %v312
    %330 = vmatprep.subr.bf16.mxu0 0
    %331 = vmatpush1.bf16.msra.mxu0 %v313
    %332 = vmatprep.subr.bf16.mxu0 0
    %333 = vmatpush1.bf16.msra.mxu0 %v314
    %334 = vmatprep.subr.bf16.mxu0 0
    %335 = vmatpush1.bf16.msra.mxu0 %v315
    %336 = vmatprep.subr.bf16.mxu0 0
    %337 = vmatpush1.bf16.msra.mxu0 %v316
    %338 = vmatprep.subr.bf16.mxu0 0
    %339 = vmatpush1.bf16.msra.mxu0 %v317
    %340 = vmatprep.subr.bf16.mxu0 0
    %341 = vmatpush1.bf16.msra.mxu0 %v318
    %342 = vmatprep.subr.bf16.mxu0 0
    %343 = vmatpush1.bf16.msra.mxu0 %v319
    %344 = vmatprep.subr.bf16.mxu0 0
    %345 = vmatpush1.bf16.msra.mxu0 0
    %346 = vmatprep.subr.bf16.mxu0 0
    %347 = vmatpush1.bf16.msra.mxu0 0
    %348 = vmatprep.subr.bf16.mxu0 0
    %349 = vmatpush1.bf16.msra.mxu0 0
    %350 = vmatprep.subr.bf16.mxu0 0
    %351 = vmatpush1.bf16.msra.mxu0 0
    %352 = vmatprep.subr.bf16.mxu0 0
    %353 = vmatpush1.bf16.msra.mxu0 0
    %354 = vmatprep.subr.bf16.mxu0 0
    %355 = vmatpush1.bf16.msra.mxu0 0
    %356 = vmatprep.subr.bf16.mxu0 0
    %357 = vmatpush1.bf16.msra.mxu0 0
    %358 = vmatprep.subr.bf16.mxu0 0
    %359 = vmatpush1.bf16.msra.mxu0 0
    %360 = vmatprep.mubr.bf16.mxu0 0
    %361 = vmatmul.mubr.bf16.gmra.mrb[0].mxu0 %v262
    %v362 = vpop.f32.mrb[0].mxu0
    %v363 = vadd.f32 0.0, %v362
    %v364 = vpop.f32.mrb[0].mxu0
    %v365 = vpop.f32.mrb[0].mxu0
    %v366 = vpop.f32.mrb[0].mxu0
    %367 = vdwg.mxu0
    %v368 = vpack.c.bf16 %v363, %v363
    %s369 = scalar_lea.vmem %s2, 2
    %v370 = vld [vmem:[%s369] sm:$0x1]
    %v372 = vpack.i.b16 %v370, %v370
    %v374 = vlaneseq
    %v375 = vshrl.u32 %v374, 7
    %v376 = vsub.s32 0, %v375
    %v377 = vrot.slane %v372, %v376
    %v378 = vadd.bf16 %v368, %v377
    %v379 = vmax.bf16 %v378, 0
    %380 = vst [vmem:[#allocation2] sm:$0xf] %v379
    %s381 = scalar_lea.vmem [#allocation3], 192
    %v382 = vld [vmem:[%s381] sm:$0xf]
    %v383 = vld [vmem:[%s381 + $0x4] sm:$0xf]
    %v384 = vld [vmem:[%s381 + $0x8] sm:$0xf]
    %v385 = vld [vmem:[%s381 + $0xc] sm:$0xf]
    %v386 = vld [vmem:[%s381 + $0x10] sm:$0xf]
    %v387 = vld [vmem:[%s381 + $0x14] sm:$0xf]
    %v388 = vld [vmem:[%s381 + $0x18] sm:$0xf]
    %v389 = vld [vmem:[%s381 + $0x1c] sm:$0xf]
    %v390 = vld [vmem:[%s381 + $0x20] sm:$0xf]
    %v391 = vld [vmem:[%s381 + $0x24] sm:$0xf]
    %v392 = vld [vmem:[%s381 + $0x28] sm:$0xf]
    %v393 = vld [vmem:[%s381 + $0x2c] sm:$0xf]
    %v394 = vld [vmem:[%s381 + $0x30] sm:$0xf]
    %v395 = vld [vmem:[%s381 + $0x34] sm:$0xf]
    %v396 = vld [vmem:[%s381 + $0x38] sm:$0xf]
    %v397 = vld [vmem:[%s381 + $0x3c] sm:$0xf]
    %v414 = vunpack.c.l.b16 %v382
    %v415 = vunpack.c.l.b16 %v383
    %v416 = vunpack.c.l.b16 %v384
    %v417 = vunpack.c.l.b16 %v385
    %v418 = vunpack.c.l.b16 %v386
    %v419 = vunpack.c.l.b16 %v387
    %v420 = vunpack.c.l.b16 %v388
    %v421 = vunpack.c.l.b16 %v389
    %v422 = vunpack.c.l.b16 %v390
    %v423 = vunpack.c.l.b16 %v391
    %v424 = vunpack.c.l.b16 %v392
    %v425 = vunpack.c.l.b16 %v393
    %v426 = vunpack.c.l.b16 %v394
    %v427 = vunpack.c.l.b16 %v395
    %v428 = vunpack.c.l.b16 %v396
    %v429 = vunpack.c.l.b16 %v397
    %v430 = vpack.c.b16 %v415, %v414
    %v431 = vpack.c.b16 %v417, %v416
    %v432 = vpack.c.b16 %v419, %v418
    %v433 = vpack.c.b16 %v421, %v420
    %v434 = vpack.c.b16 %v423, %v422
    %v435 = vpack.c.b16 %v425, %v424
    %v436 = vpack.c.b16 %v427, %v426
    %v437 = vpack.c.b16 %v429, %v428
    %446 = vmatprep.subr.bf16.mxu0 0
    %447 = vmatpush1.bf16.msra.mxu0 %v430
    %448 = vmatprep.subr.bf16.mxu0 0
    %449 = vmatpush1.bf16.msra.mxu0 %v431
    %450 = vmatprep.subr.bf16.mxu0 0
    %451 = vmatpush1.bf16.msra.mxu0 %v432
    %452 = vmatprep.subr.bf16.mxu0 0
    %453 = vmatpush1.bf16.msra.mxu0 %v433
    %454 = vmatprep.subr.bf16.mxu0 0
    %455 = vmatpush1.bf16.msra.mxu0 %v434
    %456 = vmatprep.subr.bf16.mxu0 0
    %457 = vmatpush1.bf16.msra.mxu0 %v435
    %458 = vmatprep.subr.bf16.mxu0 0
    %459 = vmatpush1.bf16.msra.mxu0 %v436
    %460 = vmatprep.subr.bf16.mxu0 0
    %461 = vmatpush1.bf16.msra.mxu0 %v437
    %462 = vmatprep.subr.bf16.mxu0 0
    %463 = vmatpush1.bf16.msra.mxu0 0
    %464 = vmatprep.subr.bf16.mxu0 0
    %465 = vmatpush1.bf16.msra.mxu0 0
    %466 = vmatprep.subr.bf16.mxu0 0
    %467 = vmatpush1.bf16.msra.mxu0 0
    %468 = vmatprep.subr.bf16.mxu0 0
    %469 = vmatpush1.bf16.msra.mxu0 0
    %470 = vmatprep.subr.bf16.mxu0 0
    %471 = vmatpush1.bf16.msra.mxu0 0
    %472 = vmatprep.subr.bf16.mxu0 0
    %473 = vmatpush1.bf16.msra.mxu0 0
    %474 = vmatprep.subr.bf16.mxu0 0
    %475 = vmatpush1.bf16.msra.mxu0 0
    %476 = vmatprep.subr.bf16.mxu0 0
    %477 = vmatpush1.bf16.msra.mxu0 0
    %478 = vmatprep.mubr.bf16.mxu0 0
    %479 = vmatmul.mubr.bf16.gmra.mrb[0].mxu0 %v379
    %v480 = vpop.f32.mrb[0].mxu0
    %v481 = vadd.f32 0.0, %v480
    %v482 = vpop.f32.mrb[0].mxu0
    %v483 = vpop.f32.mrb[0].mxu0
    %v484 = vpop.f32.mrb[0].mxu0
    %485 = vdwg.mxu0
    %v486 = vpack.c.bf16 %v481, %v481
    %s487 = scalar_lea.vmem %s2, 3
    %v488 = vld [vmem:[%s487] sm:$0x1]
    %v490 = vpack.i.b16 %v488, %v488
    %v492 = vlaneseq
    %v493 = vshrl.u32 %v492, 7
    %v494 = vsub.s32 0, %v493
    %v495 = vrot.slane %v490, %v494
    %v496 = vadd.bf16 %v486, %v495
    %v497 = vmax.bf16 %v496, 0
    %s498 = scalar_lea.vmem [#allocation3], 256
    %v499 = vld [vmem:[%s498] sm:$0xf]
    %v500 = vld [vmem:[%s498 + $0x4] sm:$0xf]
    %v501 = vld [vmem:[%s498 + $0x8] sm:$0xf]
    %v502 = vld [vmem:[%s498 + $0xc] sm:$0xf]
    %v503 = vld [vmem:[%s498 + $0x10] sm:$0xf]
    %v504 = vld [vmem:[%s498 + $0x14] sm:$0xf]
    %v505 = vld [vmem:[%s498 + $0x18] sm:$0xf]
    %v506 = vld [vmem:[%s498 + $0x1c] sm:$0xf]
    %v507 = vld [vmem:[%s498 + $0x20] sm:$0xf]
    %v508 = vld [vmem:[%s498 + $0x24] sm:$0xf]
    %v509 = vld [vmem:[%s498 + $0x28] sm:$0xf]
    %v510 = vld [vmem:[%s498 + $0x2c] sm:$0xf]
    %v511 = vld [vmem:[%s498 + $0x30] sm:$0xf]
    %v512 = vld [vmem:[%s498 + $0x34] sm:$0xf]
    %v513 = vld [vmem:[%s498 + $0x38] sm:$0xf]
    %v514 = vld [vmem:[%s498 + $0x3c] sm:$0xf]
    %v531 = vunpack.c.l.b16 %v499
    %v532 = vunpack.c.l.b16 %v500
    %v533 = vunpack.c.l.b16 %v501
    %v534 = vunpack.c.l.b16 %v502
    %v535 = vunpack.c.l.b16 %v503
    %v536 = vunpack.c.l.b16 %v504
    %v537 = vunpack.c.l.b16 %v505
    %v538 = vunpack.c.l.b16 %v506
    %v539 = vunpack.c.l.b16 %v507
    %v540 = vunpack.c.l.b16 %v508
    %v541 = vunpack.c.l.b16 %v509
    %v542 = vunpack.c.l.b16 %v510
    %v543 = vunpack.c.l.b16 %v511
    %v544 = vunpack.c.l.b16 %v512
    %v545 = vunpack.c.l.b16 %v513
    %v546 = vunpack.c.l.b16 %v514
    %v547 = vpack.c.b16 %v532, %v531
    %v548 = vpack.c.b16 %v534, %v533
    %v549 = vpack.c.b16 %v536, %v535
    %v550 = vpack.c.b16 %v538, %v537
    %v551 = vpack.c.b16 %v540, %v539
    %v552 = vpack.c.b16 %v542, %v541
    %v553 = vpack.c.b16 %v544, %v543
    %v554 = vpack.c.b16 %v546, %v545
    %563 = vmatprep.subr.bf16.mxu0 0
    %564 = vmatpush1.bf16.msra.mxu0 %v547
    %565 = vmatprep.subr.bf16.mxu0 0
    %566 = vmatpush1.bf16.msra.mxu0 %v548
    %567 = vmatprep.subr.bf16.mxu0 0
    %568 = vmatpush1.bf16.msra.mxu0 %v549
    %569 = vmatprep.subr.bf16.mxu0 0
    %570 = vmatpush1.bf16.msra.mxu0 %v550
    %571 = vmatprep.subr.bf16.mxu0 0
    %572 = vmatpush1.bf16.msra.mxu0 %v551
    %573 = vmatprep.subr.bf16.mxu0 0
    %574 = vmatpush1.bf16.msra.mxu0 %v552
    %575 = vmatprep.subr.bf16.mxu0 0
    %576 = vmatpush1.bf16.msra.mxu0 %v553
    %577 = vmatprep.subr.bf16.mxu0 0
    %578 = vmatpush1.bf16.msra.mxu0 %v554
    %579 = vmatprep.subr.bf16.mxu0 0
    %580 = vmatpush1.bf16.msra.mxu0 0
    %581 = vmatprep.subr.bf16.mxu0 0
    %582 = vmatpush1.bf16.msra.mxu0 0
    %583 = vmatprep.subr.bf16.mxu0 0
    %584 = vmatpush1.bf16.msra.mxu0 0
    %585 = vmatprep.subr.bf16.mxu0 0
    %586 = vmatpush1.bf16.msra.mxu0 0
    %587 = vmatprep.subr.bf16.mxu0 0
    %588 = vmatpush1.bf16.msra.mxu0 0
    %589 = vmatprep.subr.bf16.mxu0 0
    %590 = vmatpush1.bf16.msra.mxu0 0
    %591 = vmatprep.subr.bf16.mxu0 0
    %592 = vmatpush1.bf16.msra.mxu0 0
    %593 = vmatprep.subr.bf16.mxu0 0
    %594 = vmatpush1.bf16.msra.mxu0 0
    %595 = vmatprep.mubr.bf16.mxu0 0
    %596 = vmatmul.mubr.bf16.gmra.mrb[0].mxu0 %v497
    %v597 = vpop.f32.mrb[0].mxu0
    %v598 = vadd.f32 0.0, %v597
    %v599 = vpop.f32.mrb[0].mxu0
    %v600 = vpop.f32.mrb[0].mxu0
    %v601 = vpop.f32.mrb[0].mxu0
    %602 = vdwg.mxu0
    %v603 = vpack.c.bf16 %v598, %v598
    %s604 = scalar_lea.vmem %s2, 4
    %v605 = vld [vmem:[%s604] sm:$0x1]
    %v607 = vpack.i.b16 %v605, %v605
    %v609 = vlaneseq
    %v610 = vshrl.u32 %v609, 7
    %v611 = vsub.s32 0, %v610
    %v612 = vrot.slane %v607, %v611
    %v613 = vadd.bf16 %v603, %v612
    %v614 = vmax.bf16 %v613, 0
    %s615 = scalar_lea.vmem [#allocation3], 320
    %v616 = vld [vmem:[%s615] sm:$0xf]
    %v617 = vld [vmem:[%s615 + $0x4] sm:$0xf]
    %v618 = vld [vmem:[%s615 + $0x8] sm:$0xf]
    %v619 = vld [vmem:[%s615 + $0xc] sm:$0xf]
    %v620 = vld [vmem:[%s615 + $0x10] sm:$0xf]
    %v621 = vld [vmem:[%s615 + $0x14] sm:$0xf]
    %v622 = vld [vmem:[%s615 + $0x18] sm:$0xf]
    %v623 = vld [vmem:[%s615 + $0x1c] sm:$0xf]
    %v624 = vld [vmem:[%s615 + $0x20] sm:$0xf]
    %v625 = vld [vmem:[%s615 + $0x24] sm:$0xf]
    %v626 = vld [vmem:[%s615 + $0x28] sm:$0xf]
    %v627 = vld [vmem:[%s615 + $0x2c] sm:$0xf]
    %v628 = vld [vmem:[%s615 + $0x30] sm:$0xf]
    %v629 = vld [vmem:[%s615 + $0x34] sm:$0xf]
    %v630 = vld [vmem:[%s615 + $0x38] sm:$0xf]
    %v631 = vld [vmem:[%s615 + $0x3c] sm:$0xf]
    %v648 = vunpack.c.l.b16 %v616
    %v649 = vunpack.c.l.b16 %v617
    %v650 = vunpack.c.l.b16 %v618
    %v651 = vunpack.c.l.b16 %v619
    %v652 = vunpack.c.l.b16 %v620
    %v653 = vunpack.c.l.b16 %v621
    %v654 = vunpack.c.l.b16 %v622
    %v655 = vunpack.c.l.b16 %v623
    %v656 = vunpack.c.l.b16 %v624
    %v657 = vunpack.c.l.b16 %v625
    %v658 = vunpack.c.l.b16 %v626
    %v659 = vunpack.c.l.b16 %v627
    %v660 = vunpack.c.l.b16 %v628
    %v661 = vunpack.c.l.b16 %v629
    %v662 = vunpack.c.l.b16 %v630
    %v663 = vunpack.c.l.b16 %v631
    %v664 = vpack.c.b16 %v649, %v648
    %v665 = vpack.c.b16 %v651, %v650
    %v666 = vpack.c.b16 %v653, %v652
    %v667 = vpack.c.b16 %v655, %v654
    %v668 = vpack.c.b16 %v657, %v656
    %v669 = vpack.c.b16 %v659, %v658
    %v670 = vpack.c.b16 %v661, %v660
    %v671 = vpack.c.b16 %v663, %v662
    %680 = vmatprep.subr.bf16.mxu0 0
    %681 = vmatpush1.bf16.msra.mxu0 %v664
    %682 = vmatprep.subr.bf16.mxu0 0
    %683 = vmatpush1.bf16.msra.mxu0 %v665
    %684 = vmatprep.subr.bf16.mxu0 0
    %685 = vmatpush1.bf16.msra.mxu0 %v666
    %686 = vmatprep.subr.bf16.mxu0 0
    %687 = vmatpush1.bf16.msra.mxu0 %v667
    %688 = vmatprep.subr.bf16.mxu0 0
    %689 = vmatpush1.bf16.msra.mxu0 %v668
    %690 = vmatprep.subr.bf16.mxu0 0
    %691 = vmatpush1.bf16.msra.mxu0 %v669
    %692 = vmatprep.subr.bf16.mxu0 0
    %693 = vmatpush1.bf16.msra.mxu0 %v670
    %694 = vmatprep.subr.bf16.mxu0 0
    %695 = vmatpush1.bf16.msra.mxu0 %v671
    %696 = vmatprep.subr.bf16.mxu0 0
    %697 = vmatpush1.bf16.msra.mxu0 0
    %698 = vmatprep.subr.bf16.mxu0 0
    %699 = vmatpush1.bf16.msra.mxu0 0
    %700 = vmatprep.subr.bf16.mxu0 0
    %701 = vmatpush1.bf16.msra.mxu0 0
    %702 = vmatprep.subr.bf16.mxu0 0
    %703 = vmatpush1.bf16.msra.mxu0 0
    %704 = vmatprep.subr.bf16.mxu0 0
    %705 = vmatpush1.bf16.msra.mxu0 0
    %706 = vmatprep.subr.bf16.mxu0 0
    %707 = vmatpush1.bf16.msra.mxu0 0
    %708 = vmatprep.subr.bf16.mxu0 0
    %709 = vmatpush1.bf16.msra.mxu0 0
    %710 = vmatprep.subr.bf16.mxu0 0
    %711 = vmatpush1.bf16.msra.mxu0 0
    %712 = vmatprep.mubr.bf16.mxu0 0
    %713 = vmatmul.mubr.bf16.gmra.mrb[0].mxu0 %v614
    %v714 = vpop.f32.mrb[0].mxu0
    %v715 = vadd.f32 0.0, %v714
    %v716 = vpop.f32.mrb[0].mxu0
    %v717 = vpop.f32.mrb[0].mxu0
    %v718 = vpop.f32.mrb[0].mxu0
    %719 = vdwg.mxu0
    %v720 = vpack.c.bf16 %v715, %v715
    %s721 = scalar_lea.vmem %s2, 5
    %v722 = vld [vmem:[%s721] sm:$0x1]
    %v724 = vpack.i.b16 %v722, %v722
    %v726 = vlaneseq
    %v727 = vshrl.u32 %v726, 7
    %v728 = vsub.s32 0, %v727
    %v729 = vrot.slane %v724, %v728
    %v730 = vadd.bf16 %v720, %v729
    %v731 = vmax.bf16 %v730, 0
    %s732 = scalar_lea.vmem [#allocation2], 4
    %733 = vst [vmem:[%s732] sm:$0xf] %v731
    %s734 = scalar_lea.vmem [#allocation3], 384
    %v735 = vld [vmem:[%s734] sm:$0xf]
    %v736 = vld [vmem:[%s734 + $0x4] sm:$0xf]
    %v737 = vld [vmem:[%s734 + $0x8] sm:$0xf]
    %v738 = vld [vmem:[%s734 + $0xc] sm:$0xf]
    %v739 = vld [vmem:[%s734 + $0x10] sm:$0xf]
    %v740 = vld [vmem:[%s734 + $0x14] sm:$0xf]
    %v741 = vld [vmem:[%s734 + $0x18] sm:$0xf]
    %v742 = vld [vmem:[%s734 + $0x1c] sm:$0xf]
    %v743 = vld [vmem:[%s734 + $0x20] sm:$0xf]
    %v744 = vld [vmem:[%s734 + $0x24] sm:$0xf]
    %v745 = vld [vmem:[%s734 + $0x28] sm:$0xf]
    %v746 = vld [vmem:[%s734 + $0x2c] sm:$0xf]
    %v747 = vld [vmem:[%s734 + $0x30] sm:$0xf]
    %v748 = vld [vmem:[%s734 + $0x34] sm:$0xf]
    %v749 = vld [vmem:[%s734 + $0x38] sm:$0xf]
    %v750 = vld [vmem:[%s734 + $0x3c] sm:$0xf]
    %v767 = vunpack.c.l.b16 %v735
    %v768 = vunpack.c.l.b16 %v736
    %v769 = vunpack.c.l.b16 %v737
    %v770 = vunpack.c.l.b16 %v738
    %v771 = vunpack.c.l.b16 %v739
    %v772 = vunpack.c.l.b16 %v740
    %v773 = vunpack.c.l.b16 %v741
    %v774 = vunpack.c.l.b16 %v742
    %v775 = vunpack.c.l.b16 %v743
    %v776 = vunpack.c.l.b16 %v744
    %v777 = vunpack.c.l.b16 %v745
    %v778 = vunpack.c.l.b16 %v746
    %v779 = vunpack.c.l.b16 %v747
    %v780 = vunpack.c.l.b16 %v748
    %v781 = vunpack.c.l.b16 %v749
    %v782 = vunpack.c.l.b16 %v750
    %v783 = vpack.c.b16 %v768, %v767
    %v784 = vpack.c.b16 %v770, %v769
    %v785 = vpack.c.b16 %v772, %v771
    %v786 = vpack.c.b16 %v774, %v773
    %v787 = vpack.c.b16 %v776, %v775
    %v788 = vpack.c.b16 %v778, %v777
    %v789 = vpack.c.b16 %v780, %v779
    %v790 = vpack.c.b16 %v782, %v781
    %799 = vmatprep.subr.bf16.mxu0 0
    %800 = vmatpush1.bf16.msra.mxu0 %v783
    %801 = vmatprep.subr.bf16.mxu0 0
    %802 = vmatpush1.bf16.msra.mxu0 %v784
    %803 = vmatprep.subr.bf16.mxu0 0
    %804 = vmatpush1.bf16.msra.mxu0 %v785
    %805 = vmatprep.subr.bf16.mxu0 0
    %806 = vmatpush1.bf16.msra.mxu0 %v786
    %807 = vmatprep.subr.bf16.mxu0 0
    %808 = vmatpush1.bf16.msra.mxu0 %v787
    %809 = vmatprep.subr.bf16.mxu0 0
    %810 = vmatpush1.bf16.msra.mxu0 %v788
    %811 = vmatprep.subr.bf16.mxu0 0
    %812 = vmatpush1.bf16.msra.mxu0 %v789
    %813 = vmatprep.subr.bf16.mxu0 0
    %814 = vmatpush1.bf16.msra.mxu0 %v790
    %815 = vmatprep.subr.bf16.mxu0 0
    %816 = vmatpush1.bf16.msra.mxu0 0
    %817 = vmatprep.subr.bf16.mxu0 0
    %818 = vmatpush1.bf16.msra.mxu0 0
    %819 = vmatprep.subr.bf16.mxu0 0
    %820 = vmatpush1.bf16.msra.mxu0 0
    %821 = vmatprep.subr.bf16.mxu0 0
    %822 = vmatpush1.bf16.msra.mxu0 0
    %823 = vmatprep.subr.bf16.mxu0 0
    %824 = vmatpush1.bf16.msra.mxu0 0
    %825 = vmatprep.subr.bf16.mxu0 0
    %826 = vmatpush1.bf16.msra.mxu0 0
    %827 = vmatprep.subr.bf16.mxu0 0
    %828 = vmatpush1.bf16.msra.mxu0 0
    %829 = vmatprep.subr.bf16.mxu0 0
    %830 = vmatpush1.bf16.msra.mxu0 0
    %831 = vmatprep.mubr.bf16.mxu0 0
    %832 = vmatmul.mubr.bf16.gmra.mrb[0].mxu0 %v731
    %v833 = vpop.f32.mrb[0].mxu0
    %v834 = vadd.f32 0.0, %v833
    %v835 = vpop.f32.mrb[0].mxu0
    %v836 = vpop.f32.mrb[0].mxu0
    %v837 = vpop.f32.mrb[0].mxu0
    %838 = vdwg.mxu0
    %v839 = vpack.c.bf16 %v834, %v834
    %s840 = scalar_lea.vmem %s2, 6
    %v841 = vld [vmem:[%s840] sm:$0x1]
    %v843 = vpack.i.b16 %v841, %v841
    %v845 = vlaneseq
    %v846 = vshrl.u32 %v845, 7
    %v847 = vsub.s32 0, %v846
    %v848 = vrot.slane %v843, %v847
    %v849 = vadd.bf16 %v839, %v848
    %v850 = vmax.bf16 %v849, 0
    %s851 = scalar_lea.vmem [#allocation3], 448
    %v852 = vld [vmem:[%s851] sm:$0xf]
    %v853 = vld [vmem:[%s851 + $0x4] sm:$0xf]
    %v854 = vld [vmem:[%s851 + $0x8] sm:$0xf]
    %v855 = vld [vmem:[%s851 + $0xc] sm:$0xf]
    %v856 = vld [vmem:[%s851 + $0x10] sm:$0xf]
    %v857 = vld [vmem:[%s851 + $0x14] sm:$0xf]
    %v858 = vld [vmem:[%s851 + $0x18] sm:$0xf]
    %v859 = vld [vmem:[%s851 + $0x1c] sm:$0xf]
    %v860 = vld [vmem:[%s851 + $0x20] sm:$0xf]
    %v861 = vld [vmem:[%s851 + $0x24] sm:$0xf]
    %v862 = vld [vmem:[%s851 + $0x28] sm:$0xf]
    %v863 = vld [vmem:[%s851 + $0x2c] sm:$0xf]
    %v864 = vld [vmem:[%s851 + $0x30] sm:$0xf]
    %v865 = vld [vmem:[%s851 + $0x34] sm:$0xf]
    %v866 = vld [vmem:[%s851 + $0x38] sm:$0xf]
    %v867 = vld [vmem:[%s851 + $0x3c] sm:$0xf]
    %v884 = vunpack.c.l.b16 %v852
    %v885 = vunpack.c.l.b16 %v853
    %v886 = vunpack.c.l.b16 %v854
    %v887 = vunpack.c.l.b16 %v855
    %v888 = vunpack.c.l.b16 %v856
    %v889 = vunpack.c.l.b16 %v857
    %v890 = vunpack.c.l.b16 %v858
    %v891 = vunpack.c.l.b16 %v859
    %v892 = vunpack.c.l.b16 %v860
    %v893 = vunpack.c.l.b16 %v861
    %v894 = vunpack.c.l.b16 %v862
    %v895 = vunpack.c.l.b16 %v863
    %v896 = vunpack.c.l.b16 %v864
    %v897 = vunpack.c.l.b16 %v865
    %v898 = vunpack.c.l.b16 %v866
    %v899 = vunpack.c.l.b16 %v867
    %v900 = vpack.c.b16 %v885, %v884
    %v901 = vpack.c.b16 %v887, %v886
    %v902 = vpack.c.b16 %v889, %v888
    %v903 = vpack.c.b16 %v891, %v890
    %v904 = vpack.c.b16 %v893, %v892
    %v905 = vpack.c.b16 %v895, %v894
    %v906 = vpack.c.b16 %v897, %v896
    %v907 = vpack.c.b16 %v899, %v898
    %916 = vmatprep.subr.bf16.mxu0 0
    %917 = vmatpush1.bf16.msra.mxu0 %v900
    %918 = vmatprep.subr.bf16.mxu0 0
    %919 = vmatpush1.bf16.msra.mxu0 %v901
    %920 = vmatprep.subr.bf16.mxu0 0
    %921 = vmatpush1.bf16.msra.mxu0 %v902
    %922 = vmatprep.subr.bf16.mxu0 0
    %923 = vmatpush1.bf16.msra.mxu0 %v903
    %924 = vmatprep.subr.bf16.mxu0 0
    %925 = vmatpush1.bf16.msra.mxu0 %v904
    %926 = vmatprep.subr.bf16.mxu0 0
    %927 = vmatpush1.bf16.msra.mxu0 %v905
    %928 = vmatprep.subr.bf16.mxu0 0
    %929 = vmatpush1.bf16.msra.mxu0 %v906
    %930 = vmatprep.subr.bf16.mxu0 0
    %931 = vmatpush1.bf16.msra.mxu0 %v907
    %932 = vmatprep.subr.bf16.mxu0 0
    %933 = vmatpush1.bf16.msra.mxu0 0
    %934 = vmatprep.subr.bf16.mxu0 0
    %935 = vmatpush1.bf16.msra.mxu0 0
    %936 = vmatprep.subr.bf16.mxu0 0
    %937 = vmatpush1.bf16.msra.mxu0 0
    %938 = vmatprep.subr.bf16.mxu0 0
    %939 = vmatpush1.bf16.msra.mxu0 0
    %940 = vmatprep.subr.bf16.mxu0 0
    %941 = vmatpush1.bf16.msra.mxu0 0
    %942 = vmatprep.subr.bf16.mxu0 0
    %943 = vmatpush1.bf16.msra.mxu0 0
    %944 = vmatprep.subr.bf16.mxu0 0
    %945 = vmatpush1.bf16.msra.mxu0 0
    %946 = vmatprep.subr.bf16.mxu0 0
    %947 = vmatpush1.bf16.msra.mxu0 0
    %948 = vmatprep.mubr.bf16.mxu0 0
    %949 = vmatmul.mubr.bf16.gmra.mrb[0].mxu0 %v850
    %v950 = vpop.f32.mrb[0].mxu0
    %v951 = vadd.f32 0.0, %v950
    %v952 = vpop.f32.mrb[0].mxu0
    %v953 = vpop.f32.mrb[0].mxu0
    %v954 = vpop.f32.mrb[0].mxu0
    %955 = vdwg.mxu0
    %v956 = vpack.c.bf16 %v951, %v951
    %s957 = scalar_lea.vmem %s2, 7
    %v958 = vld [vmem:[%s957] sm:$0x1]
    %v960 = vpack.i.b16 %v958, %v958
    %v962 = vlaneseq
    %v963 = vshrl.u32 %v962, 7
    %v964 = vsub.s32 0, %v963
    %v965 = vrot.slane %v960, %v964
    %v966 = vadd.bf16 %v956, %v965
    %v967 = vmax.bf16 %v966, 0
    %s968 = scalar_lea.vmem [#allocation3], 512
    %v969 = vld [vmem:[%s968] sm:$0xf]
    %v970 = vld [vmem:[%s968 + $0x4] sm:$0xf]
    %v971 = vld [vmem:[%s968 + $0x8] sm:$0xf]
    %v972 = vld [vmem:[%s968 + $0xc] sm:$0xf]
    %v973 = vld [vmem:[%s968 + $0x10] sm:$0xf]
    %v974 = vld [vmem:[%s968 + $0x14] sm:$0xf]
    %v975 = vld [vmem:[%s968 + $0x18] sm:$0xf]
    %v976 = vld [vmem:[%s968 + $0x1c] sm:$0xf]
    %v977 = vld [vmem:[%s968 + $0x20] sm:$0xf]
    %v978 = vld [vmem:[%s968 + $0x24] sm:$0xf]
    %v979 = vld [vmem:[%s968 + $0x28] sm:$0xf]
    %v980 = vld [vmem:[%s968 + $0x2c] sm:$0xf]
    %v981 = vld [vmem:[%s968 + $0x30] sm:$0xf]
    %v982 = vld [vmem:[%s968 + $0x34] sm:$0xf]
    %v983 = vld [vmem:[%s968 + $0x38] sm:$0xf]
    %v984 = vld [vmem:[%s968 + $0x3c] sm:$0xf]
    %v1001 = vunpack.c.l.b16 %v969
    %v1002 = vunpack.c.l.b16 %v970
    %v1003 = vunpack.c.l.b16 %v971
    %v1004 = vunpack.c.l.b16 %v972
    %v1005 = vunpack.c.l.b16 %v973
    %v1006 = vunpack.c.l.b16 %v974
    %v1007 = vunpack.c.l.b16 %v975
    %v1008 = vunpack.c.l.b16 %v976
    %v1009 = vunpack.c.l.b16 %v977
    %v1010 = vunpack.c.l.b16 %v978
    %v1011 = vunpack.c.l.b16 %v979
    %v1012 = vunpack.c.l.b16 %v980
    %v1013 = vunpack.c.l.b16 %v981
    %v1014 = vunpack.c.l.b16 %v982
    %v1015 = vunpack.c.l.b16 %v983
    %v1016 = vunpack.c.l.b16 %v984
    %v1017 = vpack.c.b16 %v1002, %v1001
    %v1018 = vpack.c.b16 %v1004, %v1003
    %v1019 = vpack.c.b16 %v1006, %v1005
    %v1020 = vpack.c.b16 %v1008, %v1007
    %v1021 = vpack.c.b16 %v1010, %v1009
    %v1022 = vpack.c.b16 %v1012, %v1011
    %v1023 = vpack.c.b16 %v1014, %v1013
    %v1024 = vpack.c.b16 %v1016, %v1015
    %1033 = vmatprep.subr.bf16.mxu0 0
    %1034 = vmatpush1.bf16.msra.mxu0 %v1017
    %1035 = vmatprep.subr.bf16.mxu0 0
    %1036 = vmatpush1.bf16.msra.mxu0 %v1018
    %1037 = vmatprep.subr.bf16.mxu0 0
    %1038 = vmatpush1.bf16.msra.mxu0 %v1019
    %1039 = vmatprep.subr.bf16.mxu0 0
    %1040 = vmatpush1.bf16.msra.mxu0 %v1020
    %1041 = vmatprep.subr.bf16.mxu0 0
    %1042 = vmatpush1.bf16.msra.mxu0 %v1021
    %1043 = vmatprep.subr.bf16.mxu0 0
    %1044 = vmatpush1.bf16.msra.mxu0 %v1022
    %1045 = vmatprep.subr.bf16.mxu0 0
    %1046 = vmatpush1.bf16.msra.mxu0 %v1023
    %1047 = vmatprep.subr.bf16.mxu0 0
    %1048 = vmatpush1.bf16.msra.mxu0 %v1024
    %1049 = vmatprep.subr.bf16.mxu0 0
    %1050 = vmatpush1.bf16.msra.mxu0 0
    %1051 = vmatprep.subr.bf16.mxu0 0
    %1052 = vmatpush1.bf16.msra.mxu0 0
    %1053 = vmatprep.subr.bf16.mxu0 0
    %1054 = vmatpush1.bf16.msra.mxu0 0
    %1055 = vmatprep.subr.bf16.mxu0 0
    %1056 = vmatpush1.bf16.msra.mxu0 0
    %1057 = vmatprep.subr.bf16.mxu0 0
    %1058 = vmatpush1.bf16.msra.mxu0 0
    %1059 = vmatprep.subr.bf16.mxu0 0
    %1060 = vmatpush1.bf16.msra.mxu0 0
    %1061 = vmatprep.subr.bf16.mxu0 0
    %1062 = vmatpush1.bf16.msra.mxu0 0
    %1063 = vmatprep.subr.bf16.mxu0 0
    %1064 = vmatpush1.bf16.msra.mxu0 0
    %1065 = vmatprep.mubr.bf16.mxu0 0
    %1066 = vmatmul.mubr.bf16.gmra.mrb[0].mxu0 %v967
    %v1067 = vpop.f32.mrb[0].mxu0
    %v1068 = vadd.f32 0.0, %v1067
    %v1069 = vpop.f32.mrb[0].mxu0
    %v1070 = vpop.f32.mrb[0].mxu0
    %v1071 = vpop.f32.mrb[0].mxu0
    %1072 = vdwg.mxu0
    %v1073 = vpack.c.bf16 %v1068, %v1068
    %s1074 = scalar_lea.vmem %s2, 8
    %v1075 = vld [vmem:[%s1074] sm:$0x1]
    %v1077 = vpack.i.b16 %v1075, %v1075
    %v1079 = vlaneseq
    %v1080 = vshrl.u32 %v1079, 7
    %v1081 = vsub.s32 0, %v1080
    %v1082 = vrot.slane %v1077, %v1081
    %v1083 = vadd.bf16 %v1073, %v1082
    %v1084 = vmax.bf16 %v1083, 0
    %s1085 = scalar_lea.vmem [#allocation2], 8
    %1086 = vst [vmem:[%s1085] sm:$0xf] %v1084
    %s1087 = scalar_lea.vmem [#allocation3], 576
    %v1088 = vld [vmem:[%s1087] sm:$0xf]
    %v1089 = vld [vmem:[%s1087 + $0x4] sm:$0xf]
    %v1090 = vld [vmem:[%s1087 + $0x8] sm:$0xf]
    %v1091 = vld [vmem:[%s1087 + $0xc] sm:$0xf]
    %v1092 = vld [vmem:[%s1087 + $0x10] sm:$0xf]
    %v1093 = vld [vmem:[%s1087 + $0x14] sm:$0xf]
    %v1094 = vld [vmem:[%s1087 + $0x18] sm:$0xf]
    %v1095 = vld [vmem:[%s1087 + $0x1c] sm:$0xf]
    %v1096 = vld [vmem:[%s1087 + $0x20] sm:$0xf]
    %v1097 = vld [vmem:[%s1087 + $0x24] sm:$0xf]
    %v1098 = vld [vmem:[%s1087 + $0x28] sm:$0xf]
    %v1099 = vld [vmem:[%s1087 + $0x2c] sm:$0xf]
    %v1100 = vld [vmem:[%s1087 + $0x30] sm:$0xf]
    %v1101 = vld [vmem:[%s1087 + $0x34] sm:$0xf]
    %v1102 = vld [vmem:[%s1087 + $0x38] sm:$0xf]
    %v1103 = vld [vmem:[%s1087 + $0x3c] sm:$0xf]
    %v1120 = vunpack.c.l.b16 %v1088
    %v1121 = vunpack.c.l.b16 %v1089
    %v1122 = vunpack.c.l.b16 %v1090
    %v1123 = vunpack.c.l.b16 %v1091
    %v1124 = vunpack.c.l.b16 %v1092
    %v1125 = vunpack.c.l.b16 %v1093
    %v1126 = vunpack.c.l.b16 %v1094
    %v1127 = vunpack.c.l.b16 %v1095
    %v1128 = vunpack.c.l.b16 %v1096
    %v1129 = vunpack.c.l.b16 %v1097
    %v1130 = vunpack.c.l.b16 %v1098
    %v1131 = vunpack.c.l.b16 %v1099
    %v1132 = vunpack.c.l.b16 %v1100
    %v1133 = vunpack.c.l.b16 %v1101
    %v1134 = vunpack.c.l.b16 %v1102
    %v1135 = vunpack.c.l.b16 %v1103
    %v1136 = vpack.c.b16 %v1121, %v1120
    %v1137 = vpack.c.b16 %v1123, %v1122
    %v1138 = vpack.c.b16 %v1125, %v1124
    %v1139 = vpack.c.b16 %v1127, %v1126
    %v1140 = vpack.c.b16 %v1129, %v1128
    %v1141 = vpack.c.b16 %v1131, %v1130
    %v1142 = vpack.c.b16 %v1133, %v1132
    %v1143 = vpack.c.b16 %v1135, %v1134
    %1152 = vmatprep.subr.bf16.mxu0 0
    %1153 = vmatpush1.bf16.msra.mxu0 %v1136
    %1154 = vmatprep.subr.bf16.mxu0 0
    %1155 = vmatpush1.bf16.msra.mxu0 %v1137
    %1156 = vmatprep.subr.bf16.mxu0 0
    %1157 = vmatpush1.bf16.msra.mxu0 %v1138
    %1158 = vmatprep.subr.bf16.mxu0 0
    %1159 = vmatpush1.bf16.msra.mxu0 %v1139
    %1160 = vmatprep.subr.bf16.mxu0 0
    %1161 = vmatpush1.bf16.msra.mxu0 %v1140
    %1162 = vmatprep.subr.bf16.mxu0 0
    %1163 = vmatpush1.bf16.msra.mxu0 %v1141
    %1164 = vmatprep.subr.bf16.mxu0 0
    %1165 = vmatpush1.bf16.msra.mxu0 %v1142
    %1166 = vmatprep.subr.bf16.mxu0 0
    %1167 = vmatpush1.bf16.msra.mxu0 %v1143
    %1168 = vmatprep.subr.bf16.mxu0 0
    %1169 = vmatpush1.bf16.msra.mxu0 0
    %1170 = vmatprep.subr.bf16.mxu0 0
    %1171 = vmatpush1.bf16.msra.mxu0 0
    %1172 = vmatprep.subr.bf16.mxu0 0
    %1173 = vmatpush1.bf16.msra.mxu0 0
    %1174 = vmatprep.subr.bf16.mxu0 0
    %1175 = vmatpush1.bf16.msra.mxu0 0
    %1176 = vmatprep.subr.bf16.mxu0 0
    %1177 = vmatpush1.bf16.msra.mxu0 0
    %1178 = vmatprep.subr.bf16.mxu0 0
    %1179 = vmatpush1.bf16.msra.mxu0 0
    %1180 = vmatprep.subr.bf16.mxu0 0
    %1181 = vmatpush1.bf16.msra.mxu0 0
    %1182 = vmatprep.subr.bf16.mxu0 0
    %1183 = vmatpush1.bf16.msra.mxu0 0
    %1184 = vmatprep.mubr.bf16.mxu0 0
    %1185 = vmatmul.mubr.bf16.gmra.mrb[0].mxu0 %v1084
    %v1186 = vpop.f32.mrb[0].mxu0
    %v1187 = vadd.f32 0.0, %v1186
    %v1188 = vpop.f32.mrb[0].mxu0
    %v1189 = vpop.f32.mrb[0].mxu0
    %v1190 = vpop.f32.mrb[0].mxu0
    %1191 = vdwg.mxu0
    %v1192 = vpack.c.bf16 %v1187, %v1187
    %s1193 = scalar_lea.vmem %s2, 9
    %v1194 = vld [vmem:[%s1193] sm:$0x1]
    %v1196 = vpack.i.b16 %v1194, %v1194
    %v1198 = vlaneseq
    %v1199 = vshrl.u32 %v1198, 7
    %v1200 = vsub.s32 0, %v1199
    %v1201 = vrot.slane %v1196, %v1200
    %v1202 = vadd.bf16 %v1192, %v1201
    %v1203 = vmax.bf16 %v1202, 0
    %s1204 = scalar_lea.vmem [#allocation3], 640
    %v1205 = vld [vmem:[%s1204] sm:$0xf]
    %v1206 = vld [vmem:[%s1204 + $0x4] sm:$0xf]
    %v1207 = vld [vmem:[%s1204 + $0x8] sm:$0xf]
    %v1208 = vld [vmem:[%s1204 + $0xc] sm:$0xf]
    %v1209 = vld [vmem:[%s1204 + $0x10] sm:$0xf]
    %v1210 = vld [vmem:[%s1204 + $0x14] sm:$0xf]
    %v1211 = vld [vmem:[%s1204 + $0x18] sm:$0xf]
    %v1212 = vld [vmem:[%s1204 + $0x1c] sm:$0xf]
    %v1213 = vld [vmem:[%s1204 + $0x20] sm:$0xf]
    %v1214 = vld [vmem:[%s1204 + $0x24] sm:$0xf]
    %v1215 = vld [vmem:[%s1204 + $0x28] sm:$0xf]
    %v1216 = vld [vmem:[%s1204 + $0x2c] sm:$0xf]
    %v1217 = vld [vmem:[%s1204 + $0x30] sm:$0xf]
    %v1218 = vld [vmem:[%s1204 + $0x34] sm:$0xf]
    %v1219 = vld [vmem:[%s1204 + $0x38] sm:$0xf]
    %v1220 = vld [vmem:[%s1204 + $0x3c] sm:$0xf]
    %v1237 = vunpack.c.l.b16 %v1205
    %v1238 = vunpack.c.l.b16 %v1206
    %v1239 = vunpack.c.l.b16 %v1207
    %v1240 = vunpack.c.l.b16 %v1208
    %v1241 = vunpack.c.l.b16 %v1209
    %v1242 = vunpack.c.l.b16 %v1210
    %v1243 = vunpack.c.l.b16 %v1211
    %v1244 = vunpack.c.l.b16 %v1212
    %v1245 = vunpack.c.l.b16 %v1213
    %v1246 = vunpack.c.l.b16 %v1214
    %v1247 = vunpack.c.l.b16 %v1215
    %v1248 = vunpack.c.l.b16 %v1216
    %v1249 = vunpack.c.l.b16 %v1217
    %v1250 = vunpack.c.l.b16 %v1218
    %v1251 = vunpack.c.l.b16 %v1219
    %v1252 = vunpack.c.l.b16 %v1220
    %v1253 = vpack.c.b16 %v1238, %v1237
    %v1254 = vpack.c.b16 %v1240, %v1239
    %v1255 = vpack.c.b16 %v1242, %v1241
    %v1256 = vpack.c.b16 %v1244, %v1243
    %v1257 = vpack.c.b16 %v1246, %v1245
    %v1258 = vpack.c.b16 %v1248, %v1247
    %v1259 = vpack.c.b16 %v1250, %v1249
    %v1260 = vpack.c.b16 %v1252, %v1251
    %1269 = vmatprep.subr.bf16.mxu0 0
    %1270 = vmatpush1.bf16.msra.mxu0 %v1253
    %1271 = vmatprep.subr.bf16.mxu0 0
    %1272 = vmatpush1.bf16.msra.mxu0 %v1254
    %1273 = vmatprep.subr.bf16.mxu0 0
    %1274 = vmatpush1.bf16.msra.mxu0 %v1255
    %1275 = vmatprep.subr.bf16.mxu0 0
    %1276 = vmatpush1.bf16.msra.mxu0 %v1256
    %1277 = vmatprep.subr.bf16.mxu0 0
    %1278 = vmatpush1.bf16.msra.mxu0 %v1257
    %1279 = vmatprep.subr.bf16.mxu0 0
    %1280 = vmatpush1.bf16.msra.mxu0 %v1258
    %1281 = vmatprep.subr.bf16.mxu0 0
    %1282 = vmatpush1.bf16.msra.mxu0 %v1259
    %1283 = vmatprep.subr.bf16.mxu0 0
    %1284 = vmatpush1.bf16.msra.mxu0 %v1260
    %1285 = vmatprep.subr.bf16.mxu0 0
    %1286 = vmatpush1.bf16.msra.mxu0 0
    %1287 = vmatprep.subr.bf16.mxu0 0
    %1288 = vmatpush1.bf16.msra.mxu0 0
    %1289 = vmatprep.subr.bf16.mxu0 0
    %1290 = vmatpush1.bf16.msra.mxu0 0
    %1291 = vmatprep.subr.bf16.mxu0 0
    %1292 = vmatpush1.bf16.msra.mxu0 0
    %1293 = vmatprep.subr.bf16.mxu0 0
    %1294 = vmatpush1.bf16.msra.mxu0 0
    %1295 = vmatprep.subr.bf16.mxu0 0
    %1296 = vmatpush1.bf16.msra.mxu0 0
    %1297 = vmatprep.subr.bf16.mxu0 0
    %1298 = vmatpush1.bf16.msra.mxu0 0
    %1299 = vmatprep.subr.bf16.mxu0 0
    %1300 = vmatpush1.bf16.msra.mxu0 0
    %1301 = vmatprep.mubr.bf16.mxu0 0
    %1302 = vmatmul.mubr.bf16.gmra.mrb[0].mxu0 %v1203
    %v1303 = vpop.f32.mrb[0].mxu0
    %v1304 = vadd.f32 0.0, %v1303
    %v1305 = vpop.f32.mrb[0].mxu0
    %v1306 = vpop.f32.mrb[0].mxu0
    %v1307 = vpop.f32.mrb[0].mxu0
    %1308 = vdwg.mxu0
    %v1309 = vpack.c.bf16 %v1304, %v1304
    %s1310 = scalar_lea.vmem %s2, 10
    %v1311 = vld [vmem:[%s1310] sm:$0x1]
    %v1313 = vpack.i.b16 %v1311, %v1311
    %v1315 = vlaneseq
    %v1316 = vshrl.u32 %v1315, 7
    %v1317 = vsub.s32 0, %v1316
    %v1318 = vrot.slane %v1313, %v1317
    %v1319 = vadd.bf16 %v1309, %v1318
    %v1320 = vmax.bf16 %v1319, 0
    %s1321 = scalar_lea.vmem [#allocation3], 704
    %v1322 = vld [vmem:[%s1321] sm:$0xf]
    %v1323 = vld [vmem:[%s1321 + $0x4] sm:$0xf]
    %v1324 = vld [vmem:[%s1321 + $0x8] sm:$0xf]
    %v1325 = vld [vmem:[%s1321 + $0xc] sm:$0xf]
    %v1326 = vld [vmem:[%s1321 + $0x10] sm:$0xf]
    %v1327 = vld [vmem:[%s1321 + $0x14] sm:$0xf]
    %v1328 = vld [vmem:[%s1321 + $0x18] sm:$0xf]
    %v1329 = vld [vmem:[%s1321 + $0x1c] sm:$0xf]
    %v1330 = vld [vmem:[%s1321 + $0x20] sm:$0xf]
    %v1331 = vld [vmem:[%s1321 + $0x24] sm:$0xf]
    %v1332 = vld [vmem:[%s1321 + $0x28] sm:$0xf]
    %v1333 = vld [vmem:[%s1321 + $0x2c] sm:$0xf]
    %v1334 = vld [vmem:[%s1321 + $0x30] sm:$0xf]
    %v1335 = vld [vmem:[%s1321 + $0x34] sm:$0xf]
    %v1336 = vld [vmem:[%s1321 + $0x38] sm:$0xf]
    %v1337 = vld [vmem:[%s1321 + $0x3c] sm:$0xf]
    %v1354 = vunpack.c.l.b16 %v1322
    %v1355 = vunpack.c.l.b16 %v1323
    %v1356 = vunpack.c.l.b16 %v1324
    %v1357 = vunpack.c.l.b16 %v1325
    %v1358 = vunpack.c.l.b16 %v1326
    %v1359 = vunpack.c.l.b16 %v1327
    %v1360 = vunpack.c.l.b16 %v1328
    %v1361 = vunpack.c.l.b16 %v1329
    %v1362 = vunpack.c.l.b16 %v1330
    %v1363 = vunpack.c.l.b16 %v1331
    %v1364 = vunpack.c.l.b16 %v1332
    %v1365 = vunpack.c.l.b16 %v1333
    %v1366 = vunpack.c.l.b16 %v1334
    %v1367 = vunpack.c.l.b16 %v1335
    %v1368 = vunpack.c.l.b16 %v1336
    %v1369 = vunpack.c.l.b16 %v1337
    %v1370 = vpack.c.b16 %v1355, %v1354
    %v1371 = vpack.c.b16 %v1357, %v1356
    %v1372 = vpack.c.b16 %v1359, %v1358
    %v1373 = vpack.c.b16 %v1361, %v1360
    %v1374 = vpack.c.b16 %v1363, %v1362
    %v1375 = vpack.c.b16 %v1365, %v1364
    %v1376 = vpack.c.b16 %v1367, %v1366
    %v1377 = vpack.c.b16 %v1369, %v1368
    %1386 = vmatprep.subr.bf16.mxu0 0
    %1387 = vmatpush1.bf16.msra.mxu0 %v1370
    %1388 = vmatprep.subr.bf16.mxu0 0
    %1389 = vmatpush1.bf16.msra.mxu0 %v1371
    %1390 = vmatprep.subr.bf16.mxu0 0
    %1391 = vmatpush1.bf16.msra.mxu0 %v1372
    %1392 = vmatprep.subr.bf16.mxu0 0
    %1393 = vmatpush1.bf16.msra.mxu0 %v1373
    %1394 = vmatprep.subr.bf16.mxu0 0
    %1395 = vmatpush1.bf16.msra.mxu0 %v1374
    %1396 = vmatprep.subr.bf16.mxu0 0
    %1397 = vmatpush1.bf16.msra.mxu0 %v1375
    %1398 = vmatprep.subr.bf16.mxu0 0
    %1399 = vmatpush1.bf16.msra.mxu0 %v1376
    %1400 = vmatprep.subr.bf16.mxu0 0
    %1401 = vmatpush1.bf16.msra.mxu0 %v1377
    %1402 = vmatprep.subr.bf16.mxu0 0
    %1403 = vmatpush1.bf16.msra.mxu0 0
    %1404 = vmatprep.subr.bf16.mxu0 0
    %1405 = vmatpush1.bf16.msra.mxu0 0
    %1406 = vmatprep.subr.bf16.mxu0 0
    %1407 = vmatpush1.bf16.msra.mxu0 0
    %1408 = vmatprep.subr.bf16.mxu0 0
    %1409 = vmatpush1.bf16.msra.mxu0 0
    %1410 = vmatprep.subr.bf16.mxu0 0
    %1411 = vmatpush1.bf16.msra.mxu0 0
    %1412 = vmatprep.subr.bf16.mxu0 0
    %1413 = vmatpush1.bf16.msra.mxu0 0
    %1414 = vmatprep.subr.bf16.mxu0 0
    %1415 = vmatpush1.bf16.msra.mxu0 0
    %1416 = vmatprep.subr.bf16.mxu0 0
    %1417 = vmatpush1.bf16.msra.mxu0 0
    %1418 = vmatprep.mubr.bf16.mxu0 0
    %1419 = vmatmul.mubr.bf16.gmra.mrb[0].mxu0 %v1320
    %v1420 = vpop.f32.mrb[0].mxu0
    %v1421 = vadd.f32 0.0, %v1420
    %v1422 = vpop.f32.mrb[0].mxu0
    %v1423 = vpop.f32.mrb[0].mxu0
    %v1424 = vpop.f32.mrb[0].mxu0
    %1425 = vdwg.mxu0
    %v1426 = vpack.c.bf16 %v1421, %v1421
    %s1427 = scalar_lea.vmem %s2, 11
    %v1428 = vld [vmem:[%s1427] sm:$0x1]
    %v1430 = vpack.i.b16 %v1428, %v1428
    %v1432 = vlaneseq
    %v1433 = vshrl.u32 %v1432, 7
    %v1434 = vsub.s32 0, %v1433
    %v1435 = vrot.slane %v1430, %v1434
    %v1436 = vadd.bf16 %v1426, %v1435
    %v1437 = vmax.bf16 %v1436, 0
    %v1438 = vld [vmem:[%s1085] sm:$0xf]
    %v1439 = vadd.bf16 %v1437, %v1438
    %s1440 = scalar_lea.vmem [#allocation3], 768
    %v1441 = vld [vmem:[%s1440] sm:$0xf]
    %v1442 = vld [vmem:[%s1440 + $0x4] sm:$0xf]
    %v1443 = vld [vmem:[%s1440 + $0x8] sm:$0xf]
    %v1444 = vld [vmem:[%s1440 + $0xc] sm:$0xf]
    %v1445 = vld [vmem:[%s1440 + $0x10] sm:$0xf]
    %v1446 = vld [vmem:[%s1440 + $0x14] sm:$0xf]
    %v1447 = vld [vmem:[%s1440 + $0x18] sm:$0xf]
    %v1448 = vld [vmem:[%s1440 + $0x1c] sm:$0xf]
    %v1449 = vld [vmem:[%s1440 + $0x20] sm:$0xf]
    %v1450 = vld [vmem:[%s1440 + $0x24] sm:$0xf]
    %v1451 = vld [vmem:[%s1440 + $0x28] sm:$0xf]
    %v1452 = vld [vmem:[%s1440 + $0x2c] sm:$0xf]
    %v1453 = vld [vmem:[%s1440 + $0x30] sm:$0xf]
    %v1454 = vld [vmem:[%s1440 + $0x34] sm:$0xf]
    %v1455 = vld [vmem:[%s1440 + $0x38] sm:$0xf]
    %v1456 = vld [vmem:[%s1440 + $0x3c] sm:$0xf]
    %v1473 = vunpack.c.l.b16 %v1441
    %v1474 = vunpack.c.l.b16 %v1442
    %v1475 = vunpack.c.l.b16 %v1443
    %v1476 = vunpack.c.l.b16 %v1444
    %v1477 = vunpack.c.l.b16 %v1445
    %v1478 = vunpack.c.l.b16 %v1446
    %v1479 = vunpack.c.l.b16 %v1447
    %v1480 = vunpack.c.l.b16 %v1448
    %v1481 = vunpack.c.l.b16 %v1449
    %v1482 = vunpack.c.l.b16 %v1450
    %v1483 = vunpack.c.l.b16 %v1451
    %v1484 = vunpack.c.l.b16 %v1452
    %v1485 = vunpack.c.l.b16 %v1453
    %v1486 = vunpack.c.l.b16 %v1454
    %v1487 = vunpack.c.l.b16 %v1455
    %v1488 = vunpack.c.l.b16 %v1456
    %v1489 = vpack.c.b16 %v1474, %v1473
    %v1490 = vpack.c.b16 %v1476, %v1475
    %v1491 = vpack.c.b16 %v1478, %v1477
    %v1492 = vpack.c.b16 %v1480, %v1479
    %v1493 = vpack.c.b16 %v1482, %v1481
    %v1494 = vpack.c.b16 %v1484, %v1483
    %v1495 = vpack.c.b16 %v1486, %v1485
    %v1496 = vpack.c.b16 %v1488, %v1487
    %1505 = vmatprep.subr.bf16.mxu0 0
    %1506 = vmatpush1.bf16.msra.mxu0 %v1489
    %1507 = vmatprep.subr.bf16.mxu0 0
    %1508 = vmatpush1.bf16.msra.mxu0 %v1490
    %1509 = vmatprep.subr.bf16.mxu0 0
    %1510 = vmatpush1.bf16.msra.mxu0 %v1491
    %1511 = vmatprep.subr.bf16.mxu0 0
    %1512 = vmatpush1.bf16.msra.mxu0 %v1492
    %1513 = vmatprep.subr.bf16.mxu0 0
    %1514 = vmatpush1.bf16.msra.mxu0 %v1493
    %1515 = vmatprep.subr.bf16.mxu0 0
    %1516 = vmatpush1.bf16.msra.mxu0 %v1494
    %1517 = vmatprep.subr.bf16.mxu0 0
    %1518 = vmatpush1.bf16.msra.mxu0 %v1495
    %1519 = vmatprep.subr.bf16.mxu0 0
    %1520 = vmatpush1.bf16.msra.mxu0 %v1496
    %1521 = vmatprep.subr.bf16.mxu0 0
    %1522 = vmatpush1.bf16.msra.mxu0 0
    %1523 = vmatprep.subr.bf16.mxu0 0
    %1524 = vmatpush1.bf16.msra.mxu0 0
    %1525 = vmatprep.subr.bf16.mxu0 0
    %1526 = vmatpush1.bf16.msra.mxu0 0
    %1527 = vmatprep.subr.bf16.mxu0 0
    %1528 = vmatpush1.bf16.msra.mxu0 0
    %1529 = vmatprep.subr.bf16.mxu0 0
    %1530 = vmatpush1.bf16.msra.mxu0 0
    %1531 = vmatprep.subr.bf16.mxu0 0
    %1532 = vmatpush1.bf16.msra.mxu0 0
    %1533 = vmatprep.subr.bf16.mxu0 0
    %1534 = vmatpush1.bf16.msra.mxu0 0
    %1535 = vmatprep.subr.bf16.mxu0 0
    %1536 = vmatpush1.bf16.msra.mxu0 0
    %1537 = vmatprep.mubr.bf16.mxu0 0
    %1538 = vmatmul.mubr.bf16.gmra.mrb[0].mxu0 %v1439
    %v1539 = vpop.f32.mrb[0].mxu0
    %v1540 = vadd.f32 0.0, %v1539
    %v1541 = vpop.f32.mrb[0].mxu0
    %v1542 = vpop.f32.mrb[0].mxu0
    %v1543 = vpop.f32.mrb[0].mxu0
    %1544 = vdwg.mxu0
    %v1545 = vpack.c.bf16 %v1540, %v1540
    %s1546 = scalar_lea.vmem %s2, 12
    %v1547 = vld [vmem:[%s1546] sm:$0x1]
    %v1549 = vpack.i.b16 %v1547, %v1547
    %v1551 = vlaneseq
    %v1552 = vshrl.u32 %v1551, 7
    %v1553 = vsub.s32 0, %v1552
    %v1554 = vrot.slane %v1549, %v1553
    %v1555 = vadd.bf16 %v1545, %v1554
    %v1556 = vmax.bf16 %v1555, 0
    %s1557 = scalar_lea.vmem [#allocation3], 832
    %v1558 = vld [vmem:[%s1557] sm:$0xf]
    %v1559 = vld [vmem:[%s1557 + $0x4] sm:$0xf]
    %v1560 = vld [vmem:[%s1557 + $0x8] sm:$0xf]
    %v1561 = vld [vmem:[%s1557 + $0xc] sm:$0xf]
    %v1562 = vld [vmem:[%s1557 + $0x10] sm:$0xf]
    %v1563 = vld [vmem:[%s1557 + $0x14] sm:$0xf]
    %v1564 = vld [vmem:[%s1557 + $0x18] sm:$0xf]
    %v1565 = vld [vmem:[%s1557 + $0x1c] sm:$0xf]
    %v1566 = vld [vmem:[%s1557 + $0x20] sm:$0xf]
    %v1567 = vld [vmem:[%s1557 + $0x24] sm:$0xf]
    %v1568 = vld [vmem:[%s1557 + $0x28] sm:$0xf]
    %v1569 = vld [vmem:[%s1557 + $0x2c] sm:$0xf]
    %v1570 = vld [vmem:[%s1557 + $0x30] sm:$0xf]
    %v1571 = vld [vmem:[%s1557 + $0x34] sm:$0xf]
    %v1572 = vld [vmem:[%s1557 + $0x38] sm:$0xf]
    %v1573 = vld [vmem:[%s1557 + $0x3c] sm:$0xf]
    %v1590 = vunpack.c.l.b16 %v1558
    %v1591 = vunpack.c.l.b16 %v1559
    %v1592 = vunpack.c.l.b16 %v1560
    %v1593 = vunpack.c.l.b16 %v1561
    %v1594 = vunpack.c.l.b16 %v1562
    %v1595 = vunpack.c.l.b16 %v1563
    %v1596 = vunpack.c.l.b16 %v1564
    %v1597 = vunpack.c.l.b16 %v1565
    %v1598 = vunpack.c.l.b16 %v1566
    %v1599 = vunpack.c.l.b16 %v1567
    %v1600 = vunpack.c.l.b16 %v1568
    %v1601 = vunpack.c.l.b16 %v1569
    %v1602 = vunpack.c.l.b16 %v1570
    %v1603 = vunpack.c.l.b16 %v1571
    %v1604 = vunpack.c.l.b16 %v1572
    %v1605 = vunpack.c.l.b16 %v1573
    %v1606 = vpack.c.b16 %v1591, %v1590
    %v1607 = vpack.c.b16 %v1593, %v1592
    %v1608 = vpack.c.b16 %v1595, %v1594
    %v1609 = vpack.c.b16 %v1597, %v1596
    %v1610 = vpack.c.b16 %v1599, %v1598
    %v1611 = vpack.c.b16 %v1601, %v1600
    %v1612 = vpack.c.b16 %v1603, %v1602
    %v1613 = vpack.c.b16 %v1605, %v1604
    %1622 = vmatprep.subr.bf16.mxu0 0
    %1623 = vmatpush1.bf16.msra.mxu0 %v1606
    %1624 = vmatprep.subr.bf16.mxu0 0
    %1625 = vmatpush1.bf16.msra.mxu0 %v1607
    %1626 = vmatprep.subr.bf16.mxu0 0
    %1627 = vmatpush1.bf16.msra.mxu0 %v1608
    %1628 = vmatprep.subr.bf16.mxu0 0
    %1629 = vmatpush1.bf16.msra.mxu0 %v1609
    %1630 = vmatprep.subr.bf16.mxu0 0
    %1631 = vmatpush1.bf16.msra.mxu0 %v1610
    %1632 = vmatprep.subr.bf16.mxu0 0
    %1633 = vmatpush1.bf16.msra.mxu0 %v1611
    %1634 = vmatprep.subr.bf16.mxu0 0
    %1635 = vmatpush1.bf16.msra.mxu0 %v1612
    %1636 = vmatprep.subr.bf16.mxu0 0
    %1637 = vmatpush1.bf16.msra.mxu0 %v1613
    %1638 = vmatprep.subr.bf16.mxu0 0
    %1639 = vmatpush1.bf16.msra.mxu0 0
    %1640 = vmatprep.subr.bf16.mxu0 0
    %1641 = vmatpush1.bf16.msra.mxu0 0
    %1642 = vmatprep.subr.bf16.mxu0 0
    %1643 = vmatpush1.bf16.msra.mxu0 0
    %1644 = vmatprep.subr.bf16.mxu0 0
    %1645 = vmatpush1.bf16.msra.mxu0 0
    %1646 = vmatprep.subr.bf16.mxu0 0
    %1647 = vmatpush1.bf16.msra.mxu0 0
    %1648 = vmatprep.subr.bf16.mxu0 0
    %1649 = vmatpush1.bf16.msra.mxu0 0
    %1650 = vmatprep.subr.bf16.mxu0 0
    %1651 = vmatpush1.bf16.msra.mxu0 0
    %1652 = vmatprep.subr.bf16.mxu0 0
    %1653 = vmatpush1.bf16.msra.mxu0 0
    %1654 = vmatprep.mubr.bf16.mxu0 0
    %1655 = vmatmul.mubr.bf16.gmra.mrb[0].mxu0 %v1556
    %v1656 = vpop.f32.mrb[0].mxu0
    %v1657 = vadd.f32 0.0, %v1656
    %v1658 = vpop.f32.mrb[0].mxu0
    %v1659 = vpop.f32.mrb[0].mxu0
    %v1660 = vpop.f32.mrb[0].mxu0
    %1661 = vdwg.mxu0
    %v1662 = vpack.c.bf16 %v1657, %v1657
    %s1663 = scalar_lea.vmem %s2, 13
    %v1664 = vld [vmem:[%s1663] sm:$0x1]
    %v1666 = vpack.i.b16 %v1664, %v1664
    %v1668 = vlaneseq
    %v1669 = vshrl.u32 %v1668, 7
    %v1670 = vsub.s32 0, %v1669
    %v1671 = vrot.slane %v1666, %v1670
    %v1672 = vadd.bf16 %v1662, %v1671
    %v1673 = vmax.bf16 %v1672, 0
    %s1674 = scalar_lea.vmem [#allocation3], 896
    %v1675 = vld [vmem:[%s1674] sm:$0xf]
    %v1676 = vld [vmem:[%s1674 + $0x4] sm:$0xf]
    %v1677 = vld [vmem:[%s1674 + $0x8] sm:$0xf]
    %v1678 = vld [vmem:[%s1674 + $0xc] sm:$0xf]
    %v1679 = vld [vmem:[%s1674 + $0x10] sm:$0xf]
    %v1680 = vld [vmem:[%s1674 + $0x14] sm:$0xf]
    %v1681 = vld [vmem:[%s1674 + $0x18] sm:$0xf]
    %v1682 = vld [vmem:[%s1674 + $0x1c] sm:$0xf]
    %v1683 = vld [vmem:[%s1674 + $0x20] sm:$0xf]
    %v1684 = vld [vmem:[%s1674 + $0x24] sm:$0xf]
    %v1685 = vld [vmem:[%s1674 + $0x28] sm:$0xf]
    %v1686 = vld [vmem:[%s1674 + $0x2c] sm:$0xf]
    %v1687 = vld [vmem:[%s1674 + $0x30] sm:$0xf]
    %v1688 = vld [vmem:[%s1674 + $0x34] sm:$0xf]
    %v1689 = vld [vmem:[%s1674 + $0x38] sm:$0xf]
    %v1690 = vld [vmem:[%s1674 + $0x3c] sm:$0xf]
    %v1707 = vunpack.c.l.b16 %v1675
    %v1708 = vunpack.c.l.b16 %v1676
    %v1709 = vunpack.c.l.b16 %v1677
    %v1710 = vunpack.c.l.b16 %v1678
    %v1711 = vunpack.c.l.b16 %v1679
    %v1712 = vunpack.c.l.b16 %v1680
    %v1713 = vunpack.c.l.b16 %v1681
    %v1714 = vunpack.c.l.b16 %v1682
    %v1715 = vunpack.c.l.b16 %v1683
    %v1716 = vunpack.c.l.b16 %v1684
    %v1717 = vunpack.c.l.b16 %v1685
    %v1718 = vunpack.c.l.b16 %v1686
    %v1719 = vunpack.c.l.b16 %v1687
    %v1720 = vunpack.c.l.b16 %v1688
    %v1721 = vunpack.c.l.b16 %v1689
    %v1722 = vunpack.c.l.b16 %v1690
    %v1723 = vpack.c.b16 %v1708, %v1707
    %v1724 = vpack.c.b16 %v1710, %v1709
    %v1725 = vpack.c.b16 %v1712, %v1711
    %v1726 = vpack.c.b16 %v1714, %v1713
    %v1727 = vpack.c.b16 %v1716, %v1715
    %v1728 = vpack.c.b16 %v1718, %v1717
    %v1729 = vpack.c.b16 %v1720, %v1719
    %v1730 = vpack.c.b16 %v1722, %v1721
    %1739 = vmatprep.subr.bf16.mxu0 0
    %1740 = vmatpush1.bf16.msra.mxu0 %v1723
    %1741 = vmatprep.subr.bf16.mxu0 0
    %1742 = vmatpush1.bf16.msra.mxu0 %v1724
    %1743 = vmatprep.subr.bf16.mxu0 0
    %1744 = vmatpush1.bf16.msra.mxu0 %v1725
    %1745 = vmatprep.subr.bf16.mxu0 0
    %1746 = vmatpush1.bf16.msra.mxu0 %v1726
    %1747 = vmatprep.subr.bf16.mxu0 0
    %1748 = vmatpush1.bf16.msra.mxu0 %v1727
    %1749 = vmatprep.subr.bf16.mxu0 0
    %1750 = vmatpush1.bf16.msra.mxu0 %v1728
    %1751 = vmatprep.subr.bf16.mxu0 0
    %1752 = vmatpush1.bf16.msra.mxu0 %v1729
    %1753 = vmatprep.subr.bf16.mxu0 0
    %1754 = vmatpush1.bf16.msra.mxu0 %v1730
    %1755 = vmatprep.subr.bf16.mxu0 0
    %1756 = vmatpush1.bf16.msra.mxu0 0
    %1757 = vmatprep.subr.bf16.mxu0 0
    %1758 = vmatpush1.bf16.msra.mxu0 0
    %1759 = vmatprep.subr.bf16.mxu0 0
    %1760 = vmatpush1.bf16.msra.mxu0 0
    %1761 = vmatprep.subr.bf16.mxu0 0
    %1762 = vmatpush1.bf16.msra.mxu0 0
    %1763 = vmatprep.subr.bf16.mxu0 0
    %1764 = vmatpush1.bf16.msra.mxu0 0
    %1765 = vmatprep.subr.bf16.mxu0 0
    %1766 = vmatpush1.bf16.msra.mxu0 0
    %1767 = vmatprep.subr.bf16.mxu0 0
    %1768 = vmatpush1.bf16.msra.mxu0 0
    %1769 = vmatprep.subr.bf16.mxu0 0
    %1770 = vmatpush1.bf16.msra.mxu0 0
    %1771 = vmatprep.mubr.bf16.mxu0 0
    %1772 = vmatmul.mubr.bf16.gmra.mrb[0].mxu0 %v1673
    %v1773 = vpop.f32.mrb[0].mxu0
    %v1774 = vadd.f32 0.0, %v1773
    %v1775 = vpop.f32.mrb[0].mxu0
    %v1776 = vpop.f32.mrb[0].mxu0
    %v1777 = vpop.f32.mrb[0].mxu0
    %1778 = vdwg.mxu0
    %v1779 = vpack.c.bf16 %v1774, %v1774
    %s1780 = scalar_lea.vmem %s2, 14
    %v1781 = vld [vmem:[%s1780] sm:$0x1]
    %v1783 = vpack.i.b16 %v1781, %v1781
    %v1785 = vlaneseq
    %v1786 = vshrl.u32 %v1785, 7
    %v1787 = vsub.s32 0, %v1786
    %v1788 = vrot.slane %v1783, %v1787
    %v1789 = vadd.bf16 %v1779, %v1788
    %v1790 = vmax.bf16 %v1789, 0
    %v1791 = vld [vmem:[%s732] sm:$0xf]
    %v1792 = vadd.bf16 %v1790, %v1791
    %s1793 = scalar_lea.vmem [#allocation3], 960
    %v1794 = vld [vmem:[%s1793] sm:$0xf]
    %v1795 = vld [vmem:[%s1793 + $0x4] sm:$0xf]
    %v1796 = vld [vmem:[%s1793 + $0x8] sm:$0xf]
    %v1797 = vld [vmem:[%s1793 + $0xc] sm:$0xf]
    %v1798 = vld [vmem:[%s1793 + $0x10] sm:$0xf]
    %v1799 = vld [vmem:[%s1793 + $0x14] sm:$0xf]
    %v1800 = vld [vmem:[%s1793 + $0x18] sm:$0xf]
    %v1801 = vld [vmem:[%s1793 + $0x1c] sm:$0xf]
    %v1802 = vld [vmem:[%s1793 + $0x20] sm:$0xf]
    %v1803 = vld [vmem:[%s1793 + $0x24] sm:$0xf]
    %v1804 = vld [vmem:[%s1793 + $0x28] sm:$0xf]
    %v1805 = vld [vmem:[%s1793 + $0x2c] sm:$0xf]
    %v1806 = vld [vmem:[%s1793 + $0x30] sm:$0xf]
    %v1807 = vld [vmem:[%s1793 + $0x34] sm:$0xf]
    %v1808 = vld [vmem:[%s1793 + $0x38] sm:$0xf]
    %v1809 = vld [vmem:[%s1793 + $0x3c] sm:$0xf]
    %v1826 = vunpack.c.l.b16 %v1794
    %v1827 = vunpack.c.l.b16 %v1795
    %v1828 = vunpack.c.l.b16 %v1796
    %v1829 = vunpack.c.l.b16 %v1797
    %v1830 = vunpack.c.l.b16 %v1798
    %v1831 = vunpack.c.l.b16 %v1799
    %v1832 = vunpack.c.l.b16 %v1800
    %v1833 = vunpack.c.l.b16 %v1801
    %v1834 = vunpack.c.l.b16 %v1802
    %v1835 = vunpack.c.l.b16 %v1803
    %v1836 = vunpack.c.l.b16 %v1804
    %v1837 = vunpack.c.l.b16 %v1805
    %v1838 = vunpack.c.l.b16 %v1806
    %v1839 = vunpack.c.l.b16 %v1807
    %v1840 = vunpack.c.l.b16 %v1808
    %v1841 = vunpack.c.l.b16 %v1809
    %v1842 = vpack.c.b16 %v1827, %v1826
    %v1843 = vpack.c.b16 %v1829, %v1828
    %v1844 = vpack.c.b16 %v1831, %v1830
    %v1845 = vpack.c.b16 %v1833, %v1832
    %v1846 = vpack.c.b16 %v1835, %v1834
    %v1847 = vpack.c.b16 %v1837, %v1836
    %v1848 = vpack.c.b16 %v1839, %v1838
    %v1849 = vpack.c.b16 %v1841, %v1840
    %1858 = vmatprep.subr.bf16.mxu0 0
    %1859 = vmatpush1.bf16.msra.mxu0 %v1842
    %1860 = vmatprep.subr.bf16.mxu0 0
    %1861 = vmatpush1.bf16.msra.mxu0 %v1843
    %1862 = vmatprep.subr.bf16.mxu0 0
    %1863 = vmatpush1.bf16.msra.mxu0 %v1844
    %1864 = vmatprep.subr.bf16.mxu0 0
    %1865 = vmatpush1.bf16.msra.mxu0 %v1845
    %1866 = vmatprep.subr.bf16.mxu0 0
    %1867 = vmatpush1.bf16.msra.mxu0 %v1846
    %1868 = vmatprep.subr.bf16.mxu0 0
    %1869 = vmatpush1.bf16.msra.mxu0 %v1847
    %1870 = vmatprep.subr.bf16.mxu0 0
    %1871 = vmatpush1.bf16.msra.mxu0 %v1848
    %1872 = vmatprep.subr.bf16.mxu0 0
    %1873 = vmatpush1.bf16.msra.mxu0 %v1849
    %1874 = vmatprep.subr.bf16.mxu0 0
    %1875 = vmatpush1.bf16.msra.mxu0 0
    %1876 = vmatprep.subr.bf16.mxu0 0
    %1877 = vmatpush1.bf16.msra.mxu0 0
    %1878 = vmatprep.subr.bf16.mxu0 0
    %1879 = vmatpush1.bf16.msra.mxu0 0
    %1880 = vmatprep.subr.bf16.mxu0 0
    %1881 = vmatpush1.bf16.msra.mxu0 0
    %1882 = vmatprep.subr.bf16.mxu0 0
    %1883 = vmatpush1.bf16.msra.mxu0 0
    %1884 = vmatprep.subr.bf16.mxu0 0
    %1885 = vmatpush1.bf16.msra.mxu0 0
    %1886 = vmatprep.subr.bf16.mxu0 0
    %1887 = vmatpush1.bf16.msra.mxu0 0
    %1888 = vmatprep.subr.bf16.mxu0 0
    %1889 = vmatpush1.bf16.msra.mxu0 0
    %1890 = vmatprep.mubr.bf16.mxu0 0
    %1891 = vmatmul.mubr.bf16.gmra.mrb[0].mxu0 %v1792
    %v1892 = vpop.f32.mrb[0].mxu0
    %v1893 = vadd.f32 0.0, %v1892
    %v1894 = vpop.f32.mrb[0].mxu0
    %v1895 = vpop.f32.mrb[0].mxu0
    %v1896 = vpop.f32.mrb[0].mxu0
    %1897 = vdwg.mxu0
    %v1898 = vpack.c.bf16 %v1893, %v1893
    %s1899 = scalar_lea.vmem %s2, 15
    %v1900 = vld [vmem:[%s1899] sm:$0x1]
    %v1902 = vpack.i.b16 %v1900, %v1900
    %v1904 = vlaneseq
    %v1905 = vshrl.u32 %v1904, 7
    %v1906 = vsub.s32 0, %v1905
    %v1907 = vrot.slane %v1902, %v1906
    %v1908 = vadd.bf16 %v1898, %v1907
    %v1909 = vmax.bf16 %v1908, 0
    %s1910 = scalar_lea.vmem [#allocation3], 1024
    %v1911 = vld [vmem:[%s1910] sm:$0xf]
    %v1912 = vld [vmem:[%s1910 + $0x4] sm:$0xf]
    %v1913 = vld [vmem:[%s1910 + $0x8] sm:$0xf]
    %v1914 = vld [vmem:[%s1910 + $0xc] sm:$0xf]
    %v1915 = vld [vmem:[%s1910 + $0x10] sm:$0xf]
    %v1916 = vld [vmem:[%s1910 + $0x14] sm:$0xf]
    %v1917 = vld [vmem:[%s1910 + $0x18] sm:$0xf]
    %v1918 = vld [vmem:[%s1910 + $0x1c] sm:$0xf]
    %v1919 = vld [vmem:[%s1910 + $0x20] sm:$0xf]
    %v1920 = vld [vmem:[%s1910 + $0x24] sm:$0xf]
    %v1921 = vld [vmem:[%s1910 + $0x28] sm:$0xf]
    %v1922 = vld [vmem:[%s1910 + $0x2c] sm:$0xf]
    %v1923 = vld [vmem:[%s1910 + $0x30] sm:$0xf]
    %v1924 = vld [vmem:[%s1910 + $0x34] sm:$0xf]
    %v1925 = vld [vmem:[%s1910 + $0x38] sm:$0xf]
    %v1926 = vld [vmem:[%s1910 + $0x3c] sm:$0xf]
    %v1943 = vunpack.c.l.b16 %v1911
    %v1944 = vunpack.c.l.b16 %v1912
    %v1945 = vunpack.c.l.b16 %v1913
    %v1946 = vunpack.c.l.b16 %v1914
    %v1947 = vunpack.c.l.b16 %v1915
    %v1948 = vunpack.c.l.b16 %v1916
    %v1949 = vunpack.c.l.b16 %v1917
    %v1950 = vunpack.c.l.b16 %v1918
    %v1951 = vunpack.c.l.b16 %v1919
    %v1952 = vunpack.c.l.b16 %v1920
    %v1953 = vunpack.c.l.b16 %v1921
    %v1954 = vunpack.c.l.b16 %v1922
    %v1955 = vunpack.c.l.b16 %v1923
    %v1956 = vunpack.c.l.b16 %v1924
    %v1957 = vunpack.c.l.b16 %v1925
    %v1958 = vunpack.c.l.b16 %v1926
    %v1959 = vpack.c.b16 %v1944, %v1943
    %v1960 = vpack.c.b16 %v1946, %v1945
    %v1961 = vpack.c.b16 %v1948, %v1947
    %v1962 = vpack.c.b16 %v1950, %v1949
    %v1963 = vpack.c.b16 %v1952, %v1951
    %v1964 = vpack.c.b16 %v1954, %v1953
    %v1965 = vpack.c.b16 %v1956, %v1955
    %v1966 = vpack.c.b16 %v1958, %v1957
    %1975 = vmatprep.subr.bf16.mxu0 0
    %1976 = vmatpush1.bf16.msra.mxu0 %v1959
    %1977 = vmatprep.subr.bf16.mxu0 0
    %1978 = vmatpush1.bf16.msra.mxu0 %v1960
    %1979 = vmatprep.subr.bf16.mxu0 0
    %1980 = vmatpush1.bf16.msra.mxu0 %v1961
    %1981 = vmatprep.subr.bf16.mxu0 0
    %1982 = vmatpush1.bf16.msra.mxu0 %v1962
    %1983 = vmatprep.subr.bf16.mxu0 0
    %1984 = vmatpush1.bf16.msra.mxu0 %v1963
    %1985 = vmatprep.subr.bf16.mxu0 0
    %1986 = vmatpush1.bf16.msra.mxu0 %v1964
    %1987 = vmatprep.subr.bf16.mxu0 0
    %1988 = vmatpush1.bf16.msra.mxu0 %v1965
    %1989 = vmatprep.subr.bf16.mxu0 0
    %1990 = vmatpush1.bf16.msra.mxu0 %v1966
    %1991 = vmatprep.subr.bf16.mxu0 0
    %1992 = vmatpush1.bf16.msra.mxu0 0
    %1993 = vmatprep.subr.bf16.mxu0 0
    %1994 = vmatpush1.bf16.msra.mxu0 0
    %1995 = vmatprep.subr.bf16.mxu0 0
    %1996 = vmatpush1.bf16.msra.mxu0 0
    %1997 = vmatprep.subr.bf16.mxu0 0
    %1998 = vmatpush1.bf16.msra.mxu0 0
    %1999 = vmatprep.subr.bf16.mxu0 0
    %2000 = vmatpush1.bf16.msra.mxu0 0
    %2001 = vmatprep.subr.bf16.mxu0 0
    %2002 = vmatpush1.bf16.msra.mxu0 0
    %2003 = vmatprep.subr.bf16.mxu0 0
    %2004 = vmatpush1.bf16.msra.mxu0 0
    %2005 = vmatprep.subr.bf16.mxu0 0
    %2006 = vmatpush1.bf16.msra.mxu0 0
    %2007 = vmatprep.mubr.bf16.mxu0 0
    %2008 = vmatmul.mubr.bf16.gmra.mrb[0].mxu0 %v1909
    %v2009 = vpop.f32.mrb[0].mxu0
    %v2010 = vadd.f32 0.0, %v2009
    %v2011 = vpop.f32.mrb[0].mxu0
    %v2012 = vpop.f32.mrb[0].mxu0
    %v2013 = vpop.f32.mrb[0].mxu0
    %2014 = vdwg.mxu0
    %v2015 = vpack.c.bf16 %v2010, %v2010
    %s2016 = scalar_lea.vmem %s2, 16
    %v2017 = vld [vmem:[%s2016] sm:$0x1]
    %v2019 = vpack.i.b16 %v2017, %v2017
    %v2021 = vlaneseq
    %v2022 = vshrl.u32 %v2021, 7
    %v2023 = vsub.s32 0, %v2022
    %v2024 = vrot.slane %v2019, %v2023
    %v2025 = vadd.bf16 %v2015, %v2024
    %v2026 = vmax.bf16 %v2025, 0
    %s2027 = scalar_lea.vmem [#allocation3], 1088
    %v2028 = vld [vmem:[%s2027] sm:$0xf]
    %v2029 = vld [vmem:[%s2027 + $0x4] sm:$0xf]
    %v2030 = vld [vmem:[%s2027 + $0x8] sm:$0xf]
    %v2031 = vld [vmem:[%s2027 + $0xc] sm:$0xf]
    %v2032 = vld [vmem:[%s2027 + $0x10] sm:$0xf]
    %v2033 = vld [vmem:[%s2027 + $0x14] sm:$0xf]
    %v2034 = vld [vmem:[%s2027 + $0x18] sm:$0xf]
    %v2035 = vld [vmem:[%s2027 + $0x1c] sm:$0xf]
    %v2036 = vld [vmem:[%s2027 + $0x20] sm:$0xf]
    %v2037 = vld [vmem:[%s2027 + $0x24] sm:$0xf]
    %v2038 = vld [vmem:[%s2027 + $0x28] sm:$0xf]
    %v2039 = vld [vmem:[%s2027 + $0x2c] sm:$0xf]
    %v2040 = vld [vmem:[%s2027 + $0x30] sm:$0xf]
    %v2041 = vld [vmem:[%s2027 + $0x34] sm:$0xf]
    %v2042 = vld [vmem:[%s2027 + $0x38] sm:$0xf]
    %v2043 = vld [vmem:[%s2027 + $0x3c] sm:$0xf]
    %v2060 = vunpack.c.l.b16 %v2028
    %v2061 = vunpack.c.l.b16 %v2029
    %v2062 = vunpack.c.l.b16 %v2030
    %v2063 = vunpack.c.l.b16 %v2031
    %v2064 = vunpack.c.l.b16 %v2032
    %v2065 = vunpack.c.l.b16 %v2033
    %v2066 = vunpack.c.l.b16 %v2034
    %v2067 = vunpack.c.l.b16 %v2035
    %v2068 = vunpack.c.l.b16 %v2036
    %v2069 = vunpack.c.l.b16 %v2037
    %v2070 = vunpack.c.l.b16 %v2038
    %v2071 = vunpack.c.l.b16 %v2039
    %v2072 = vunpack.c.l.b16 %v2040
    %v2073 = vunpack.c.l.b16 %v2041
    %v2074 = vunpack.c.l.b16 %v2042
    %v2075 = vunpack.c.l.b16 %v2043
    %v2076 = vpack.c.b16 %v2061, %v2060
    %v2077 = vpack.c.b16 %v2063, %v2062
    %v2078 = vpack.c.b16 %v2065, %v2064
    %v2079 = vpack.c.b16 %v2067, %v2066
    %v2080 = vpack.c.b16 %v2069, %v2068
    %v2081 = vpack.c.b16 %v2071, %v2070
    %v2082 = vpack.c.b16 %v2073, %v2072
    %v2083 = vpack.c.b16 %v2075, %v2074
    %2092 = vmatprep.subr.bf16.mxu0 0
    %2093 = vmatpush1.bf16.msra.mxu0 %v2076
    %2094 = vmatprep.subr.bf16.mxu0 0
    %2095 = vmatpush1.bf16.msra.mxu0 %v2077
    %2096 = vmatprep.subr.bf16.mxu0 0
    %2097 = vmatpush1.bf16.msra.mxu0 %v2078
    %2098 = vmatprep.subr.bf16.mxu0 0
    %2099 = vmatpush1.bf16.msra.mxu0 %v2079
    %2100 = vmatprep.subr.bf16.mxu0 0
    %2101 = vmatpush1.bf16.msra.mxu0 %v2080
    %2102 = vmatprep.subr.bf16.mxu0 0
    %2103 = vmatpush1.bf16.msra.mxu0 %v2081
    %2104 = vmatprep.subr.bf16.mxu0 0
    %2105 = vmatpush1.bf16.msra.mxu0 %v2082
    %2106 = vmatprep.subr.bf16.mxu0 0
    %2107 = vmatpush1.bf16.msra.mxu0 %v2083
    %2108 = vmatprep.subr.bf16.mxu0 0
    %2109 = vmatpush1.bf16.msra.mxu0 0
    %2110 = vmatprep.subr.bf16.mxu0 0
    %2111 = vmatpush1.bf16.msra.mxu0 0
    %2112 = vmatprep.subr.bf16.mxu0 0
    %2113 = vmatpush1.bf16.msra.mxu0 0
    %2114 = vmatprep.subr.bf16.mxu0 0
    %2115 = vmatpush1.bf16.msra.mxu0 0
    %2116 = vmatprep.subr.bf16.mxu0 0
    %2117 = vmatpush1.bf16.msra.mxu0 0
    %2118 = vmatprep.subr.bf16.mxu0 0
    %2119 = vmatpush1.bf16.msra.mxu0 0
    %2120 = vmatprep.subr.bf16.mxu0 0
    %2121 = vmatpush1.bf16.msra.mxu0 0
    %2122 = vmatprep.subr.bf16.mxu0 0
    %2123 = vmatpush1.bf16.msra.mxu0 0
    %2124 = vmatprep.mubr.bf16.mxu0 0
    %2125 = vmatmul.mubr.bf16.gmra.mrb[0].mxu0 %v2026
    %v2126 = vpop.f32.mrb[0].mxu0
    %v2127 = vadd.f32 0.0, %v2126
    %v2128 = vpop.f32.mrb[0].mxu0
    %v2129 = vpop.f32.mrb[0].mxu0
    %v2130 = vpop.f32.mrb[0].mxu0
    %2131 = vdwg.mxu0
    %v2132 = vpack.c.bf16 %v2127, %v2127
    %s2133 = scalar_lea.vmem %s2, 17
    %v2134 = vld [vmem:[%s2133] sm:$0x1]
    %v2136 = vpack.i.b16 %v2134, %v2134
    %v2138 = vlaneseq
    %v2139 = vshrl.u32 %v2138, 7
    %v2140 = vsub.s32 0, %v2139
    %v2141 = vrot.slane %v2136, %v2140
    %v2142 = vadd.bf16 %v2132, %v2141
    %v2143 = vmax.bf16 %v2142, 0
    %v2144 = vld [vmem:[#allocation2] sm:$0xf]
    %v2145 = vadd.bf16 %v2143, %v2144
    %s2146 = scalar_lea.vmem [#allocation3], 1152
    %v2147 = vld [vmem:[%s2146] sm:$0xf]
    %v2148 = vld [vmem:[%s2146 + $0x4] sm:$0xf]
    %v2149 = vld [vmem:[%s2146 + $0x8] sm:$0xf]
    %v2150 = vld [vmem:[%s2146 + $0xc] sm:$0xf]
    %v2151 = vld [vmem:[%s2146 + $0x10] sm:$0xf]
    %v2152 = vld [vmem:[%s2146 + $0x14] sm:$0xf]
    %v2153 = vld [vmem:[%s2146 + $0x18] sm:$0xf]
    %v2154 = vld [vmem:[%s2146 + $0x1c] sm:$0xf]
    %v2155 = vld [vmem:[%s2146 + $0x20] sm:$0xf]
    %v2156 = vld [vmem:[%s2146 + $0x24] sm:$0xf]
    %v2157 = vld [vmem:[%s2146 + $0x28] sm:$0xf]
    %v2158 = vld [vmem:[%s2146 + $0x2c] sm:$0xf]
    %v2159 = vld [vmem:[%s2146 + $0x30] sm:$0xf]
    %v2160 = vld [vmem:[%s2146 + $0x34] sm:$0xf]
    %v2161 = vld [vmem:[%s2146 + $0x38] sm:$0xf]
    %v2162 = vld [vmem:[%s2146 + $0x3c] sm:$0xf]
    %v2179 = vunpack.c.l.b16 %v2147
    %v2180 = vunpack.c.l.b16 %v2148
    %v2181 = vunpack.c.l.b16 %v2149
    %v2182 = vunpack.c.l.b16 %v2150
    %v2183 = vunpack.c.l.b16 %v2151
    %v2184 = vunpack.c.l.b16 %v2152
    %v2185 = vunpack.c.l.b16 %v2153
    %v2186 = vunpack.c.l.b16 %v2154
    %v2187 = vunpack.c.l.b16 %v2155
    %v2188 = vunpack.c.l.b16 %v2156
    %v2189 = vunpack.c.l.b16 %v2157
    %v2190 = vunpack.c.l.b16 %v2158
    %v2191 = vunpack.c.l.b16 %v2159
    %v2192 = vunpack.c.l.b16 %v2160
    %v2193 = vunpack.c.l.b16 %v2161
    %v2194 = vunpack.c.l.b16 %v2162
    %v2195 = vpack.c.b16 %v2180, %v2179
    %v2196 = vpack.c.b16 %v2182, %v2181
    %v2197 = vpack.c.b16 %v2184, %v2183
    %v2198 = vpack.c.b16 %v2186, %v2185
    %v2199 = vpack.c.b16 %v2188, %v2187
    %v2200 = vpack.c.b16 %v2190, %v2189
    %v2201 = vpack.c.b16 %v2192, %v2191
    %v2202 = vpack.c.b16 %v2194, %v2193
    %2211 = vmatprep.subr.bf16.mxu0 0
    %2212 = vmatpush1.bf16.msra.mxu0 %v2195
    %2213 = vmatprep.subr.bf16.mxu0 0
    %2214 = vmatpush1.bf16.msra.mxu0 %v2196
    %2215 = vmatprep.subr.bf16.mxu0 0
    %2216 = vmatpush1.bf16.msra.mxu0 %v2197
    %2217 = vmatprep.subr.bf16.mxu0 0
    %2218 = vmatpush1.bf16.msra.mxu0 %v2198
    %2219 = vmatprep.subr.bf16.mxu0 0
    %2220 = vmatpush1.bf16.msra.mxu0 %v2199
    %2221 = vmatprep.subr.bf16.mxu0 0
    %2222 = vmatpush1.bf16.msra.mxu0 %v2200
    %2223 = vmatprep.subr.bf16.mxu0 0
    %2224 = vmatpush1.bf16.msra.mxu0 %v2201
    %2225 = vmatprep.subr.bf16.mxu0 0
    %2226 = vmatpush1.bf16.msra.mxu0 %v2202
    %2227 = vmatprep.subr.bf16.mxu0 0
    %2228 = vmatpush1.bf16.msra.mxu0 0
    %2229 = vmatprep.subr.bf16.mxu0 0
    %2230 = vmatpush1.bf16.msra.mxu0 0
    %2231 = vmatprep.subr.bf16.mxu0 0
    %2232 = vmatpush1.bf16.msra.mxu0 0
    %2233 = vmatprep.subr.bf16.mxu0 0
    %2234 = vmatpush1.bf16.msra.mxu0 0
    %2235 = vmatprep.subr.bf16.mxu0 0
    %2236 = vmatpush1.bf16.msra.mxu0 0
    %2237 = vmatprep.subr.bf16.mxu0 0
    %2238 = vmatpush1.bf16.msra.mxu0 0
    %2239 = vmatprep.subr.bf16.mxu0 0
    %2240 = vmatpush1.bf16.msra.mxu0 0
    %2241 = vmatprep.subr.bf16.mxu0 0
    %2242 = vmatpush1.bf16.msra.mxu0 0
    %2243 = vmatprep.mubr.bf16.mxu0 0
    %2244 = vmatmul.mubr.bf16.gmra.mrb[0].mxu0 %v2145
    %v2245 = vpop.f32.mrb[0].mxu0
    %v2246 = vadd.f32 0.0, %v2245
    %v2247 = vpop.f32.mrb[0].mxu0
    %v2248 = vpop.f32.mrb[0].mxu0
    %v2249 = vpop.f32.mrb[0].mxu0
    %2250 = vdwg.mxu0
    %v2251 = vpack.c.bf16 %v2246, %v2246
    %s2252 = scalar_lea.vmem %s2, 18
    %v2253 = vld [vmem:[%s2252] sm:$0x1]
    %v2255 = vpack.i.b16 %v2253, %v2253
    %v2257 = vlaneseq
    %v2258 = vshrl.u32 %v2257, 7
    %v2259 = vsub.s32 0, %v2258
    %v2260 = vrot.slane %v2255, %v2259
    %v2261 = vadd.bf16 %v2251, %v2260
    %v2262 = vmax.bf16 %v2261, 0
    %s2263 = scalar_lea.vmem [#allocation3], 1216
    %v2264 = vld [vmem:[%s2263] sm:$0xf]
    %v2265 = vld [vmem:[%s2263 + $0x4] sm:$0xf]
    %v2266 = vld [vmem:[%s2263 + $0x8] sm:$0xf]
    %v2267 = vld [vmem:[%s2263 + $0xc] sm:$0xf]
    %v2268 = vld [vmem:[%s2263 + $0x10] sm:$0xf]
    %v2269 = vld [vmem:[%s2263 + $0x14] sm:$0xf]
    %v2270 = vld [vmem:[%s2263 + $0x18] sm:$0xf]
    %v2271 = vld [vmem:[%s2263 + $0x1c] sm:$0xf]
    %v2272 = vld [vmem:[%s2263 + $0x20] sm:$0xf]
    %v2273 = vld [vmem:[%s2263 + $0x24] sm:$0xf]
    %v2274 = vld [vmem:[%s2263 + $0x28] sm:$0xf]
    %v2275 = vld [vmem:[%s2263 + $0x2c] sm:$0xf]
    %v2276 = vld [vmem:[%s2263 + $0x30] sm:$0xf]
    %v2277 = vld [vmem:[%s2263 + $0x34] sm:$0xf]
    %v2278 = vld [vmem:[%s2263 + $0x38] sm:$0xf]
    %v2279 = vld [vmem:[%s2263 + $0x3c] sm:$0xf]
    %v2296 = vunpack.c.l.b16 %v2264
    %v2297 = vunpack.c.l.b16 %v2265
    %v2298 = vunpack.c.l.b16 %v2266
    %v2299 = vunpack.c.l.b16 %v2267
    %v2300 = vunpack.c.l.b16 %v2268
    %v2301 = vunpack.c.l.b16 %v2269
    %v2302 = vunpack.c.l.b16 %v2270
    %v2303 = vunpack.c.l.b16 %v2271
    %v2304 = vunpack.c.l.b16 %v2272
    %v2305 = vunpack.c.l.b16 %v2273
    %v2306 = vunpack.c.l.b16 %v2274
    %v2307 = vunpack.c.l.b16 %v2275
    %v2308 = vunpack.c.l.b16 %v2276
    %v2309 = vunpack.c.l.b16 %v2277
    %v2310 = vunpack.c.l.b16 %v2278
    %v2311 = vunpack.c.l.b16 %v2279
    %v2312 = vpack.c.b16 %v2297, %v2296
    %v2313 = vpack.c.b16 %v2299, %v2298
    %v2314 = vpack.c.b16 %v2301, %v2300
    %v2315 = vpack.c.b16 %v2303, %v2302
    %v2316 = vpack.c.b16 %v2305, %v2304
    %v2317 = vpack.c.b16 %v2307, %v2306
    %v2318 = vpack.c.b16 %v2309, %v2308
    %v2319 = vpack.c.b16 %v2311, %v2310
    %2328 = vmatprep.subr.bf16.mxu0 0
    %2329 = vmatpush1.bf16.msra.mxu0 %v2312
    %2330 = vmatprep.subr.bf16.mxu0 0
    %2331 = vmatpush1.bf16.msra.mxu0 %v2313
    %2332 = vmatprep.subr.bf16.mxu0 0
    %2333 = vmatpush1.bf16.msra.mxu0 %v2314
    %2334 = vmatprep.subr.bf16.mxu0 0
    %2335 = vmatpush1.bf16.msra.mxu0 %v2315
    %2336 = vmatprep.subr.bf16.mxu0 0
    %2337 = vmatpush1.bf16.msra.mxu0 %v2316
    %2338 = vmatprep.subr.bf16.mxu0 0
    %2339 = vmatpush1.bf16.msra.mxu0 %v2317
    %2340 = vmatprep.subr.bf16.mxu0 0
    %2341 = vmatpush1.bf16.msra.mxu0 %v2318
    %2342 = vmatprep.subr.bf16.mxu0 0
    %2343 = vmatpush1.bf16.msra.mxu0 %v2319
    %2344 = vmatprep.subr.bf16.mxu0 0
    %2345 = vmatpush1.bf16.msra.mxu0 0
    %2346 = vmatprep.subr.bf16.mxu0 0
    %2347 = vmatpush1.bf16.msra.mxu0 0
    %2348 = vmatprep.subr.bf16.mxu0 0
    %2349 = vmatpush1.bf16.msra.mxu0 0
    %2350 = vmatprep.subr.bf16.mxu0 0
    %2351 = vmatpush1.bf16.msra.mxu0 0
    %2352 = vmatprep.subr.bf16.mxu0 0
    %2353 = vmatpush1.bf16.msra.mxu0 0
    %2354 = vmatprep.subr.bf16.mxu0 0
    %2355 = vmatpush1.bf16.msra.mxu0 0
    %2356 = vmatprep.subr.bf16.mxu0 0
    %2357 = vmatpush1.bf16.msra.mxu0 0
    %2358 = vmatprep.subr.bf16.mxu0 0
    %2359 = vmatpush1.bf16.msra.mxu0 0
    %2360 = vmatprep.mubr.bf16.mxu0 0
    %2361 = vmatmul.mubr.bf16.gmra.mrb[0].mxu0 %v2262
    %v2362 = vpop.f32.mrb[0].mxu0
    %v2363 = vadd.f32 0.0, %v2362
    %v2364 = vpop.f32.mrb[0].mxu0
    %v2365 = vpop.f32.mrb[0].mxu0
    %v2366 = vpop.f32.mrb[0].mxu0
    %2367 = vdwg.mxu0
    %v2368 = vpack.c.bf16 %v2363, %v2363
    %s2369 = scalar_lea.vmem %s2, 19
    %v2370 = vld [vmem:[%s2369] sm:$0x1]
    %v2372 = vpack.i.b16 %v2370, %v2370
    %v2374 = vlaneseq
    %v2375 = vshrl.u32 %v2374, 7
    %v2376 = vsub.s32 0, %v2375
    %v2377 = vrot.slane %v2372, %v2376
    %v2378 = vadd.bf16 %v2368, %v2377
    %v2379 = vmax.bf16 %v2378, 0
    %s2380 = scalar_lea.vmem [#allocation3], 1280
    %v2381 = vld [vmem:[%s2380] sm:$0xf]
    %v2382 = vld [vmem:[%s2380 + $0x4] sm:$0xf]
    %v2383 = vld [vmem:[%s2380 + $0x8] sm:$0xf]
    %v2384 = vld [vmem:[%s2380 + $0xc] sm:$0xf]
    %v2385 = vld [vmem:[%s2380 + $0x10] sm:$0xf]
    %v2386 = vld [vmem:[%s2380 + $0x14] sm:$0xf]
    %v2387 = vld [vmem:[%s2380 + $0x18] sm:$0xf]
    %v2388 = vld [vmem:[%s2380 + $0x1c] sm:$0xf]
    %v2389 = vld [vmem:[%s2380 + $0x20] sm:$0xf]
    %v2390 = vld [vmem:[%s2380 + $0x24] sm:$0xf]
    %v2391 = vld [vmem:[%s2380 + $0x28] sm:$0xf]
    %v2392 = vld [vmem:[%s2380 + $0x2c] sm:$0xf]
    %v2393 = vld [vmem:[%s2380 + $0x30] sm:$0xf]
    %v2394 = vld [vmem:[%s2380 + $0x34] sm:$0xf]
    %v2395 = vld [vmem:[%s2380 + $0x38] sm:$0xf]
    %v2396 = vld [vmem:[%s2380 + $0x3c] sm:$0xf]
    %s2397 = scalar_lea.vmem %s2, 20
    %v2398 = vld [vmem:[%s2397] sm:$0x1]
    %v2399 = vunpack.c.l.bf16 %v2398
    %v2400 = vlaneseq
    %v2401 = vshrl.u32 %v2400, 7
    %v2402 = vsub.s32 0, %v2401
    %v2403 = vrot.slane %v2399, %v2402
    %v2420 = vunpack.c.l.b16 %v2381
    %v2421 = vunpack.c.l.b16 %v2382
    %v2422 = vunpack.c.l.b16 %v2383
    %v2423 = vunpack.c.l.b16 %v2384
    %v2424 = vunpack.c.l.b16 %v2385
    %v2425 = vunpack.c.l.b16 %v2386
    %v2426 = vunpack.c.l.b16 %v2387
    %v2427 = vunpack.c.l.b16 %v2388
    %v2428 = vunpack.c.l.b16 %v2389
    %v2429 = vunpack.c.l.b16 %v2390
    %v2430 = vunpack.c.l.b16 %v2391
    %v2431 = vunpack.c.l.b16 %v2392
    %v2432 = vunpack.c.l.b16 %v2393
    %v2433 = vunpack.c.l.b16 %v2394
    %v2434 = vunpack.c.l.b16 %v2395
    %v2435 = vunpack.c.l.b16 %v2396
    %v2436 = vpack.c.b16 %v2421, %v2420
    %v2437 = vpack.c.b16 %v2423, %v2422
    %v2438 = vpack.c.b16 %v2425, %v2424
    %v2439 = vpack.c.b16 %v2427, %v2426
    %v2440 = vpack.c.b16 %v2429, %v2428
    %v2441 = vpack.c.b16 %v2431, %v2430
    %v2442 = vpack.c.b16 %v2433, %v2432
    %v2443 = vpack.c.b16 %v2435, %v2434
    %2452 = vmatprep.subr.bf16.mxu0 0
    %2453 = vmatpush1.bf16.msra.mxu0 %v2436
    %2454 = vmatprep.subr.bf16.mxu0 0
    %2455 = vmatpush1.bf16.msra.mxu0 %v2437
    %2456 = vmatprep.subr.bf16.mxu0 0
    %2457 = vmatpush1.bf16.msra.mxu0 %v2438
    %2458 = vmatprep.subr.bf16.mxu0 0
    %2459 = vmatpush1.bf16.msra.mxu0 %v2439
    %2460 = vmatprep.subr.bf16.mxu0 0
    %2461 = vmatpush1.bf16.msra.mxu0 %v2440
    %2462 = vmatprep.subr.bf16.mxu0 0
    %2463 = vmatpush1.bf16.msra.mxu0 %v2441
    %2464 = vmatprep.subr.bf16.mxu0 0
    %2465 = vmatpush1.bf16.msra.mxu0 %v2442
    %2466 = vmatprep.subr.bf16.mxu0 0
    %2467 = vmatpush1.bf16.msra.mxu0 %v2443
    %2468 = vmatprep.subr.bf16.mxu0 0
    %2469 = vmatpush1.bf16.msra.mxu0 0
    %2470 = vmatprep.subr.bf16.mxu0 0
    %2471 = vmatpush1.bf16.msra.mxu0 0
    %2472 = vmatprep.subr.bf16.mxu0 0
    %2473 = vmatpush1.bf16.msra.mxu0 0
    %2474 = vmatprep.subr.bf16.mxu0 0
    %2475 = vmatpush1.bf16.msra.mxu0 0
    %2476 = vmatprep.subr.bf16.mxu0 0
    %2477 = vmatpush1.bf16.msra.mxu0 0
    %2478 = vmatprep.subr.bf16.mxu0 0
    %2479 = vmatpush1.bf16.msra.mxu0 0
    %2480 = vmatprep.subr.bf16.mxu0 0
    %2481 = vmatpush1.bf16.msra.mxu0 0
    %2482 = vmatprep.subr.bf16.mxu0 0
    %2483 = vmatpush1.bf16.msra.mxu0 0
    %2484 = vmatprep.mubr.bf16.mxu0 0
    %2485 = vmatmul.mubr.bf16.gmra.mrb[0].mxu0 %v2379
    %v2486 = vpop.f32.mrb[0].mxu0
    %v2487 = vadd.f32 %v2403, %v2486
    %v2488 = vpop.f32.mrb[0].mxu0
    %v2489 = vpop.f32.mrb[0].mxu0
    %v2490 = vpop.f32.mrb[0].mxu0
    %2491 = vdwg.mxu0
    %2492 = vst [vmem:[#allocation6] sm:$0xff] %v2487
    // Predicated region
    $region18: #{_lambda_.1} parent=1 // pred_check
      _
    $region19: #{_lambda_.1} parent=1 // pred_check_branch
      %2494 = sbr.rel (0) target = $region21
    $region20: #{_lambda_.1} parent=1 // pred_region
      %s2496 = ssub.s32 128, 128
      %2497 = vsyncadd [#allocation5], %s2496
      %s2499 = sshll.u32 [#allocation6], 4
      %s2500 = int_to_ptr.vmem [resolvable:$true] %s2499
      %2502 = dma.vmem_to_hbm [thread:$0]  %s2500, 128, %s3, [#allocation5]
    $region21: #{_lambda_.1} parent=1 // pred_fallthru
      _
    // Predicated region
    $region22: #{_lambda_.1} parent=1 // pred_check
      _
    $region23: #{_lambda_.1} parent=1 // pred_check_branch
      %2504 = sbr.rel (0) target = $region25
    $region24: #{_lambda_.1} parent=1 // pred_region
      %2505 = dma.done [#allocation5], 128
    $region25: #{_lambda_.1} parent=1 // pred_fallthru
      _
    %2506 = vsyncpa [#allocation4], 1
    %2507 = vsyncpa [#allocation5], 1

</llo_original>
